<compile_context>
chip_gen: v7x
topology: tpu7x:2x2x1
jax: 0.10.0
libtpu: 0.0.40
codegen_flags: <defaults>
</compile_context>

<pallas_src>
import functools
import math

import jax
import jax.numpy as jnp
from jax import lax
from jax.experimental import pallas as pl
from jax.experimental.pallas import tpu as pltpu

# ---------------- config (small synthetic RoBERTa) ----------------
VOCAB = 100          # synthetic vocab
VOCAB_PAD = 128      # vocab table padded to a lane-aligned row count
HIDDEN = 32
NUM_LAYERS = 2
NUM_HEADS = 2
HEAD_DIM = HIDDEN // NUM_HEADS
INTER = 64
MAX_POS = 64
NUM_LABELS = 2
LN_EPS = 1e-5
PAD_IDX = 1          # RoBERTa padding_idx
NEG_INF = -1e9


# ---------------- in-kernel helpers (pure jnp, traced inside the kernel) ----------------
def _layer_norm(x, g, b):
    mu = jnp.mean(x, axis=-1, keepdims=True)
    var = jnp.mean(jnp.square(x - mu), axis=-1, keepdims=True)
    return (x - mu) * lax.rsqrt(var + LN_EPS) * g + b


def _erf(x):
    # Abramowitz & Stegun 7.1.26 polynomial (|err| < 1.5e-7); the divide is an
    # EUP approx reciprocal (free bundle slot) per the perf review.
    p = 0.3275911
    a1, a2, a3, a4, a5 = 0.254829592, -0.284496736, 1.421413741, -1.453152027, 1.061405429
    ax = jnp.abs(x)
    t = pl.reciprocal(1.0 + p * ax, approx=True)
    poly = ((((a5 * t + a4) * t + a3) * t + a2) * t + a1) * t
    y = 1.0 - poly * jnp.exp(-ax * ax)
    return jnp.where(x >= 0, y, -y)


def _gelu_exact(x):
    # erf-form GELU, matching HF RoBERTa's "gelu".
    return 0.5 * x * (1.0 + _erf(x * 0.7071067811865476))


# ---------------- the single fused forward kernel ----------------
def _fused_forward_kernel(
    ids_ref, mask_ref, labels_ref,
    wemb_ref, pemb_ref, temb_ref, emb_g_ref, emb_b_ref,
    wqkv_ref, bqkv_ref, wo_ref, bo_ref, ln1g_ref, ln1b_ref,
    wi_ref, bi_ref, wo2_ref, bo2_ref, ln2g_ref, ln2b_ref,
    clsw_ref, clsb_ref, outw_ref, outb_ref,
    logits_ref, probs_ref, loss_ref,
    *, batch, seq,
):
    bs = batch * seq
    nh, dh = NUM_HEADS, HEAD_DIM
    g = batch * nh * seq                     # flattened (batch, head, seq) attention rows
    scale = 1.0 / math.sqrt(dh)
    nt = (((1,), (1,)), ((), ()))            # contract last dims: q @ k^T
    inv_s = 1.0 / seq
    f32 = jnp.float32
    bf16 = jnp.bfloat16

    ids = ids_ref[...]                                   # (bs, 1) int32
    mask_col = mask_ref[...].astype(f32)                 # (bs, 1) attention mask (1=keep)

    # ---- embeddings: one-hot "gathers" against VMEM-resident tables ----
    w_oh = (lax.broadcasted_iota(jnp.int32, (bs, VOCAB_PAD), 1) == ids).astype(f32)
    x = jnp.dot(w_oh, wemb_ref[...], preferred_element_type=f32)            # (bs, H)

    # RoBERTa position ids: cumsum(input_ids != pad) * (input_ids != pad) + pad_idx,
    # cumsum done per sequence with a block-lower-triangular matmul.
    padm = (ids != PAD_IDX).astype(f32)                                     # (bs, 1)
    ti = lax.broadcasted_iota(jnp.int32, (bs, bs), 0).astype(f32)
    ui = lax.broadcasted_iota(jnp.int32, (bs, bs), 1).astype(f32)
    same_seq = jnp.floor((ti + 0.5) * inv_s) == jnp.floor((ui + 0.5) * inv_s)
    lblk = jnp.where((ui <= ti) & same_seq, 1.0, 0.0)
    csum = jnp.dot(lblk, padm, preferred_element_type=f32)                  # (bs, 1)
    pos_ids = (csum * padm + float(PAD_IDX)).astype(jnp.int32)              # (bs, 1)
    p_oh = (lax.broadcasted_iota(jnp.int32, (bs, MAX_POS), 1) == pos_ids).astype(f32)
    x = x + jnp.dot(p_oh, pemb_ref[...], preferred_element_type=f32)

    # token_type_ids must be 0 for RoBERTa (type_vocab_size == 1): add segment row 0.
    x = x + temb_ref[...]
    x = _layer_norm(x, emb_g_ref[...], emb_b_ref[...])                      # (bs, H)

    # ---- hoisted additive attention mask over the (batch, head, seq) row layout ----
    tg = lax.broadcasted_iota(jnp.int32, (g, g), 0).astype(f32)
    ug = lax.broadcasted_iota(jnp.int32, (g, g), 1).astype(f32)
    blockdiag = jnp.where(
        jnp.floor((tg + 0.5) * inv_s) == jnp.floor((ug + 0.5) * inv_s), 0.0, NEG_INF)
    # key-padding row in (b, h, s) column order, built with a compare/select +
    # sublane reduction (no lane concat / transpose needed).
    addm_col = (1.0 - mask_col) * NEG_INF                                   # (bs, 1)
    jf = lax.broadcasted_iota(jnp.int32, (bs, g), 0).astype(f32)
    uf = lax.broadcasted_iota(jnp.int32, (bs, g), 1).astype(f32)
    b_u = jnp.floor((uf + 0.5) * (1.0 / (nh * seq)))
    s_u = uf - jnp.floor((uf + 0.5) * inv_s) * seq
    keyrow = jnp.sum(jnp.where(jf == b_u * seq + s_u, addm_col, 0.0),
                     axis=0, keepdims=True)                                 # (1, g)
    full_mask = blockdiag + keyrow                                          # (g, g)

    # ---- encoder layers (unrolled; bf16 MXU operands, f32 accumulation) ----
    for l in range(NUM_LAYERS):
        qkv = jnp.dot(x.astype(bf16), wqkv_ref[l],
                      preferred_element_type=f32) + bqkv_ref[l]             # (bs, 3H)

        def head_rows(off):
            # (b, h, s)-ordered row slab: (g, dh); sublane concat of aligned 8-row blocks.
            return jnp.concatenate(
                [qkv[b * seq:(b + 1) * seq, off + h * dh: off + (h + 1) * dh]
                 for b in range(batch) for h in range(nh)], axis=0)

        q_all = head_rows(0).astype(bf16)
        k_all = head_rows(HIDDEN).astype(bf16)
        v_all = head_rows(2 * HIDDEN).astype(bf16)

        # ONE score matmul + ONE context matmul for all (batch, head) pairs;
        # the block-diagonal additive mask keeps the groups independent.
        s = lax.dot_general(q_all, k_all, nt, preferred_element_type=f32)   # (g, g)
        s = s * scale + full_mask
        e = jnp.exp(s - jnp.max(s, axis=-1, keepdims=True))
        p = e * pl.reciprocal(jnp.sum(e, axis=-1, keepdims=True), approx=True)
        ctx_all = jnp.dot(p.astype(bf16), v_all, preferred_element_type=f32)  # (g, dh)

        # output projection as a per-head sum (no lane-axis re-packing of heads)
        wo_l = wo_ref[l]
        attn = bo_ref[l]
        for h in range(nh):
            ctx_h = jnp.concatenate(
                [ctx_all[(b * nh + h) * seq:(b * nh + h + 1) * seq, :]
                 for b in range(batch)], axis=0)                            # (bs, dh)
            attn = attn + jnp.dot(ctx_h.astype(bf16), wo_l[h * dh:(h + 1) * dh, :],
                                  preferred_element_type=f32)
        x = _layer_norm(x + attn, ln1g_ref[l], ln1b_ref[l])

        # FFN (exact erf-GELU) + residual + LayerNorm
        hmid = _gelu_exact(jnp.dot(x.astype(bf16), wi_ref[l],
                                   preferred_element_type=f32) + bi_ref[l])
        ffn = jnp.dot(hmid.astype(bf16), wo2_ref[l],
                      preferred_element_type=f32) + bo2_ref[l]
        x = _layer_norm(x + ffn, ln2g_ref[l], ln2b_ref[l])

    # ---- classification head on the <s> (first) token of each sequence ----
    cls = jnp.concatenate([x[b * seq:b * seq + 1, :] for b in range(batch)], axis=0)
    hcls = jnp.tanh(jnp.dot(cls.astype(bf16), clsw_ref[...],
                            preferred_element_type=f32) + clsb_ref[...])
    logits = jnp.dot(hcls.astype(bf16), outw_ref[...],
                     preferred_element_type=f32) + outb_ref[...]            # (B, L)
    logits_ref[...] = logits

    # softmax probabilities (exact divide for parity) + mean cross-entropy loss
    lmax = jnp.max(logits, axis=-1, keepdims=True)
    el = jnp.exp(logits - lmax)
    denom = jnp.sum(el, axis=-1, keepdims=True)
    probs_ref[...] = el / denom
    logp = logits - lmax - jnp.log(denom)
    onehot = (lax.broadcasted_iota(jnp.int32, (batch, NUM_LABELS), 1)
              == labels_ref[...]).astype(f32)
    nll = -jnp.sum(onehot * logp, axis=-1, keepdims=True)                   # (B, 1)
    loss_ref[...] = jnp.sum(nll, axis=0, keepdims=True) * (1.0 / batch)     # (1, 1)


# ---------------- parameters (deterministic init; per-layer weights stacked) ----------------
def init_params(key):
    keys = iter(jax.random.split(key, 32))

    def norm(shape):
        return jax.random.normal(next(keys), shape, jnp.float32) * 0.02

    # HF zeros the padding_idx embedding rows; padded vocab rows are never selected.
    word_emb = norm((VOCAB_PAD, HIDDEN)).at[PAD_IDX].set(0.0)
    word_emb = word_emb.at[VOCAB:].set(0.0)
    pos_emb = norm((MAX_POS, HIDDEN)).at[PAD_IDX].set(0.0)

    return {
        "word_emb": word_emb,                          # f32: one-hot "gather" stays exact
        "pos_emb": pos_emb,
        "type_emb": norm((1, HIDDEN)),
        "emb_ln_g": jnp.ones((1, HIDDEN), jnp.float32),
        "emb_ln_b": jnp.zeros((1, HIDDEN), jnp.float32),
        # dense weights in bf16 (MXU-native); biases / LayerNorm params stay f32
        "wqkv": norm((NUM_LAYERS, HIDDEN, 3 * HIDDEN)).astype(jnp.bfloat16),
        "bqkv": jnp.zeros((NUM_LAYERS, 1, 3 * HIDDEN), jnp.float32),
        "wo": norm((NUM_LAYERS, HIDDEN, HIDDEN)).astype(jnp.bfloat16),
        "bo": jnp.zeros((NUM_LAYERS, 1, HIDDEN), jnp.float32),
        "ln1_g": jnp.ones((NUM_LAYERS, 1, HIDDEN), jnp.float32),
        "ln1_b": jnp.zeros((NUM_LAYERS, 1, HIDDEN), jnp.float32),
        "wi": norm((NUM_LAYERS, HIDDEN, INTER)).astype(jnp.bfloat16),
        "bi": jnp.zeros((NUM_LAYERS, 1, INTER), jnp.float32),
        "wo2": norm((NUM_LAYERS, INTER, HIDDEN)).astype(jnp.bfloat16),
        "bo2": jnp.zeros((NUM_LAYERS, 1, HIDDEN), jnp.float32),
        "ln2_g": jnp.ones((NUM_LAYERS, 1, HIDDEN), jnp.float32),
        "ln2_b": jnp.zeros((NUM_LAYERS, 1, HIDDEN), jnp.float32),
        "cls_w": norm((HIDDEN, HIDDEN)).astype(jnp.bfloat16),
        "cls_b": jnp.zeros((1, HIDDEN), jnp.float32),
        "out_w": norm((HIDDEN, NUM_LABELS)).astype(jnp.bfloat16),
        "out_b": jnp.zeros((1, NUM_LABELS), jnp.float32),
    }


# ---------------- forward (mirrors RobertModel.forward) ----------------
def roberta_forward(params, input_ids, attn_mask, token_type_ids, labels):
    """Returns (loss, logits, probabilities) like RobertModel.forward."""
    B, S = input_ids.shape
    del token_type_ids  # roberta-base: type_vocab_size == 1 -> segment row 0 added in-kernel

    # Only bitcast-level reshapes happen outside the kernel; embedding gathers,
    # position-id cumsum, masks, encoder, head, softmax and loss are all fused
    # into ONE pallas_call.
    ids_col = input_ids.astype(jnp.int32).reshape(B * S, 1)
    mask_col = attn_mask.astype(jnp.int32).reshape(B * S, 1)
    labels_col = labels.astype(jnp.int32).reshape(B, 1)

    kern = functools.partial(_fused_forward_kernel, batch=B, seq=S)
    logits, probs, loss = pl.pallas_call(
        kern,
        out_shape=(
            jax.ShapeDtypeStruct((B, NUM_LABELS), jnp.float32),
            jax.ShapeDtypeStruct((B, NUM_LABELS), jnp.float32),
            jax.ShapeDtypeStruct((1, 1), jnp.float32),
        ),
        compiler_params=pltpu.CompilerParams(vmem_limit_bytes=32 * 1024 * 1024),
    )(
        ids_col, mask_col, labels_col,
        params["word_emb"], params["pos_emb"], params["type_emb"],
        params["emb_ln_g"], params["emb_ln_b"],
        params["wqkv"], params["bqkv"], params["wo"], params["bo"],
        params["ln1_g"], params["ln1_b"],
        params["wi"], params["bi"], params["wo2"], params["bo2"],
        params["ln2_g"], params["ln2_b"],
        params["cls_w"], params["cls_b"], params["out_w"], params["out_b"],
    )
    return loss[0, 0], logits, probs


if __name__ == "__main__":
    key = jax.random.PRNGKey(0)
    pkey, ikey, lkey = jax.random.split(key, 3)
    params = init_params(pkey)

    B, S = 2, 8
    batch_seqs = jax.random.randint(ikey, (B, S), 0, VOCAB, dtype=jnp.int32)
    batch_seq_masks = jnp.array(
        [[1, 1, 1, 1, 1, 1, 1, 1], [1, 1, 1, 1, 1, 1, 0, 0]], jnp.int32)
    batch_seq_segments = jnp.zeros((B, S), jnp.int32)
    labels = jax.random.randint(lkey, (B,), 0, NUM_LABELS, dtype=jnp.int32)

    fwd = jax.jit(roberta_forward)
    loss, logits, probs = fwd(params, batch_seqs, batch_seq_masks,
                              batch_seq_segments, labels)
    jax.block_until_ready((loss, logits, probs))

    assert logits.shape == (B, NUM_LABELS)
    assert probs.shape == (B, NUM_LABELS)
    assert loss.shape == ()
    assert bool(jnp.all(jnp.isfinite(logits)))
    assert abs(float(jnp.sum(probs)) - B) < 1e-3   # softmax rows normalize
    print("KERNEL_OK")
</pallas_src>

<mosaic_0001>
module attributes {stable_mosaic.version = 11 : i64} {
  func.func @_fused_forward_kernel(%arg0: memref<16x1xi32, #tpu.memory_space<vmem>>, %arg1: memref<16x1xi32, #tpu.memory_space<vmem>>, %arg2: memref<2x1xi32, #tpu.memory_space<vmem>>, %arg3: memref<128x32xf32, #tpu.memory_space<vmem>>, %arg4: memref<64x32xf32, #tpu.memory_space<vmem>>, %arg5: memref<1x32xf32, #tpu.memory_space<vmem>>, %arg6: memref<1x32xf32, #tpu.memory_space<vmem>>, %arg7: memref<1x32xf32, #tpu.memory_space<vmem>>, %arg8: memref<2x32x96xbf16, #tpu.memory_space<vmem>>, %arg9: memref<2x1x96xf32, #tpu.memory_space<vmem>>, %arg10: memref<2x32x32xbf16, #tpu.memory_space<vmem>>, %arg11: memref<2x1x32xf32, #tpu.memory_space<vmem>>, %arg12: memref<2x1x32xf32, #tpu.memory_space<vmem>>, %arg13: memref<2x1x32xf32, #tpu.memory_space<vmem>>, %arg14: memref<2x32x64xbf16, #tpu.memory_space<vmem>>, %arg15: memref<2x1x64xf32, #tpu.memory_space<vmem>>, %arg16: memref<2x64x32xbf16, #tpu.memory_space<vmem>>, %arg17: memref<2x1x32xf32, #tpu.memory_space<vmem>>, %arg18: memref<2x1x32xf32, #tpu.memory_space<vmem>>, %arg19: memref<2x1x32xf32, #tpu.memory_space<vmem>>, %arg20: memref<32x32xbf16, #tpu.memory_space<vmem>>, %arg21: memref<1x32xf32, #tpu.memory_space<vmem>>, %arg22: memref<32x2xbf16, #tpu.memory_space<vmem>>, %arg23: memref<1x2xf32, #tpu.memory_space<vmem>>, %arg24: memref<2x2xf32, #tpu.memory_space<vmem>>, %arg25: memref<2x2xf32, #tpu.memory_space<vmem>>, %arg26: memref<1x1xf32, #tpu.memory_space<vmem>>) attributes {dimension_semantics = [], scalar_prefetch = 0 : i64, scratch_operands = 0 : i64, tpu.core_type = #tpu.core_type<tc>} {
    %c0 = arith.constant 0 : index
    %c0_0 = arith.constant 0 : index
    %0 = vector.load %arg0[%c0, %c0_0] : memref<16x1xi32, #tpu.memory_space<vmem>>, vector<16x1xi32>
    %c0_1 = arith.constant 0 : index
    %c0_2 = arith.constant 0 : index
    %1 = vector.load %arg1[%c0_1, %c0_2] : memref<16x1xi32, #tpu.memory_space<vmem>>, vector<16x1xi32>
    %2 = arith.sitofp %1 : vector<16x1xi32> to vector<16x1xf32>
    %3 = tpu.iota {dimensions = array<i32: 1>} : vector<16x128xi32>
    %4 = vector.broadcast %0 : vector<16x1xi32> to vector<16x128xi32>
    %5 = arith.cmpi eq, %3, %4 : vector<16x128xi32>
    %6 = arith.extui %5 : vector<16x128xi1> to vector<16x128xi32>
    %7 = arith.sitofp %6 : vector<16x128xi32> to vector<16x128xf32>
    %c0_3 = arith.constant 0 : index
    %c0_4 = arith.constant 0 : index
    %8 = vector.load %arg3[%c0_3, %c0_4] : memref<128x32xf32, #tpu.memory_space<vmem>>, vector<128x32xf32>
    %cst = arith.constant dense<0.000000e+00> : vector<16x32xf32>
    %9 = tpu.matmul %7, %8, %cst {dimension_numbers = #tpu.dot_dimension_numbers<[1], [0], [0], [1], [0, 0, 1, 1], [], []>} : vector<16x128xf32>, vector<128x32xf32>, vector<16x32xf32> -> vector<16x32xf32>
    %c1_i32 = arith.constant 1 : i32
    %10 = vector.broadcast %c1_i32 : i32 to vector<16x1xi32>
    %11 = arith.cmpi ne, %0, %10 : vector<16x1xi32>
    %12 = arith.extui %11 : vector<16x1xi1> to vector<16x1xi32>
    %13 = arith.sitofp %12 : vector<16x1xi32> to vector<16x1xf32>
    %14 = tpu.iota {dimensions = array<i32: 0>} : vector<16x16xi32>
    %15 = arith.sitofp %14 : vector<16x16xi32> to vector<16x16xf32>
    %16 = tpu.iota {dimensions = array<i32: 1>} : vector<16x16xi32>
    %17 = arith.sitofp %16 : vector<16x16xi32> to vector<16x16xf32>
    %cst_5 = arith.constant 5.000000e-01 : f32
    %18 = vector.broadcast %cst_5 : f32 to vector<16x16xf32>
    %19 = arith.addf %15, %18 : vector<16x16xf32>
    %cst_6 = arith.constant 1.250000e-01 : f32
    %20 = vector.broadcast %cst_6 : f32 to vector<16x16xf32>
    %21 = arith.mulf %19, %20 : vector<16x16xf32>
    %22 = math.floor %21 : vector<16x16xf32>
    %cst_7 = arith.constant 5.000000e-01 : f32
    %23 = vector.broadcast %cst_7 : f32 to vector<16x16xf32>
    %24 = arith.addf %17, %23 : vector<16x16xf32>
    %cst_8 = arith.constant 1.250000e-01 : f32
    %25 = vector.broadcast %cst_8 : f32 to vector<16x16xf32>
    %26 = arith.mulf %24, %25 : vector<16x16xf32>
    %27 = math.floor %26 : vector<16x16xf32>
    %28 = arith.cmpf oeq, %22, %27 : vector<16x16xf32>
    %29 = arith.cmpf ole, %17, %15 : vector<16x16xf32>
    %30 = arith.andi %29, %28 : vector<16x16xi1>
    %cst_9 = arith.constant 1.000000e+00 : f32
    %cst_10 = arith.constant 0.000000e+00 : f32
    %31 = vector.broadcast %cst_9 : f32 to vector<16x16xf32>
    %32 = vector.broadcast %cst_10 : f32 to vector<16x16xf32>
    %33 = arith.select %30, %31, %32 : vector<16x16xi1>, vector<16x16xf32>
    %cst_11 = arith.constant dense<0.000000e+00> : vector<16x1xf32>
    %34 = tpu.matmul %33, %13, %cst_11 {dimension_numbers = #tpu.dot_dimension_numbers<[1], [0], [0], [1], [0, 0, 1, 1], [], []>} : vector<16x16xf32>, vector<16x1xf32>, vector<16x1xf32> -> vector<16x1xf32>
    %35 = arith.mulf %34, %13 : vector<16x1xf32>
    %cst_12 = arith.constant 1.000000e+00 : f32
    %36 = vector.broadcast %cst_12 : f32 to vector<16x1xf32>
    %37 = arith.addf %35, %36 : vector<16x1xf32>
    %38 = arith.fptosi %37 : vector<16x1xf32> to vector<16x1xi32>
    %39 = tpu.iota {dimensions = array<i32: 1>} : vector<16x64xi32>
    %40 = vector.broadcast %38 : vector<16x1xi32> to vector<16x64xi32>
    %41 = arith.cmpi eq, %39, %40 : vector<16x64xi32>
    %42 = arith.extui %41 : vector<16x64xi1> to vector<16x64xi32>
    %43 = arith.sitofp %42 : vector<16x64xi32> to vector<16x64xf32>
    %c0_13 = arith.constant 0 : index
    %c0_14 = arith.constant 0 : index
    %44 = vector.load %arg4[%c0_13, %c0_14] : memref<64x32xf32, #tpu.memory_space<vmem>>, vector<64x32xf32>
    %cst_15 = arith.constant dense<0.000000e+00> : vector<16x32xf32>
    %45 = tpu.matmul %43, %44, %cst_15 {dimension_numbers = #tpu.dot_dimension_numbers<[1], [0], [0], [1], [0, 0, 1, 1], [], []>} : vector<16x64xf32>, vector<64x32xf32>, vector<16x32xf32> -> vector<16x32xf32>
    %46 = arith.addf %9, %45 : vector<16x32xf32>
    %c0_16 = arith.constant 0 : index
    %c0_17 = arith.constant 0 : index
    %47 = vector.load %arg5[%c0_16, %c0_17] : memref<1x32xf32, #tpu.memory_space<vmem>>, vector<1x32xf32>
    %48 = vector.broadcast %47 : vector<1x32xf32> to vector<16x32xf32>
    %49 = arith.addf %46, %48 : vector<16x32xf32>
    %c0_18 = arith.constant 0 : index
    %c0_19 = arith.constant 0 : index
    %50 = vector.load %arg6[%c0_18, %c0_19] : memref<1x32xf32, #tpu.memory_space<vmem>>, vector<1x32xf32>
    %c0_20 = arith.constant 0 : index
    %c0_21 = arith.constant 0 : index
    %51 = vector.load %arg7[%c0_20, %c0_21] : memref<1x32xf32, #tpu.memory_space<vmem>>, vector<1x32xf32>
    %cst_22 = arith.constant dense<0.000000e+00> : vector<16xf32>
    %52 = vector.multi_reduction <add>, %49, %cst_22 [1] : vector<16x32xf32> to vector<16xf32>
    %53 = vector.shape_cast %52 : vector<16xf32> to vector<16x1xf32>
    %cst_23 = arith.constant 3.200000e+01 : f32
    %54 = vector.broadcast %cst_23 : f32 to vector<16x1xf32>
    %55 = arith.divf %53, %54 : vector<16x1xf32>
    %56 = vector.broadcast %55 : vector<16x1xf32> to vector<16x32xf32>
    %57 = arith.subf %49, %56 : vector<16x32xf32>
    %58 = arith.mulf %57, %57 : vector<16x32xf32>
    %cst_24 = arith.constant dense<0.000000e+00> : vector<16xf32>
    %59 = vector.multi_reduction <add>, %58, %cst_24 [1] : vector<16x32xf32> to vector<16xf32>
    %60 = vector.shape_cast %59 : vector<16xf32> to vector<16x1xf32>
    %cst_25 = arith.constant 3.200000e+01 : f32
    %61 = vector.broadcast %cst_25 : f32 to vector<16x1xf32>
    %62 = arith.divf %60, %61 : vector<16x1xf32>
    %63 = vector.broadcast %55 : vector<16x1xf32> to vector<16x32xf32>
    %64 = arith.subf %49, %63 : vector<16x32xf32>
    %cst_26 = arith.constant 9.99999974E-6 : f32
    %65 = vector.broadcast %cst_26 : f32 to vector<16x1xf32>
    %66 = arith.addf %62, %65 : vector<16x1xf32>
    %67 = math.rsqrt %66 : vector<16x1xf32>
    %68 = vector.broadcast %67 : vector<16x1xf32> to vector<16x32xf32>
    %69 = arith.mulf %64, %68 : vector<16x32xf32>
    %70 = vector.broadcast %50 : vector<1x32xf32> to vector<16x32xf32>
    %71 = arith.mulf %69, %70 : vector<16x32xf32>
    %72 = vector.broadcast %51 : vector<1x32xf32> to vector<16x32xf32>
    %73 = arith.addf %71, %72 : vector<16x32xf32>
    %74 = tpu.iota {dimensions = array<i32: 0>} : vector<32x32xi32>
    %75 = arith.sitofp %74 : vector<32x32xi32> to vector<32x32xf32>
    %76 = tpu.iota {dimensions = array<i32: 1>} : vector<32x32xi32>
    %77 = arith.sitofp %76 : vector<32x32xi32> to vector<32x32xf32>
    %cst_27 = arith.constant 5.000000e-01 : f32
    %78 = vector.broadcast %cst_27 : f32 to vector<32x32xf32>
    %79 = arith.addf %75, %78 : vector<32x32xf32>
    %cst_28 = arith.constant 1.250000e-01 : f32
    %80 = vector.broadcast %cst_28 : f32 to vector<32x32xf32>
    %81 = arith.mulf %79, %80 : vector<32x32xf32>
    %82 = math.floor %81 : vector<32x32xf32>
    %cst_29 = arith.constant 5.000000e-01 : f32
    %83 = vector.broadcast %cst_29 : f32 to vector<32x32xf32>
    %84 = arith.addf %77, %83 : vector<32x32xf32>
    %cst_30 = arith.constant 1.250000e-01 : f32
    %85 = vector.broadcast %cst_30 : f32 to vector<32x32xf32>
    %86 = arith.mulf %84, %85 : vector<32x32xf32>
    %87 = math.floor %86 : vector<32x32xf32>
    %88 = arith.cmpf oeq, %82, %87 : vector<32x32xf32>
    %cst_31 = arith.constant 0.000000e+00 : f32
    %cst_32 = arith.constant -1.000000e+09 : f32
    %89 = vector.broadcast %cst_31 : f32 to vector<32x32xf32>
    %90 = vector.broadcast %cst_32 : f32 to vector<32x32xf32>
    %91 = arith.select %88, %89, %90 : vector<32x32xi1>, vector<32x32xf32>
    %cst_33 = arith.constant 1.000000e+00 : f32
    %92 = vector.broadcast %cst_33 : f32 to vector<16x1xf32>
    %93 = arith.subf %92, %2 : vector<16x1xf32>
    %cst_34 = arith.constant -1.000000e+09 : f32
    %94 = vector.broadcast %cst_34 : f32 to vector<16x1xf32>
    %95 = arith.mulf %93, %94 : vector<16x1xf32>
    %96 = tpu.iota {dimensions = array<i32: 0>} : vector<16x32xi32>
    %97 = arith.sitofp %96 : vector<16x32xi32> to vector<16x32xf32>
    %98 = tpu.iota {dimensions = array<i32: 1>} : vector<16x32xi32>
    %99 = arith.sitofp %98 : vector<16x32xi32> to vector<16x32xf32>
    %cst_35 = arith.constant 5.000000e-01 : f32
    %100 = vector.broadcast %cst_35 : f32 to vector<16x32xf32>
    %101 = arith.addf %99, %100 : vector<16x32xf32>
    %cst_36 = arith.constant 6.250000e-02 : f32
    %102 = vector.broadcast %cst_36 : f32 to vector<16x32xf32>
    %103 = arith.mulf %101, %102 : vector<16x32xf32>
    %104 = math.floor %103 : vector<16x32xf32>
    %cst_37 = arith.constant 5.000000e-01 : f32
    %105 = vector.broadcast %cst_37 : f32 to vector<16x32xf32>
    %106 = arith.addf %99, %105 : vector<16x32xf32>
    %cst_38 = arith.constant 1.250000e-01 : f32
    %107 = vector.broadcast %cst_38 : f32 to vector<16x32xf32>
    %108 = arith.mulf %106, %107 : vector<16x32xf32>
    %109 = math.floor %108 : vector<16x32xf32>
    %cst_39 = arith.constant 8.000000e+00 : f32
    %110 = vector.broadcast %cst_39 : f32 to vector<16x32xf32>
    %111 = arith.mulf %109, %110 : vector<16x32xf32>
    %112 = arith.subf %99, %111 : vector<16x32xf32>
    %cst_40 = arith.constant 8.000000e+00 : f32
    %113 = vector.broadcast %cst_40 : f32 to vector<16x32xf32>
    %114 = arith.mulf %104, %113 : vector<16x32xf32>
    %115 = arith.addf %114, %112 : vector<16x32xf32>
    %116 = arith.cmpf oeq, %97, %115 : vector<16x32xf32>
    %cst_41 = arith.constant 0.000000e+00 : f32
    %117 = vector.shape_cast %95 : vector<16x1xf32> to vector<16x1xf32>
    %118 = vector.broadcast %117 : vector<16x1xf32> to vector<16x32xf32>
    %119 = vector.broadcast %cst_41 : f32 to vector<16x32xf32>
    %120 = arith.select %116, %118, %119 : vector<16x32xi1>, vector<16x32xf32>
    %cst_42 = arith.constant dense<0.000000e+00> : vector<32xf32>
    %121 = vector.multi_reduction <add>, %120, %cst_42 [0] : vector<16x32xf32> to vector<32xf32>
    %122 = vector.shape_cast %121 : vector<32xf32> to vector<1x32xf32>
    %123 = vector.broadcast %122 : vector<1x32xf32> to vector<32x32xf32>
    %124 = arith.addf %91, %123 : vector<32x32xf32>
    %125 = arith.truncf %73 : vector<16x32xf32> to vector<16x32xbf16>
    %c0_43 = arith.constant 0 : index
    %c0_44 = arith.constant 0 : index
    %c0_45 = arith.constant 0 : index
    %126 = vector.load %arg8[%c0_43, %c0_44, %c0_45] : memref<2x32x96xbf16, #tpu.memory_space<vmem>>, vector<1x32x96xbf16>
    %127 = vector.shape_cast %126 : vector<1x32x96xbf16> to vector<32x96xbf16>
    %cst_46 = arith.constant dense<0.000000e+00> : vector<16x96xf32>
    %128 = tpu.matmul %125, %127, %cst_46 {dimension_numbers = #tpu.dot_dimension_numbers<[1], [0], [0], [1], [0, 0, 1, 1], [], []>} : vector<16x32xbf16>, vector<32x96xbf16>, vector<16x96xf32> -> vector<16x96xf32>
    %c0_47 = arith.constant 0 : index
    %c0_48 = arith.constant 0 : index
    %c0_49 = arith.constant 0 : index
    %129 = vector.load %arg9[%c0_47, %c0_48, %c0_49] : memref<2x1x96xf32, #tpu.memory_space<vmem>>, vector<1x1x96xf32>
    %130 = vector.shape_cast %129 : vector<1x1x96xf32> to vector<1x96xf32>
    %131 = vector.broadcast %130 : vector<1x96xf32> to vector<16x96xf32>
    %132 = arith.addf %128, %131 : vector<16x96xf32>
    %133 = vector.extract_strided_slice %132 {offsets = [0, 0], sizes = [8, 16], strides = [1, 1]} : vector<16x96xf32> to vector<8x16xf32>
    %134 = vector.extract_strided_slice %132 {offsets = [0, 16], sizes = [8, 16], strides = [1, 1]} : vector<16x96xf32> to vector<8x16xf32>
    %135 = vector.extract_strided_slice %132 {offsets = [8, 0], sizes = [8, 16], strides = [1, 1]} : vector<16x96xf32> to vector<8x16xf32>
    %136 = vector.extract_strided_slice %132 {offsets = [8, 16], sizes = [8, 16], strides = [1, 1]} : vector<16x96xf32> to vector<8x16xf32>
    %137 = tpu.concatenate %133, %134, %135, %136 in 0 : vector<8x16xf32>, vector<8x16xf32>, vector<8x16xf32>, vector<8x16xf32> -> vector<32x16xf32>
    %138 = arith.truncf %137 : vector<32x16xf32> to vector<32x16xbf16>
    %139 = vector.extract_strided_slice %132 {offsets = [0, 32], sizes = [8, 16], strides = [1, 1]} : vector<16x96xf32> to vector<8x16xf32>
    %140 = vector.extract_strided_slice %132 {offsets = [0, 48], sizes = [8, 16], strides = [1, 1]} : vector<16x96xf32> to vector<8x16xf32>
    %141 = vector.extract_strided_slice %132 {offsets = [8, 32], sizes = [8, 16], strides = [1, 1]} : vector<16x96xf32> to vector<8x16xf32>
    %142 = vector.extract_strided_slice %132 {offsets = [8, 48], sizes = [8, 16], strides = [1, 1]} : vector<16x96xf32> to vector<8x16xf32>
    %143 = tpu.concatenate %139, %140, %141, %142 in 0 : vector<8x16xf32>, vector<8x16xf32>, vector<8x16xf32>, vector<8x16xf32> -> vector<32x16xf32>
    %144 = arith.truncf %143 : vector<32x16xf32> to vector<32x16xbf16>
    %145 = vector.extract_strided_slice %132 {offsets = [0, 64], sizes = [8, 16], strides = [1, 1]} : vector<16x96xf32> to vector<8x16xf32>
    %146 = vector.extract_strided_slice %132 {offsets = [0, 80], sizes = [8, 16], strides = [1, 1]} : vector<16x96xf32> to vector<8x16xf32>
    %147 = vector.extract_strided_slice %132 {offsets = [8, 64], sizes = [8, 16], strides = [1, 1]} : vector<16x96xf32> to vector<8x16xf32>
    %148 = vector.extract_strided_slice %132 {offsets = [8, 80], sizes = [8, 16], strides = [1, 1]} : vector<16x96xf32> to vector<8x16xf32>
    %149 = tpu.concatenate %145, %146, %147, %148 in 0 : vector<8x16xf32>, vector<8x16xf32>, vector<8x16xf32>, vector<8x16xf32> -> vector<32x16xf32>
    %150 = arith.truncf %149 : vector<32x16xf32> to vector<32x16xbf16>
    %cst_50 = arith.constant dense<0.000000e+00> : vector<32x32xf32>
    %151 = tpu.matmul %138, %144, %cst_50 {dimension_numbers = #tpu.dot_dimension_numbers<[1], [1], [0], [0], [0, 0, 1, 0], [], []>} : vector<32x16xbf16>, vector<32x16xbf16>, vector<32x32xf32> -> vector<32x32xf32>
    %cst_51 = arith.constant 2.500000e-01 : f32
    %152 = vector.broadcast %cst_51 : f32 to vector<32x32xf32>
    %153 = arith.mulf %151, %152 : vector<32x32xf32>
    %154 = arith.addf %153, %124 : vector<32x32xf32>
    %cst_52 = arith.constant dense<0xFF800000> : vector<32xf32>
    %155 = vector.multi_reduction <maximumf>, %154, %cst_52 [1] : vector<32x32xf32> to vector<32xf32>
    %156 = vector.shape_cast %155 : vector<32xf32> to vector<32x1xf32>
    %157 = vector.broadcast %156 : vector<32x1xf32> to vector<32x32xf32>
    %158 = arith.subf %154, %157 : vector<32x32xf32>
    %159 = math.exp %158 : vector<32x32xf32>
    %cst_53 = arith.constant dense<0.000000e+00> : vector<32xf32>
    %160 = vector.multi_reduction <add>, %159, %cst_53 [1] : vector<32x32xf32> to vector<32xf32>
    %161 = vector.shape_cast %160 : vector<32xf32> to vector<32x1xf32>
    %162 = tpu.reciprocal %161 {approx = true} : vector<32x1xf32> -> vector<32x1xf32>
    %163 = vector.broadcast %162 : vector<32x1xf32> to vector<32x32xf32>
    %164 = arith.mulf %159, %163 : vector<32x32xf32>
    %165 = arith.truncf %164 : vector<32x32xf32> to vector<32x32xbf16>
    %cst_54 = arith.constant dense<0.000000e+00> : vector<32x16xf32>
    %166 = tpu.matmul %165, %150, %cst_54 {dimension_numbers = #tpu.dot_dimension_numbers<[1], [0], [0], [1], [0, 0, 1, 1], [], []>} : vector<32x32xbf16>, vector<32x16xbf16>, vector<32x16xf32> -> vector<32x16xf32>
    %c0_55 = arith.constant 0 : index
    %c0_56 = arith.constant 0 : index
    %c0_57 = arith.constant 0 : index
    %167 = vector.load %arg10[%c0_55, %c0_56, %c0_57] : memref<2x32x32xbf16, #tpu.memory_space<vmem>>, vector<1x32x32xbf16>
    %168 = vector.shape_cast %167 : vector<1x32x32xbf16> to vector<32x32xbf16>
    %c0_58 = arith.constant 0 : index
    %c0_59 = arith.constant 0 : index
    %c0_60 = arith.constant 0 : index
    %169 = vector.load %arg11[%c0_58, %c0_59, %c0_60] : memref<2x1x32xf32, #tpu.memory_space<vmem>>, vector<1x1x32xf32>
    %170 = vector.shape_cast %169 : vector<1x1x32xf32> to vector<1x32xf32>
    %171 = vector.extract_strided_slice %166 {offsets = [0, 0], sizes = [8, 16], strides = [1, 1]} : vector<32x16xf32> to vector<8x16xf32>
    %172 = vector.extract_strided_slice %166 {offsets = [16, 0], sizes = [8, 16], strides = [1, 1]} : vector<32x16xf32> to vector<8x16xf32>
    %173 = tpu.concatenate %171, %172 in 0 : vector<8x16xf32>, vector<8x16xf32> -> vector<16x16xf32>
    %174 = arith.truncf %173 : vector<16x16xf32> to vector<16x16xbf16>
    %175 = vector.extract_strided_slice %168 {offsets = [0, 0], sizes = [16, 32], strides = [1, 1]} : vector<32x32xbf16> to vector<16x32xbf16>
    %cst_61 = arith.constant dense<0.000000e+00> : vector<16x32xf32>
    %176 = tpu.matmul %174, %175, %cst_61 {dimension_numbers = #tpu.dot_dimension_numbers<[1], [0], [0], [1], [0, 0, 1, 1], [], []>} : vector<16x16xbf16>, vector<16x32xbf16>, vector<16x32xf32> -> vector<16x32xf32>
    %177 = vector.broadcast %170 : vector<1x32xf32> to vector<16x32xf32>
    %178 = arith.addf %177, %176 : vector<16x32xf32>
    %179 = vector.extract_strided_slice %166 {offsets = [8, 0], sizes = [8, 16], strides = [1, 1]} : vector<32x16xf32> to vector<8x16xf32>
    %180 = vector.extract_strided_slice %166 {offsets = [24, 0], sizes = [8, 16], strides = [1, 1]} : vector<32x16xf32> to vector<8x16xf32>
    %181 = tpu.concatenate %179, %180 in 0 : vector<8x16xf32>, vector<8x16xf32> -> vector<16x16xf32>
    %182 = arith.truncf %181 : vector<16x16xf32> to vector<16x16xbf16>
    %183 = vector.extract_strided_slice %168 {offsets = [16, 0], sizes = [16, 32], strides = [1, 1]} : vector<32x32xbf16> to vector<16x32xbf16>
    %cst_62 = arith.constant dense<0.000000e+00> : vector<16x32xf32>
    %184 = tpu.matmul %182, %183, %cst_62 {dimension_numbers = #tpu.dot_dimension_numbers<[1], [0], [0], [1], [0, 0, 1, 1], [], []>} : vector<16x16xbf16>, vector<16x32xbf16>, vector<16x32xf32> -> vector<16x32xf32>
    %185 = arith.addf %178, %184 : vector<16x32xf32>
    %186 = arith.addf %73, %185 : vector<16x32xf32>
    %c0_63 = arith.constant 0 : index
    %c0_64 = arith.constant 0 : index
    %c0_65 = arith.constant 0 : index
    %187 = vector.load %arg12[%c0_63, %c0_64, %c0_65] : memref<2x1x32xf32, #tpu.memory_space<vmem>>, vector<1x1x32xf32>
    %188 = vector.shape_cast %187 : vector<1x1x32xf32> to vector<1x32xf32>
    %c0_66 = arith.constant 0 : index
    %c0_67 = arith.constant 0 : index
    %c0_68 = arith.constant 0 : index
    %189 = vector.load %arg13[%c0_66, %c0_67, %c0_68] : memref<2x1x32xf32, #tpu.memory_space<vmem>>, vector<1x1x32xf32>
    %190 = vector.shape_cast %189 : vector<1x1x32xf32> to vector<1x32xf32>
    %cst_69 = arith.constant dense<0.000000e+00> : vector<16xf32>
    %191 = vector.multi_reduction <add>, %186, %cst_69 [1] : vector<16x32xf32> to vector<16xf32>
    %192 = vector.shape_cast %191 : vector<16xf32> to vector<16x1xf32>
    %cst_70 = arith.constant 3.200000e+01 : f32
    %193 = vector.broadcast %cst_70 : f32 to vector<16x1xf32>
    %194 = arith.divf %192, %193 : vector<16x1xf32>
    %195 = vector.broadcast %194 : vector<16x1xf32> to vector<16x32xf32>
    %196 = arith.subf %186, %195 : vector<16x32xf32>
    %197 = arith.mulf %196, %196 : vector<16x32xf32>
    %cst_71 = arith.constant dense<0.000000e+00> : vector<16xf32>
    %198 = vector.multi_reduction <add>, %197, %cst_71 [1] : vector<16x32xf32> to vector<16xf32>
    %199 = vector.shape_cast %198 : vector<16xf32> to vector<16x1xf32>
    %cst_72 = arith.constant 3.200000e+01 : f32
    %200 = vector.broadcast %cst_72 : f32 to vector<16x1xf32>
    %201 = arith.divf %199, %200 : vector<16x1xf32>
    %202 = vector.broadcast %194 : vector<16x1xf32> to vector<16x32xf32>
    %203 = arith.subf %186, %202 : vector<16x32xf32>
    %cst_73 = arith.constant 9.99999974E-6 : f32
    %204 = vector.broadcast %cst_73 : f32 to vector<16x1xf32>
    %205 = arith.addf %201, %204 : vector<16x1xf32>
    %206 = math.rsqrt %205 : vector<16x1xf32>
    %207 = vector.broadcast %206 : vector<16x1xf32> to vector<16x32xf32>
    %208 = arith.mulf %203, %207 : vector<16x32xf32>
    %209 = vector.broadcast %188 : vector<1x32xf32> to vector<16x32xf32>
    %210 = arith.mulf %208, %209 : vector<16x32xf32>
    %211 = vector.broadcast %190 : vector<1x32xf32> to vector<16x32xf32>
    %212 = arith.addf %210, %211 : vector<16x32xf32>
    %213 = arith.truncf %212 : vector<16x32xf32> to vector<16x32xbf16>
    %c0_74 = arith.constant 0 : index
    %c0_75 = arith.constant 0 : index
    %c0_76 = arith.constant 0 : index
    %214 = vector.load %arg14[%c0_74, %c0_75, %c0_76] : memref<2x32x64xbf16, #tpu.memory_space<vmem>>, vector<1x32x64xbf16>
    %215 = vector.shape_cast %214 : vector<1x32x64xbf16> to vector<32x64xbf16>
    %cst_77 = arith.constant dense<0.000000e+00> : vector<16x64xf32>
    %216 = tpu.matmul %213, %215, %cst_77 {dimension_numbers = #tpu.dot_dimension_numbers<[1], [0], [0], [1], [0, 0, 1, 1], [], []>} : vector<16x32xbf16>, vector<32x64xbf16>, vector<16x64xf32> -> vector<16x64xf32>
    %c0_78 = arith.constant 0 : index
    %c0_79 = arith.constant 0 : index
    %c0_80 = arith.constant 0 : index
    %217 = vector.load %arg15[%c0_78, %c0_79, %c0_80] : memref<2x1x64xf32, #tpu.memory_space<vmem>>, vector<1x1x64xf32>
    %218 = vector.shape_cast %217 : vector<1x1x64xf32> to vector<1x64xf32>
    %219 = vector.broadcast %218 : vector<1x64xf32> to vector<16x64xf32>
    %220 = arith.addf %216, %219 : vector<16x64xf32>
    %cst_81 = arith.constant 5.000000e-01 : f32
    %221 = vector.broadcast %cst_81 : f32 to vector<16x64xf32>
    %222 = arith.mulf %221, %220 : vector<16x64xf32>
    %cst_82 = arith.constant 0.707106769 : f32
    %223 = vector.broadcast %cst_82 : f32 to vector<16x64xf32>
    %224 = arith.mulf %220, %223 : vector<16x64xf32>
    %225 = math.absf %224 : vector<16x64xf32>
    %cst_83 = arith.constant 0.327591091 : f32
    %226 = vector.broadcast %cst_83 : f32 to vector<16x64xf32>
    %227 = arith.mulf %226, %225 : vector<16x64xf32>
    %cst_84 = arith.constant 1.000000e+00 : f32
    %228 = vector.broadcast %cst_84 : f32 to vector<16x64xf32>
    %229 = arith.addf %228, %227 : vector<16x64xf32>
    %230 = tpu.reciprocal %229 {approx = true} : vector<16x64xf32> -> vector<16x64xf32>
    %cst_85 = arith.constant 1.06140542 : f32
    %231 = vector.broadcast %cst_85 : f32 to vector<16x64xf32>
    %232 = arith.mulf %231, %230 : vector<16x64xf32>
    %cst_86 = arith.constant -1.45315206 : f32
    %233 = vector.broadcast %cst_86 : f32 to vector<16x64xf32>
    %234 = arith.addf %232, %233 : vector<16x64xf32>
    %235 = arith.mulf %234, %230 : vector<16x64xf32>
    %cst_87 = arith.constant 1.42141378 : f32
    %236 = vector.broadcast %cst_87 : f32 to vector<16x64xf32>
    %237 = arith.addf %235, %236 : vector<16x64xf32>
    %238 = arith.mulf %237, %230 : vector<16x64xf32>
    %cst_88 = arith.constant -0.284496725 : f32
    %239 = vector.broadcast %cst_88 : f32 to vector<16x64xf32>
    %240 = arith.addf %238, %239 : vector<16x64xf32>
    %241 = arith.mulf %240, %230 : vector<16x64xf32>
    %cst_89 = arith.constant 0.254829586 : f32
    %242 = vector.broadcast %cst_89 : f32 to vector<16x64xf32>
    %243 = arith.addf %241, %242 : vector<16x64xf32>
    %244 = arith.mulf %243, %230 : vector<16x64xf32>
    %cst_90 = arith.constant 0.000000e+00 : f32
    %245 = vector.broadcast %cst_90 : f32 to vector<16x64xf32>
    %246 = arith.subf %245, %225 : vector<16x64xf32>
    %247 = arith.mulf %246, %225 : vector<16x64xf32>
    %248 = math.exp %247 : vector<16x64xf32>
    %249 = arith.mulf %244, %248 : vector<16x64xf32>
    %cst_91 = arith.constant 1.000000e+00 : f32
    %250 = vector.broadcast %cst_91 : f32 to vector<16x64xf32>
    %251 = arith.subf %250, %249 : vector<16x64xf32>
    %cst_92 = arith.constant 0.000000e+00 : f32
    %252 = vector.broadcast %cst_92 : f32 to vector<16x64xf32>
    %253 = arith.cmpf oge, %224, %252 : vector<16x64xf32>
    %cst_93 = arith.constant 0.000000e+00 : f32
    %254 = vector.broadcast %cst_93 : f32 to vector<16x64xf32>
    %255 = arith.subf %254, %251 : vector<16x64xf32>
    %256 = arith.select %253, %251, %255 : vector<16x64xi1>, vector<16x64xf32>
    %cst_94 = arith.constant 1.000000e+00 : f32
    %257 = vector.broadcast %cst_94 : f32 to vector<16x64xf32>
    %258 = arith.addf %257, %256 : vector<16x64xf32>
    %259 = arith.mulf %222, %258 : vector<16x64xf32>
    %260 = arith.truncf %259 : vector<16x64xf32> to vector<16x64xbf16>
    %c0_95 = arith.constant 0 : index
    %c0_96 = arith.constant 0 : index
    %c0_97 = arith.constant 0 : index
    %261 = vector.load %arg16[%c0_95, %c0_96, %c0_97] : memref<2x64x32xbf16, #tpu.memory_space<vmem>>, vector<1x64x32xbf16>
    %262 = vector.shape_cast %261 : vector<1x64x32xbf16> to vector<64x32xbf16>
    %cst_98 = arith.constant dense<0.000000e+00> : vector<16x32xf32>
    %263 = tpu.matmul %260, %262, %cst_98 {dimension_numbers = #tpu.dot_dimension_numbers<[1], [0], [0], [1], [0, 0, 1, 1], [], []>} : vector<16x64xbf16>, vector<64x32xbf16>, vector<16x32xf32> -> vector<16x32xf32>
    %c0_99 = arith.constant 0 : index
    %c0_100 = arith.constant 0 : index
    %c0_101 = arith.constant 0 : index
    %264 = vector.load %arg17[%c0_99, %c0_100, %c0_101] : memref<2x1x32xf32, #tpu.memory_space<vmem>>, vector<1x1x32xf32>
    %265 = vector.shape_cast %264 : vector<1x1x32xf32> to vector<1x32xf32>
    %266 = vector.broadcast %265 : vector<1x32xf32> to vector<16x32xf32>
    %267 = arith.addf %263, %266 : vector<16x32xf32>
    %268 = arith.addf %212, %267 : vector<16x32xf32>
    %c0_102 = arith.constant 0 : index
    %c0_103 = arith.constant 0 : index
    %c0_104 = arith.constant 0 : index
    %269 = vector.load %arg18[%c0_102, %c0_103, %c0_104] : memref<2x1x32xf32, #tpu.memory_space<vmem>>, vector<1x1x32xf32>
    %270 = vector.shape_cast %269 : vector<1x1x32xf32> to vector<1x32xf32>
    %c0_105 = arith.constant 0 : index
    %c0_106 = arith.constant 0 : index
    %c0_107 = arith.constant 0 : index
    %271 = vector.load %arg19[%c0_105, %c0_106, %c0_107] : memref<2x1x32xf32, #tpu.memory_space<vmem>>, vector<1x1x32xf32>
    %272 = vector.shape_cast %271 : vector<1x1x32xf32> to vector<1x32xf32>
    %cst_108 = arith.constant dense<0.000000e+00> : vector<16xf32>
    %273 = vector.multi_reduction <add>, %268, %cst_108 [1] : vector<16x32xf32> to vector<16xf32>
    %274 = vector.shape_cast %273 : vector<16xf32> to vector<16x1xf32>
    %cst_109 = arith.constant 3.200000e+01 : f32
    %275 = vector.broadcast %cst_109 : f32 to vector<16x1xf32>
    %276 = arith.divf %274, %275 : vector<16x1xf32>
    %277 = vector.broadcast %276 : vector<16x1xf32> to vector<16x32xf32>
    %278 = arith.subf %268, %277 : vector<16x32xf32>
    %279 = arith.mulf %278, %278 : vector<16x32xf32>
    %cst_110 = arith.constant dense<0.000000e+00> : vector<16xf32>
    %280 = vector.multi_reduction <add>, %279, %cst_110 [1] : vector<16x32xf32> to vector<16xf32>
    %281 = vector.shape_cast %280 : vector<16xf32> to vector<16x1xf32>
    %cst_111 = arith.constant 3.200000e+01 : f32
    %282 = vector.broadcast %cst_111 : f32 to vector<16x1xf32>
    %283 = arith.divf %281, %282 : vector<16x1xf32>
    %284 = vector.broadcast %276 : vector<16x1xf32> to vector<16x32xf32>
    %285 = arith.subf %268, %284 : vector<16x32xf32>
    %cst_112 = arith.constant 9.99999974E-6 : f32
    %286 = vector.broadcast %cst_112 : f32 to vector<16x1xf32>
    %287 = arith.addf %283, %286 : vector<16x1xf32>
    %288 = math.rsqrt %287 : vector<16x1xf32>
    %289 = vector.broadcast %288 : vector<16x1xf32> to vector<16x32xf32>
    %290 = arith.mulf %285, %289 : vector<16x32xf32>
    %291 = vector.broadcast %270 : vector<1x32xf32> to vector<16x32xf32>
    %292 = arith.mulf %290, %291 : vector<16x32xf32>
    %293 = vector.broadcast %272 : vector<1x32xf32> to vector<16x32xf32>
    %294 = arith.addf %292, %293 : vector<16x32xf32>
    %295 = arith.truncf %294 : vector<16x32xf32> to vector<16x32xbf16>
    %c1 = arith.constant 1 : index
    %c0_113 = arith.constant 0 : index
    %c0_114 = arith.constant 0 : index
    %296 = vector.load %arg8[%c1, %c0_113, %c0_114] : memref<2x32x96xbf16, #tpu.memory_space<vmem>>, vector<1x32x96xbf16>
    %297 = vector.shape_cast %296 : vector<1x32x96xbf16> to vector<32x96xbf16>
    %cst_115 = arith.constant dense<0.000000e+00> : vector<16x96xf32>
    %298 = tpu.matmul %295, %297, %cst_115 {dimension_numbers = #tpu.dot_dimension_numbers<[1], [0], [0], [1], [0, 0, 1, 1], [], []>} : vector<16x32xbf16>, vector<32x96xbf16>, vector<16x96xf32> -> vector<16x96xf32>
    %c1_116 = arith.constant 1 : index
    %c0_117 = arith.constant 0 : index
    %c0_118 = arith.constant 0 : index
    %299 = vector.load %arg9[%c1_116, %c0_117, %c0_118] : memref<2x1x96xf32, #tpu.memory_space<vmem>>, vector<1x1x96xf32>
    %300 = vector.shape_cast %299 : vector<1x1x96xf32> to vector<1x96xf32>
    %301 = vector.broadcast %300 : vector<1x96xf32> to vector<16x96xf32>
    %302 = arith.addf %298, %301 : vector<16x96xf32>
    %303 = vector.extract_strided_slice %302 {offsets = [0, 0], sizes = [8, 16], strides = [1, 1]} : vector<16x96xf32> to vector<8x16xf32>
    %304 = vector.extract_strided_slice %302 {offsets = [0, 16], sizes = [8, 16], strides = [1, 1]} : vector<16x96xf32> to vector<8x16xf32>
    %305 = vector.extract_strided_slice %302 {offsets = [8, 0], sizes = [8, 16], strides = [1, 1]} : vector<16x96xf32> to vector<8x16xf32>
    %306 = vector.extract_strided_slice %302 {offsets = [8, 16], sizes = [8, 16], strides = [1, 1]} : vector<16x96xf32> to vector<8x16xf32>
    %307 = tpu.concatenate %303, %304, %305, %306 in 0 : vector<8x16xf32>, vector<8x16xf32>, vector<8x16xf32>, vector<8x16xf32> -> vector<32x16xf32>
    %308 = arith.truncf %307 : vector<32x16xf32> to vector<32x16xbf16>
    %309 = vector.extract_strided_slice %302 {offsets = [0, 32], sizes = [8, 16], strides = [1, 1]} : vector<16x96xf32> to vector<8x16xf32>
    %310 = vector.extract_strided_slice %302 {offsets = [0, 48], sizes = [8, 16], strides = [1, 1]} : vector<16x96xf32> to vector<8x16xf32>
    %311 = vector.extract_strided_slice %302 {offsets = [8, 32], sizes = [8, 16], strides = [1, 1]} : vector<16x96xf32> to vector<8x16xf32>
    %312 = vector.extract_strided_slice %302 {offsets = [8, 48], sizes = [8, 16], strides = [1, 1]} : vector<16x96xf32> to vector<8x16xf32>
    %313 = tpu.concatenate %309, %310, %311, %312 in 0 : vector<8x16xf32>, vector<8x16xf32>, vector<8x16xf32>, vector<8x16xf32> -> vector<32x16xf32>
    %314 = arith.truncf %313 : vector<32x16xf32> to vector<32x16xbf16>
    %315 = vector.extract_strided_slice %302 {offsets = [0, 64], sizes = [8, 16], strides = [1, 1]} : vector<16x96xf32> to vector<8x16xf32>
    %316 = vector.extract_strided_slice %302 {offsets = [0, 80], sizes = [8, 16], strides = [1, 1]} : vector<16x96xf32> to vector<8x16xf32>
    %317 = vector.extract_strided_slice %302 {offsets = [8, 64], sizes = [8, 16], strides = [1, 1]} : vector<16x96xf32> to vector<8x16xf32>
    %318 = vector.extract_strided_slice %302 {offsets = [8, 80], sizes = [8, 16], strides = [1, 1]} : vector<16x96xf32> to vector<8x16xf32>
    %319 = tpu.concatenate %315, %316, %317, %318 in 0 : vector<8x16xf32>, vector<8x16xf32>, vector<8x16xf32>, vector<8x16xf32> -> vector<32x16xf32>
    %320 = arith.truncf %319 : vector<32x16xf32> to vector<32x16xbf16>
    %cst_119 = arith.constant dense<0.000000e+00> : vector<32x32xf32>
    %321 = tpu.matmul %308, %314, %cst_119 {dimension_numbers = #tpu.dot_dimension_numbers<[1], [1], [0], [0], [0, 0, 1, 0], [], []>} : vector<32x16xbf16>, vector<32x16xbf16>, vector<32x32xf32> -> vector<32x32xf32>
    %cst_120 = arith.constant 2.500000e-01 : f32
    %322 = vector.broadcast %cst_120 : f32 to vector<32x32xf32>
    %323 = arith.mulf %321, %322 : vector<32x32xf32>
    %324 = arith.addf %323, %124 : vector<32x32xf32>
    %cst_121 = arith.constant dense<0xFF800000> : vector<32xf32>
    %325 = vector.multi_reduction <maximumf>, %324, %cst_121 [1] : vector<32x32xf32> to vector<32xf32>
    %326 = vector.shape_cast %325 : vector<32xf32> to vector<32x1xf32>
    %327 = vector.broadcast %326 : vector<32x1xf32> to vector<32x32xf32>
    %328 = arith.subf %324, %327 : vector<32x32xf32>
    %329 = math.exp %328 : vector<32x32xf32>
    %cst_122 = arith.constant dense<0.000000e+00> : vector<32xf32>
    %330 = vector.multi_reduction <add>, %329, %cst_122 [1] : vector<32x32xf32> to vector<32xf32>
    %331 = vector.shape_cast %330 : vector<32xf32> to vector<32x1xf32>
    %332 = tpu.reciprocal %331 {approx = true} : vector<32x1xf32> -> vector<32x1xf32>
    %333 = vector.broadcast %332 : vector<32x1xf32> to vector<32x32xf32>
    %334 = arith.mulf %329, %333 : vector<32x32xf32>
    %335 = arith.truncf %334 : vector<32x32xf32> to vector<32x32xbf16>
    %cst_123 = arith.constant dense<0.000000e+00> : vector<32x16xf32>
    %336 = tpu.matmul %335, %320, %cst_123 {dimension_numbers = #tpu.dot_dimension_numbers<[1], [0], [0], [1], [0, 0, 1, 1], [], []>} : vector<32x32xbf16>, vector<32x16xbf16>, vector<32x16xf32> -> vector<32x16xf32>
    %c1_124 = arith.constant 1 : index
    %c0_125 = arith.constant 0 : index
    %c0_126 = arith.constant 0 : index
    %337 = vector.load %arg10[%c1_124, %c0_125, %c0_126] : memref<2x32x32xbf16, #tpu.memory_space<vmem>>, vector<1x32x32xbf16>
    %338 = vector.shape_cast %337 : vector<1x32x32xbf16> to vector<32x32xbf16>
    %c1_127 = arith.constant 1 : index
    %c0_128 = arith.constant 0 : index
    %c0_129 = arith.constant 0 : index
    %339 = vector.load %arg11[%c1_127, %c0_128, %c0_129] : memref<2x1x32xf32, #tpu.memory_space<vmem>>, vector<1x1x32xf32>
    %340 = vector.shape_cast %339 : vector<1x1x32xf32> to vector<1x32xf32>
    %341 = vector.extract_strided_slice %336 {offsets = [0, 0], sizes = [8, 16], strides = [1, 1]} : vector<32x16xf32> to vector<8x16xf32>
    %342 = vector.extract_strided_slice %336 {offsets = [16, 0], sizes = [8, 16], strides = [1, 1]} : vector<32x16xf32> to vector<8x16xf32>
    %343 = tpu.concatenate %341, %342 in 0 : vector<8x16xf32>, vector<8x16xf32> -> vector<16x16xf32>
    %344 = arith.truncf %343 : vector<16x16xf32> to vector<16x16xbf16>
    %345 = vector.extract_strided_slice %338 {offsets = [0, 0], sizes = [16, 32], strides = [1, 1]} : vector<32x32xbf16> to vector<16x32xbf16>
    %cst_130 = arith.constant dense<0.000000e+00> : vector<16x32xf32>
    %346 = tpu.matmul %344, %345, %cst_130 {dimension_numbers = #tpu.dot_dimension_numbers<[1], [0], [0], [1], [0, 0, 1, 1], [], []>} : vector<16x16xbf16>, vector<16x32xbf16>, vector<16x32xf32> -> vector<16x32xf32>
    %347 = vector.broadcast %340 : vector<1x32xf32> to vector<16x32xf32>
    %348 = arith.addf %347, %346 : vector<16x32xf32>
    %349 = vector.extract_strided_slice %336 {offsets = [8, 0], sizes = [8, 16], strides = [1, 1]} : vector<32x16xf32> to vector<8x16xf32>
    %350 = vector.extract_strided_slice %336 {offsets = [24, 0], sizes = [8, 16], strides = [1, 1]} : vector<32x16xf32> to vector<8x16xf32>
    %351 = tpu.concatenate %349, %350 in 0 : vector<8x16xf32>, vector<8x16xf32> -> vector<16x16xf32>
    %352 = arith.truncf %351 : vector<16x16xf32> to vector<16x16xbf16>
    %353 = vector.extract_strided_slice %338 {offsets = [16, 0], sizes = [16, 32], strides = [1, 1]} : vector<32x32xbf16> to vector<16x32xbf16>
    %cst_131 = arith.constant dense<0.000000e+00> : vector<16x32xf32>
    %354 = tpu.matmul %352, %353, %cst_131 {dimension_numbers = #tpu.dot_dimension_numbers<[1], [0], [0], [1], [0, 0, 1, 1], [], []>} : vector<16x16xbf16>, vector<16x32xbf16>, vector<16x32xf32> -> vector<16x32xf32>
    %355 = arith.addf %348, %354 : vector<16x32xf32>
    %356 = arith.addf %294, %355 : vector<16x32xf32>
    %c1_132 = arith.constant 1 : index
    %c0_133 = arith.constant 0 : index
    %c0_134 = arith.constant 0 : index
    %357 = vector.load %arg12[%c1_132, %c0_133, %c0_134] : memref<2x1x32xf32, #tpu.memory_space<vmem>>, vector<1x1x32xf32>
    %358 = vector.shape_cast %357 : vector<1x1x32xf32> to vector<1x32xf32>
    %c1_135 = arith.constant 1 : index
    %c0_136 = arith.constant 0 : index
    %c0_137 = arith.constant 0 : index
    %359 = vector.load %arg13[%c1_135, %c0_136, %c0_137] : memref<2x1x32xf32, #tpu.memory_space<vmem>>, vector<1x1x32xf32>
    %360 = vector.shape_cast %359 : vector<1x1x32xf32> to vector<1x32xf32>
    %cst_138 = arith.constant dense<0.000000e+00> : vector<16xf32>
    %361 = vector.multi_reduction <add>, %356, %cst_138 [1] : vector<16x32xf32> to vector<16xf32>
    %362 = vector.shape_cast %361 : vector<16xf32> to vector<16x1xf32>
    %cst_139 = arith.constant 3.200000e+01 : f32
    %363 = vector.broadcast %cst_139 : f32 to vector<16x1xf32>
    %364 = arith.divf %362, %363 : vector<16x1xf32>
    %365 = vector.broadcast %364 : vector<16x1xf32> to vector<16x32xf32>
    %366 = arith.subf %356, %365 : vector<16x32xf32>
    %367 = arith.mulf %366, %366 : vector<16x32xf32>
    %cst_140 = arith.constant dense<0.000000e+00> : vector<16xf32>
    %368 = vector.multi_reduction <add>, %367, %cst_140 [1] : vector<16x32xf32> to vector<16xf32>
    %369 = vector.shape_cast %368 : vector<16xf32> to vector<16x1xf32>
    %cst_141 = arith.constant 3.200000e+01 : f32
    %370 = vector.broadcast %cst_141 : f32 to vector<16x1xf32>
    %371 = arith.divf %369, %370 : vector<16x1xf32>
    %372 = vector.broadcast %364 : vector<16x1xf32> to vector<16x32xf32>
    %373 = arith.subf %356, %372 : vector<16x32xf32>
    %cst_142 = arith.constant 9.99999974E-6 : f32
    %374 = vector.broadcast %cst_142 : f32 to vector<16x1xf32>
    %375 = arith.addf %371, %374 : vector<16x1xf32>
    %376 = math.rsqrt %375 : vector<16x1xf32>
    %377 = vector.broadcast %376 : vector<16x1xf32> to vector<16x32xf32>
    %378 = arith.mulf %373, %377 : vector<16x32xf32>
    %379 = vector.broadcast %358 : vector<1x32xf32> to vector<16x32xf32>
    %380 = arith.mulf %378, %379 : vector<16x32xf32>
    %381 = vector.broadcast %360 : vector<1x32xf32> to vector<16x32xf32>
    %382 = arith.addf %380, %381 : vector<16x32xf32>
    %383 = arith.truncf %382 : vector<16x32xf32> to vector<16x32xbf16>
    %c1_143 = arith.constant 1 : index
    %c0_144 = arith.constant 0 : index
    %c0_145 = arith.constant 0 : index
    %384 = vector.load %arg14[%c1_143, %c0_144, %c0_145] : memref<2x32x64xbf16, #tpu.memory_space<vmem>>, vector<1x32x64xbf16>
    %385 = vector.shape_cast %384 : vector<1x32x64xbf16> to vector<32x64xbf16>
    %cst_146 = arith.constant dense<0.000000e+00> : vector<16x64xf32>
    %386 = tpu.matmul %383, %385, %cst_146 {dimension_numbers = #tpu.dot_dimension_numbers<[1], [0], [0], [1], [0, 0, 1, 1], [], []>} : vector<16x32xbf16>, vector<32x64xbf16>, vector<16x64xf32> -> vector<16x64xf32>
    %c1_147 = arith.constant 1 : index
    %c0_148 = arith.constant 0 : index
    %c0_149 = arith.constant 0 : index
    %387 = vector.load %arg15[%c1_147, %c0_148, %c0_149] : memref<2x1x64xf32, #tpu.memory_space<vmem>>, vector<1x1x64xf32>
    %388 = vector.shape_cast %387 : vector<1x1x64xf32> to vector<1x64xf32>
    %389 = vector.broadcast %388 : vector<1x64xf32> to vector<16x64xf32>
    %390 = arith.addf %386, %389 : vector<16x64xf32>
    %cst_150 = arith.constant 5.000000e-01 : f32
    %391 = vector.broadcast %cst_150 : f32 to vector<16x64xf32>
    %392 = arith.mulf %391, %390 : vector<16x64xf32>
    %cst_151 = arith.constant 0.707106769 : f32
    %393 = vector.broadcast %cst_151 : f32 to vector<16x64xf32>
    %394 = arith.mulf %390, %393 : vector<16x64xf32>
    %395 = math.absf %394 : vector<16x64xf32>
    %cst_152 = arith.constant 0.327591091 : f32
    %396 = vector.broadcast %cst_152 : f32 to vector<16x64xf32>
    %397 = arith.mulf %396, %395 : vector<16x64xf32>
    %cst_153 = arith.constant 1.000000e+00 : f32
    %398 = vector.broadcast %cst_153 : f32 to vector<16x64xf32>
    %399 = arith.addf %398, %397 : vector<16x64xf32>
    %400 = tpu.reciprocal %399 {approx = true} : vector<16x64xf32> -> vector<16x64xf32>
    %cst_154 = arith.constant 1.06140542 : f32
    %401 = vector.broadcast %cst_154 : f32 to vector<16x64xf32>
    %402 = arith.mulf %401, %400 : vector<16x64xf32>
    %cst_155 = arith.constant -1.45315206 : f32
    %403 = vector.broadcast %cst_155 : f32 to vector<16x64xf32>
    %404 = arith.addf %402, %403 : vector<16x64xf32>
    %405 = arith.mulf %404, %400 : vector<16x64xf32>
    %cst_156 = arith.constant 1.42141378 : f32
    %406 = vector.broadcast %cst_156 : f32 to vector<16x64xf32>
    %407 = arith.addf %405, %406 : vector<16x64xf32>
    %408 = arith.mulf %407, %400 : vector<16x64xf32>
    %cst_157 = arith.constant -0.284496725 : f32
    %409 = vector.broadcast %cst_157 : f32 to vector<16x64xf32>
    %410 = arith.addf %408, %409 : vector<16x64xf32>
    %411 = arith.mulf %410, %400 : vector<16x64xf32>
    %cst_158 = arith.constant 0.254829586 : f32
    %412 = vector.broadcast %cst_158 : f32 to vector<16x64xf32>
    %413 = arith.addf %411, %412 : vector<16x64xf32>
    %414 = arith.mulf %413, %400 : vector<16x64xf32>
    %cst_159 = arith.constant 0.000000e+00 : f32
    %415 = vector.broadcast %cst_159 : f32 to vector<16x64xf32>
    %416 = arith.subf %415, %395 : vector<16x64xf32>
    %417 = arith.mulf %416, %395 : vector<16x64xf32>
    %418 = math.exp %417 : vector<16x64xf32>
    %419 = arith.mulf %414, %418 : vector<16x64xf32>
    %cst_160 = arith.constant 1.000000e+00 : f32
    %420 = vector.broadcast %cst_160 : f32 to vector<16x64xf32>
    %421 = arith.subf %420, %419 : vector<16x64xf32>
    %cst_161 = arith.constant 0.000000e+00 : f32
    %422 = vector.broadcast %cst_161 : f32 to vector<16x64xf32>
    %423 = arith.cmpf oge, %394, %422 : vector<16x64xf32>
    %cst_162 = arith.constant 0.000000e+00 : f32
    %424 = vector.broadcast %cst_162 : f32 to vector<16x64xf32>
    %425 = arith.subf %424, %421 : vector<16x64xf32>
    %426 = arith.select %423, %421, %425 : vector<16x64xi1>, vector<16x64xf32>
    %cst_163 = arith.constant 1.000000e+00 : f32
    %427 = vector.broadcast %cst_163 : f32 to vector<16x64xf32>
    %428 = arith.addf %427, %426 : vector<16x64xf32>
    %429 = arith.mulf %392, %428 : vector<16x64xf32>
    %430 = arith.truncf %429 : vector<16x64xf32> to vector<16x64xbf16>
    %c1_164 = arith.constant 1 : index
    %c0_165 = arith.constant 0 : index
    %c0_166 = arith.constant 0 : index
    %431 = vector.load %arg16[%c1_164, %c0_165, %c0_166] : memref<2x64x32xbf16, #tpu.memory_space<vmem>>, vector<1x64x32xbf16>
    %432 = vector.shape_cast %431 : vector<1x64x32xbf16> to vector<64x32xbf16>
    %cst_167 = arith.constant dense<0.000000e+00> : vector<16x32xf32>
    %433 = tpu.matmul %430, %432, %cst_167 {dimension_numbers = #tpu.dot_dimension_numbers<[1], [0], [0], [1], [0, 0, 1, 1], [], []>} : vector<16x64xbf16>, vector<64x32xbf16>, vector<16x32xf32> -> vector<16x32xf32>
    %c1_168 = arith.constant 1 : index
    %c0_169 = arith.constant 0 : index
    %c0_170 = arith.constant 0 : index
    %434 = vector.load %arg17[%c1_168, %c0_169, %c0_170] : memref<2x1x32xf32, #tpu.memory_space<vmem>>, vector<1x1x32xf32>
    %435 = vector.shape_cast %434 : vector<1x1x32xf32> to vector<1x32xf32>
    %436 = vector.broadcast %435 : vector<1x32xf32> to vector<16x32xf32>
    %437 = arith.addf %433, %436 : vector<16x32xf32>
    %438 = arith.addf %382, %437 : vector<16x32xf32>
    %c1_171 = arith.constant 1 : index
    %c0_172 = arith.constant 0 : index
    %c0_173 = arith.constant 0 : index
    %439 = vector.load %arg18[%c1_171, %c0_172, %c0_173] : memref<2x1x32xf32, #tpu.memory_space<vmem>>, vector<1x1x32xf32>
    %440 = vector.shape_cast %439 : vector<1x1x32xf32> to vector<1x32xf32>
    %c1_174 = arith.constant 1 : index
    %c0_175 = arith.constant 0 : index
    %c0_176 = arith.constant 0 : index
    %441 = vector.load %arg19[%c1_174, %c0_175, %c0_176] : memref<2x1x32xf32, #tpu.memory_space<vmem>>, vector<1x1x32xf32>
    %442 = vector.shape_cast %441 : vector<1x1x32xf32> to vector<1x32xf32>
    %cst_177 = arith.constant dense<0.000000e+00> : vector<16xf32>
    %443 = vector.multi_reduction <add>, %438, %cst_177 [1] : vector<16x32xf32> to vector<16xf32>
    %444 = vector.shape_cast %443 : vector<16xf32> to vector<16x1xf32>
    %cst_178 = arith.constant 3.200000e+01 : f32
    %445 = vector.broadcast %cst_178 : f32 to vector<16x1xf32>
    %446 = arith.divf %444, %445 : vector<16x1xf32>
    %447 = vector.broadcast %446 : vector<16x1xf32> to vector<16x32xf32>
    %448 = arith.subf %438, %447 : vector<16x32xf32>
    %449 = arith.mulf %448, %448 : vector<16x32xf32>
    %cst_179 = arith.constant dense<0.000000e+00> : vector<16xf32>
    %450 = vector.multi_reduction <add>, %449, %cst_179 [1] : vector<16x32xf32> to vector<16xf32>
    %451 = vector.shape_cast %450 : vector<16xf32> to vector<16x1xf32>
    %cst_180 = arith.constant 3.200000e+01 : f32
    %452 = vector.broadcast %cst_180 : f32 to vector<16x1xf32>
    %453 = arith.divf %451, %452 : vector<16x1xf32>
    %454 = vector.broadcast %446 : vector<16x1xf32> to vector<16x32xf32>
    %455 = arith.subf %438, %454 : vector<16x32xf32>
    %cst_181 = arith.constant 9.99999974E-6 : f32
    %456 = vector.broadcast %cst_181 : f32 to vector<16x1xf32>
    %457 = arith.addf %453, %456 : vector<16x1xf32>
    %458 = math.rsqrt %457 : vector<16x1xf32>
    %459 = vector.broadcast %458 : vector<16x1xf32> to vector<16x32xf32>
    %460 = arith.mulf %455, %459 : vector<16x32xf32>
    %461 = vector.broadcast %440 : vector<1x32xf32> to vector<16x32xf32>
    %462 = arith.mulf %460, %461 : vector<16x32xf32>
    %463 = vector.broadcast %442 : vector<1x32xf32> to vector<16x32xf32>
    %464 = arith.addf %462, %463 : vector<16x32xf32>
    %465 = vector.extract_strided_slice %464 {offsets = [0, 0], sizes = [1, 32], strides = [1, 1]} : vector<16x32xf32> to vector<1x32xf32>
    %466 = vector.extract_strided_slice %464 {offsets = [8, 0], sizes = [1, 32], strides = [1, 1]} : vector<16x32xf32> to vector<1x32xf32>
    %467 = tpu.concatenate %465, %466 in 0 : vector<1x32xf32>, vector<1x32xf32> -> vector<2x32xf32>
    %468 = arith.truncf %467 : vector<2x32xf32> to vector<2x32xbf16>
    %c0_182 = arith.constant 0 : index
    %c0_183 = arith.constant 0 : index
    %469 = vector.load %arg20[%c0_182, %c0_183] : memref<32x32xbf16, #tpu.memory_space<vmem>>, vector<32x32xbf16>
    %cst_184 = arith.constant dense<0.000000e+00> : vector<2x32xf32>
    %470 = tpu.matmul %468, %469, %cst_184 {dimension_numbers = #tpu.dot_dimension_numbers<[1], [0], [0], [1], [0, 0, 1, 1], [], []>} : vector<2x32xbf16>, vector<32x32xbf16>, vector<2x32xf32> -> vector<2x32xf32>
    %c0_185 = arith.constant 0 : index
    %c0_186 = arith.constant 0 : index
    %471 = vector.load %arg21[%c0_185, %c0_186] : memref<1x32xf32, #tpu.memory_space<vmem>>, vector<1x32xf32>
    %472 = vector.broadcast %471 : vector<1x32xf32> to vector<2x32xf32>
    %473 = arith.addf %470, %472 : vector<2x32xf32>
    %474 = math.tanh %473 : vector<2x32xf32>
    %475 = arith.truncf %474 : vector<2x32xf32> to vector<2x32xbf16>
    %c0_187 = arith.constant 0 : index
    %c0_188 = arith.constant 0 : index
    %476 = vector.load %arg22[%c0_187, %c0_188] : memref<32x2xbf16, #tpu.memory_space<vmem>>, vector<32x2xbf16>
    %cst_189 = arith.constant dense<0.000000e+00> : vector<2x2xf32>
    %477 = tpu.matmul %475, %476, %cst_189 {dimension_numbers = #tpu.dot_dimension_numbers<[1], [0], [0], [1], [0, 0, 1, 1], [], []>} : vector<2x32xbf16>, vector<32x2xbf16>, vector<2x2xf32> -> vector<2x2xf32>
    %c0_190 = arith.constant 0 : index
    %c0_191 = arith.constant 0 : index
    %478 = vector.load %arg23[%c0_190, %c0_191] : memref<1x2xf32, #tpu.memory_space<vmem>>, vector<1x2xf32>
    %479 = vector.broadcast %478 : vector<1x2xf32> to vector<2x2xf32>
    %480 = arith.addf %477, %479 : vector<2x2xf32>
    %c0_192 = arith.constant 0 : index
    %c0_193 = arith.constant 0 : index
    %481 = vector.load %arg24[%c0_192, %c0_193] : memref<2x2xf32, #tpu.memory_space<vmem>>, vector<2x2xf32>
    tpu.vector_store %arg24[%c0_192, %c0_193], %480 {strides = array<i32>} : memref<2x2xf32, #tpu.memory_space<vmem>>, vector<2x2xf32>,
    %cst_194 = arith.constant dense<0xFF800000> : vector<2xf32>
    %482 = vector.multi_reduction <maximumf>, %480, %cst_194 [1] : vector<2x2xf32> to vector<2xf32>
    %483 = vector.shape_cast %482 : vector<2xf32> to vector<2x1xf32>
    %484 = vector.broadcast %483 : vector<2x1xf32> to vector<2x2xf32>
    %485 = arith.subf %480, %484 : vector<2x2xf32>
    %486 = math.exp %485 : vector<2x2xf32>
    %cst_195 = arith.constant dense<0.000000e+00> : vector<2xf32>
    %487 = vector.multi_reduction <add>, %486, %cst_195 [1] : vector<2x2xf32> to vector<2xf32>
    %488 = vector.shape_cast %487 : vector<2xf32> to vector<2x1xf32>
    %489 = vector.broadcast %488 : vector<2x1xf32> to vector<2x2xf32>
    %490 = arith.divf %486, %489 : vector<2x2xf32>
    %c0_196 = arith.constant 0 : index
    %c0_197 = arith.constant 0 : index
    %491 = vector.load %arg25[%c0_196, %c0_197] : memref<2x2xf32, #tpu.memory_space<vmem>>, vector<2x2xf32>
    tpu.vector_store %arg25[%c0_196, %c0_197], %490 {strides = array<i32>} : memref<2x2xf32, #tpu.memory_space<vmem>>, vector<2x2xf32>,
    %492 = vector.broadcast %483 : vector<2x1xf32> to vector<2x2xf32>
    %493 = arith.subf %480, %492 : vector<2x2xf32>
    %494 = math.log %488 : vector<2x1xf32>
    %495 = vector.broadcast %494 : vector<2x1xf32> to vector<2x2xf32>
    %496 = arith.subf %493, %495 : vector<2x2xf32>
    %497 = tpu.iota {dimensions = array<i32: 1>} : vector<2x2xi32>
    %c0_198 = arith.constant 0 : index
    %c0_199 = arith.constant 0 : index
    %498 = vector.load %arg2[%c0_198, %c0_199] : memref<2x1xi32, #tpu.memory_space<vmem>>, vector<2x1xi32>
    %499 = vector.broadcast %498 : vector<2x1xi32> to vector<2x2xi32>
    %500 = arith.cmpi eq, %497, %499 : vector<2x2xi32>
    %501 = arith.extui %500 : vector<2x2xi1> to vector<2x2xi32>
    %502 = arith.sitofp %501 : vector<2x2xi32> to vector<2x2xf32>
    %503 = arith.mulf %502, %496 : vector<2x2xf32>
    %cst_200 = arith.constant dense<0.000000e+00> : vector<2xf32>
    %504 = vector.multi_reduction <add>, %503, %cst_200 [1] : vector<2x2xf32> to vector<2xf32>
    %505 = vector.shape_cast %504 : vector<2xf32> to vector<2x1xf32>
    %cst_201 = arith.constant 0.000000e+00 : f32
    %506 = vector.broadcast %cst_201 : f32 to vector<2x1xf32>
    %507 = arith.subf %506, %505 : vector<2x1xf32>
    %cst_202 = arith.constant dense<0.000000e+00> : vector<1xf32>
    %508 = vector.multi_reduction <add>, %507, %cst_202 [0] : vector<2x1xf32> to vector<1xf32>
    %509 = vector.shape_cast %508 : vector<1xf32> to vector<1x1xf32>
    %cst_203 = arith.constant 5.000000e-01 : f32
    %510 = vector.broadcast %cst_203 : f32 to vector<1x1xf32>
    %511 = arith.mulf %509, %510 : vector<1x1xf32>
    %c0_204 = arith.constant 0 : index
    %c0_205 = arith.constant 0 : index
    %512 = vector.load %arg26[%c0_204, %c0_205] : memref<1x1xf32, #tpu.memory_space<vmem>>, vector<1x1xf32>
    tpu.vector_store %arg26[%c0_204, %c0_205], %511 {strides = array<i32>} : memref<1x1xf32, #tpu.memory_space<vmem>>, vector<1x1xf32>,
    return
  }
}

</mosaic_0001>

<llo_original>
// kernel: roberta_forward.1
$region0: #{roberta_forward.1}
  #allocation0 [shape = 'u32[]', space=smem, size = 0x4, offset = 0x4, fixed_abs, tag = 'smem constant byte address 0x4 - core index']
  #allocation1 [shape = 'u32[144,128]{1,0:T(1,128)}', space=vmem, size = 0x12000, scoped, tag = 'internal scratch']
  %s0 = inlined_call_operand.vmem [shape: s32[16,1], index: 0, kind: input, shape index: {}]
  %s1 = inlined_call_operand.vmem [shape: s32[16,1], index: 1, kind: input, shape index: {}]
  %s2 = inlined_call_operand.vmem [shape: s32[2,1], index: 2, kind: input, shape index: {}]
  %s3 = inlined_call_operand.vmem [shape: f32[128,32], index: 3, kind: input, shape index: {}]
  %s4 = inlined_call_operand.vmem [shape: f32[64,32], index: 4, kind: input, shape index: {}]
  %s5 = inlined_call_operand.vmem [shape: f32[1,32], index: 5, kind: input, shape index: {}]
  %s6 = inlined_call_operand.vmem [shape: f32[1,32], index: 6, kind: input, shape index: {}]
  %s7 = inlined_call_operand.vmem [shape: f32[1,32], index: 7, kind: input, shape index: {}]
  %s8 = inlined_call_operand.vmem [shape: bf16[2,32,96], index: 8, kind: input, shape index: {}]
  %s9 = inlined_call_operand.vmem [shape: f32[2,1,96], index: 9, kind: input, shape index: {}]
  %s10 = inlined_call_operand.vmem [shape: bf16[2,32,32], index: 10, kind: input, shape index: {}]
  %s11 = inlined_call_operand.vmem [shape: f32[2,1,32], index: 11, kind: input, shape index: {}]
  %s12 = inlined_call_operand.vmem [shape: f32[2,1,32], index: 12, kind: input, shape index: {}]
  %s13 = inlined_call_operand.vmem [shape: f32[2,1,32], index: 13, kind: input, shape index: {}]
  %s14 = inlined_call_operand.vmem [shape: bf16[2,32,64], index: 14, kind: input, shape index: {}]
  %s15 = inlined_call_operand.vmem [shape: f32[2,1,64], index: 15, kind: input, shape index: {}]
  %s16 = inlined_call_operand.vmem [shape: bf16[2,64,32], index: 16, kind: input, shape index: {}]
  %s17 = inlined_call_operand.vmem [shape: f32[2,1,32], index: 17, kind: input, shape index: {}]
  %s18 = inlined_call_operand.vmem [shape: f32[2,1,32], index: 18, kind: input, shape index: {}]
  %s19 = inlined_call_operand.vmem [shape: f32[2,1,32], index: 19, kind: input, shape index: {}]
  %s20 = inlined_call_operand.vmem [shape: bf16[32,32], index: 20, kind: input, shape index: {}]
  %s21 = inlined_call_operand.vmem [shape: f32[1,32], index: 21, kind: input, shape index: {}]
  %s22 = inlined_call_operand.vmem [shape: bf16[32,2], index: 22, kind: input, shape index: {}]
  %s23 = inlined_call_operand.vmem [shape: f32[1,2], index: 23, kind: input, shape index: {}]
  %s24 = inlined_call_operand.hbm [shape: f32[2,2], index: 24, kind: output, shape index: {0}]
  %s25 = inlined_call_operand.hbm [shape: f32[2,2], index: 25, kind: output, shape index: {1}]
  %s26 = inlined_call_operand.hbm [shape: f32[1,1], index: 26, kind: output, shape index: {2}]
  %27 = xla_tuple %s24, %s25, %s26
  %s28 = sld [smem:[#allocation0]]
  $region122: #{roberta_forward.1} parent=0
    _
  %s30 = ssub.s32 1, %s28
  %s31 = scalar_select 0, %s30, %s28
  $region1: #{roberta_forward.1} parent=0
    #allocation2 [shape = 'u8[1024]{0}', space=vmem, size = 0x400, scoped, tag = 'output window, operand 0, single buffered']
    #allocation3 [shape = 's32[1]{0}', space=sflag, size = 0x4, scoped, tag = 'scoped memory for roberta_forward.1']
    #allocation4 [shape = 'u8[1024]{0}', space=vmem, size = 0x400, scoped, tag = 'output window, operand 1, single buffered']
    #allocation5 [shape = 's32[1]{0}', space=sflag, size = 0x4, scoped, tag = 'scoped memory for roberta_forward.1']
    #allocation6 [shape = 'u8[512]{0}', space=vmem, size = 0x400, scoped, tag = 'output window, operand 2, single buffered']
    %32 = vsyncpa [#allocation3], 0
    %33 = vsyncpa [#allocation5], 0
    // Predicated region
    $region2: #{roberta_forward.1} parent=1 // pred_check
      _
    $region3: #{roberta_forward.1} parent=1 // pred_check_branch
      %35 = sbr.rel (0) target = $region5
    $region4: #{roberta_forward.1} parent=1 // pred_region
      _
    $region5: #{roberta_forward.1} parent=1 // pred_fallthru
      _
    // Predicated region
    $region6: #{roberta_forward.1} parent=1 // pred_check
      _
    $region7: #{roberta_forward.1} parent=1 // pred_check_branch
      %37 = sbr.rel (0) target = $region9
    $region8: #{roberta_forward.1} parent=1 // pred_region
      _
    $region9: #{roberta_forward.1} parent=1 // pred_fallthru
      _
    // Predicated region
    $region10: #{roberta_forward.1} parent=1 // pred_check
      _
    $region11: #{roberta_forward.1} parent=1 // pred_check_branch
      %39 = sbr.rel (0) target = $region13
    $region12: #{roberta_forward.1} parent=1 // pred_region
      _
    $region13: #{roberta_forward.1} parent=1 // pred_fallthru
      _
    // Predicated region
    $region14: #{roberta_forward.1} parent=1 // pred_check
      _
    $region15: #{roberta_forward.1} parent=1 // pred_check_branch
      %41 = sbr.rel (0) target = $region17
    $region16: #{roberta_forward.1} parent=1 // pred_region
      _
    $region17: #{roberta_forward.1} parent=1 // pred_fallthru
      _
    // Predicated region
    $region18: #{roberta_forward.1} parent=1 // pred_check
      _
    $region19: #{roberta_forward.1} parent=1 // pred_check_branch
      %43 = sbr.rel (0) target = $region21
    $region20: #{roberta_forward.1} parent=1 // pred_region
      _
    $region21: #{roberta_forward.1} parent=1 // pred_fallthru
      _
    // Predicated region
    $region22: #{roberta_forward.1} parent=1 // pred_check
      _
    $region23: #{roberta_forward.1} parent=1 // pred_check_branch
      %45 = sbr.rel (0) target = $region25
    $region24: #{roberta_forward.1} parent=1 // pred_region
      _
    $region25: #{roberta_forward.1} parent=1 // pred_fallthru
      _
    // Predicated region
    $region26: #{roberta_forward.1} parent=1 // pred_check
      _
    $region27: #{roberta_forward.1} parent=1 // pred_check_branch
      %47 = sbr.rel (0) target = $region29
    $region28: #{roberta_forward.1} parent=1 // pred_region
      _
    $region29: #{roberta_forward.1} parent=1 // pred_fallthru
      _
    // Predicated region
    $region30: #{roberta_forward.1} parent=1 // pred_check
      _
    $region31: #{roberta_forward.1} parent=1 // pred_check_branch
      %49 = sbr.rel (0) target = $region33
    $region32: #{roberta_forward.1} parent=1 // pred_region
      _
    $region33: #{roberta_forward.1} parent=1 // pred_fallthru
      _
    // Predicated region
    $region34: #{roberta_forward.1} parent=1 // pred_check
      _
    $region35: #{roberta_forward.1} parent=1 // pred_check_branch
      %51 = sbr.rel (0) target = $region37
    $region36: #{roberta_forward.1} parent=1 // pred_region
      _
    $region37: #{roberta_forward.1} parent=1 // pred_fallthru
      _
    // Predicated region
    $region38: #{roberta_forward.1} parent=1 // pred_check
      _
    $region39: #{roberta_forward.1} parent=1 // pred_check_branch
      %53 = sbr.rel (0) target = $region41
    $region40: #{roberta_forward.1} parent=1 // pred_region
      _
    $region41: #{roberta_forward.1} parent=1 // pred_fallthru
      _
    // Predicated region
    $region42: #{roberta_forward.1} parent=1 // pred_check
      _
    $region43: #{roberta_forward.1} parent=1 // pred_check_branch
      %55 = sbr.rel (0) target = $region45
    $region44: #{roberta_forward.1} parent=1 // pred_region
      _
    $region45: #{roberta_forward.1} parent=1 // pred_fallthru
      _
    // Predicated region
    $region46: #{roberta_forward.1} parent=1 // pred_check
      _
    $region47: #{roberta_forward.1} parent=1 // pred_check_branch
      %57 = sbr.rel (0) target = $region49
    $region48: #{roberta_forward.1} parent=1 // pred_region
      _
    $region49: #{roberta_forward.1} parent=1 // pred_fallthru
      _
    // Predicated region
    $region50: #{roberta_forward.1} parent=1 // pred_check
      _
    $region51: #{roberta_forward.1} parent=1 // pred_check_branch
      %59 = sbr.rel (0) target = $region53
    $region52: #{roberta_forward.1} parent=1 // pred_region
      _
    $region53: #{roberta_forward.1} parent=1 // pred_fallthru
      _
    // Predicated region
    $region54: #{roberta_forward.1} parent=1 // pred_check
      _
    $region55: #{roberta_forward.1} parent=1 // pred_check_branch
      %61 = sbr.rel (0) target = $region57
    $region56: #{roberta_forward.1} parent=1 // pred_region
      _
    $region57: #{roberta_forward.1} parent=1 // pred_fallthru
      _
    // Predicated region
    $region58: #{roberta_forward.1} parent=1 // pred_check
      _
    $region59: #{roberta_forward.1} parent=1 // pred_check_branch
      %63 = sbr.rel (0) target = $region61
    $region60: #{roberta_forward.1} parent=1 // pred_region
      _
    $region61: #{roberta_forward.1} parent=1 // pred_fallthru
      _
    // Predicated region
    $region62: #{roberta_forward.1} parent=1 // pred_check
      _
    $region63: #{roberta_forward.1} parent=1 // pred_check_branch
      %65 = sbr.rel (0) target = $region65
    $region64: #{roberta_forward.1} parent=1 // pred_region
      _
    $region65: #{roberta_forward.1} parent=1 // pred_fallthru
      _
    // Predicated region
    $region66: #{roberta_forward.1} parent=1 // pred_check
      _
    $region67: #{roberta_forward.1} parent=1 // pred_check_branch
      %67 = sbr.rel (0) target = $region69
    $region68: #{roberta_forward.1} parent=1 // pred_region
      _
    $region69: #{roberta_forward.1} parent=1 // pred_fallthru
      _
    // Predicated region
    $region70: #{roberta_forward.1} parent=1 // pred_check
      _
    $region71: #{roberta_forward.1} parent=1 // pred_check_branch
      %69 = sbr.rel (0) target = $region73
    $region72: #{roberta_forward.1} parent=1 // pred_region
      _
    $region73: #{roberta_forward.1} parent=1 // pred_fallthru
      _
    // Predicated region
    $region74: #{roberta_forward.1} parent=1 // pred_check
      _
    $region75: #{roberta_forward.1} parent=1 // pred_check_branch
      %71 = sbr.rel (0) target = $region77
    $region76: #{roberta_forward.1} parent=1 // pred_region
      _
    $region77: #{roberta_forward.1} parent=1 // pred_fallthru
      _
    // Predicated region
    $region78: #{roberta_forward.1} parent=1 // pred_check
      _
    $region79: #{roberta_forward.1} parent=1 // pred_check_branch
      %73 = sbr.rel (0) target = $region81
    $region80: #{roberta_forward.1} parent=1 // pred_region
      _
    $region81: #{roberta_forward.1} parent=1 // pred_fallthru
      _
    // Predicated region
    $region82: #{roberta_forward.1} parent=1 // pred_check
      _
    $region83: #{roberta_forward.1} parent=1 // pred_check_branch
      %75 = sbr.rel (0) target = $region85
    $region84: #{roberta_forward.1} parent=1 // pred_region
      _
    $region85: #{roberta_forward.1} parent=1 // pred_fallthru
      _
    // Predicated region
    $region86: #{roberta_forward.1} parent=1 // pred_check
      _
    $region87: #{roberta_forward.1} parent=1 // pred_check_branch
      %77 = sbr.rel (0) target = $region89
    $region88: #{roberta_forward.1} parent=1 // pred_region
      _
    $region89: #{roberta_forward.1} parent=1 // pred_fallthru
      _
    // Predicated region
    $region90: #{roberta_forward.1} parent=1 // pred_check
      _
    $region91: #{roberta_forward.1} parent=1 // pred_check_branch
      %79 = sbr.rel (0) target = $region93
    $region92: #{roberta_forward.1} parent=1 // pred_region
      _
    $region93: #{roberta_forward.1} parent=1 // pred_fallthru
      _
    // Predicated region
    $region94: #{roberta_forward.1} parent=1 // pred_check
      _
    $region95: #{roberta_forward.1} parent=1 // pred_check_branch
      %81 = sbr.rel (0) target = $region97
    $region96: #{roberta_forward.1} parent=1 // pred_region
      _
    $region97: #{roberta_forward.1} parent=1 // pred_fallthru
      _
    %v83 = vld [vmem:[%s0] sm:$0xff]
    %v84 = vld [vmem:[%s0 + $0x8] sm:$0xff]
    %v85 = vld [vmem:[%s1] sm:$0xff]
    %v86 = vld [vmem:[%s1 + $0x8] sm:$0xff]
    %v87 = vcvt.s32.f32 %v85
    %v88 = vcvt.s32.f32 %v86
    %v89 = vlaneseq
    %v90 = vand.u32 %v89, 127
    %91 = vset.pattern.permute.xlu0 0
    %92 = vperm.xlu0 %91, %v83
    %v93 = vpop.permute.xlu0 %92
    %94 = vset.pattern.permute.xlu0 0
    %95 = vperm.xlu0 %94, %v84
    %v96 = vpop.permute.xlu0 %95
    %vm97 = vcmp.eq.s32.totalorder %v90, %v93
    %vm98 = vcmp.eq.s32.totalorder %v90, %v96
    %v99 = vsel %vm97, 1, 0
    %v100 = vsel %vm98, 1, 0
    %v101 = vcvt.s32.f32 %v99
    %v102 = vcvt.s32.f32 %v100
    %v103 = vld [vmem:[%s3] sm:$0xff]
    %v104 = vld [vmem:[%s3 + $0x8] sm:$0xff]
    %v105 = vld [vmem:[%s3 + $0x10] sm:$0xff]
    %v106 = vld [vmem:[%s3 + $0x18] sm:$0xff]
    %v107 = vld [vmem:[%s3 + $0x20] sm:$0xff]
    %v108 = vld [vmem:[%s3 + $0x28] sm:$0xff]
    %v109 = vld [vmem:[%s3 + $0x30] sm:$0xff]
    %v110 = vld [vmem:[%s3 + $0x38] sm:$0xff]
    %v111 = vld [vmem:[%s3 + $0x40] sm:$0xff]
    %v112 = vld [vmem:[%s3 + $0x48] sm:$0xff]
    %v113 = vld [vmem:[%s3 + $0x50] sm:$0xff]
    %v114 = vld [vmem:[%s3 + $0x58] sm:$0xff]
    %v115 = vld [vmem:[%s3 + $0x60] sm:$0xff]
    %v116 = vld [vmem:[%s3 + $0x68] sm:$0xff]
    %v117 = vld [vmem:[%s3 + $0x70] sm:$0xff]
    %v118 = vld [vmem:[%s3 + $0x78] sm:$0xff]
    %vm119 = vcmp.ne.s32.totalorder %v83, 1
    %vm120 = vcmp.ne.s32.totalorder %v84, 1
    %v121 = vsel %vm119, 1, 0
    %v122 = vsel %vm120, 1, 0
    %v123 = vcvt.s32.f32 %v121
    %v124 = vcvt.s32.f32 %v122
    %v125 = vlaneseq
    %v126 = vshrl.u32 %v125, 7
    %v127 = vadd.s32 %v126, 8
    %v128 = vcvt.s32.f32 %v126
    %v129 = vcvt.s32.f32 %v127
    %v130 = vcvt.s32.f32 %v90
    %v131 = vadd.f32 %v128, 0.5
    %v132 = vadd.f32 %v129, 0.5
    %v133 = vmul.f32 %v131, 0.125
    %v134 = vmul.f32 %v132, 0.125
    %v135 = vfloor.f32 %v133
    %v136 = vfloor.f32 %v134
    %v137 = vadd.f32 %v130, 0.5
    %v138 = vmul.f32 %v137, 0.125
    %v139 = vfloor.f32 %v138
    %vm140 = vcmp.eq.f32.partialorder %v135, %v139
    %vm141 = vcmp.eq.f32.partialorder %v136, %v139
    %vm142 = vcmp.le.f32.partialorder %v130, %v128
    %vm143 = vcmp.le.f32.partialorder %v130, %v129
    %vm144 = vmand %vm142, %vm140
    %vm145 = vmand %vm143, %vm141
    %v146 = vsel %vm144, 1.0, 0.0
    %v147 = vsel %vm145, 1.0, 0.0
    %vm148 = vcmask 130048
    %v150 = vsel %vm148, %v146, 0
    %v153 = vsel %vm148, %v147, 0
    %155 = vmatprep.subr.mxu0 0.0
    %156 = vmatpush1.msra.mxu0 %v123
    %157 = vmatprep.subr.mxu0 0.0
    %158 = vmatpush1.msra.mxu0 %v124
    %159 = vmatprep.subr.mxu0 0.0
    %160 = vmatpush1.msra.mxu0 0.0
    %161 = vmatprep.subr.mxu0 0.0
    %162 = vmatpush1.msra.mxu0 0.0
    %163 = vmatprep.subr.mxu0 0.0
    %164 = vmatpush1.msra.mxu0 0.0
    %165 = vmatprep.subr.mxu0 0.0
    %166 = vmatpush1.msra.mxu0 0.0
    %167 = vmatprep.subr.mxu0 0.0
    %168 = vmatpush1.msra.mxu0 0.0
    %169 = vmatprep.subr.mxu0 0.0
    %170 = vmatpush1.msra.mxu0 0.0
    %171 = vmatprep.subr.mxu0 0.0
    %172 = vmatpush1.msra.mxu0 0.0
    %173 = vmatprep.subr.mxu0 0.0
    %174 = vmatpush1.msra.mxu0 0.0
    %175 = vmatprep.subr.mxu0 0.0
    %176 = vmatpush1.msra.mxu0 0.0
    %177 = vmatprep.subr.mxu0 0.0
    %178 = vmatpush1.msra.mxu0 0.0
    %179 = vmatprep.subr.mxu0 0.0
    %180 = vmatpush1.msra.mxu0 0.0
    %181 = vmatprep.subr.mxu0 0.0
    %182 = vmatpush1.msra.mxu0 0.0
    %183 = vmatprep.subr.mxu0 0.0
    %184 = vmatpush1.msra.mxu0 0.0
    %185 = vmatprep.subr.mxu0 0.0
    %186 = vmatpush1.msra.mxu0 0.0
    %187 = vmatprep.subr.mxu0 0.0
    %188 = vmatpush1.msra.mxu0 0.0
    %189 = vmatprep.subr.mxu0 0.0
    %190 = vmatpush1.msra.mxu0 0.0
    %191 = vmatprep.subr.mxu0 0.0
    %192 = vmatpush1.msra.mxu0 0.0
    %193 = vmatprep.subr.mxu0 0.0
    %194 = vmatpush1.msra.mxu0 0.0
    %195 = vmatprep.subr.mxu0 0.0
    %196 = vmatpush1.msra.mxu0 0.0
    %197 = vmatprep.subr.mxu0 0.0
    %198 = vmatpush1.msra.mxu0 0.0
    %199 = vmatprep.subr.mxu0 0.0
    %200 = vmatpush1.msra.mxu0 0.0
    %201 = vmatprep.subr.mxu0 0.0
    %202 = vmatpush1.msra.mxu0 0.0
    %203 = vmatprep.subr.mxu0 0.0
    %204 = vmatpush1.msra.mxu0 0.0
    %205 = vmatprep.subr.mxu0 0.0
    %206 = vmatpush1.msra.mxu0 0.0
    %207 = vmatprep.subr.mxu0 0.0
    %208 = vmatpush1.msra.mxu0 0.0
    %209 = vmatprep.subr.mxu0 0.0
    %210 = vmatpush1.msra.mxu0 0.0
    %211 = vmatprep.subr.mxu0 0.0
    %212 = vmatpush1.msra.mxu0 0.0
    %213 = vmatprep.subr.mxu0 0.0
    %214 = vmatpush1.msra.mxu0 0.0
    %215 = vmatprep.subr.mxu0 0.0
    %216 = vmatpush1.msra.mxu0 0.0
    %217 = vmatprep.subr.mxu0 0.0
    %218 = vmatpush1.msra.mxu0 0.0
    %219 = vmatprep.mubr.f32.mxu0 0.0
    %220 = vmatmul.mubr.f32.gmra.mrb[0].mxu0 %v150
    %v221 = vpop.f32.mrb[0].mxu0
    %v222 = vadd.f32 0.0, %v221
    %v223 = vpop.f32.mrb[0].mxu0
    %224 = vmatprep.mubr.f32.mxu0 0.0
    %225 = vmatmul.mubr.f32.gmra.mrb[0].mxu0 %v153
    %v226 = vpop.f32.mrb[0].mxu0
    %v227 = vadd.f32 0.0, %v226
    %v228 = vpop.f32.mrb[0].mxu0
    %229 = vdwg.mxu0
    %v230 = vmul.f32 %v222, %v123
    %v231 = vmul.f32 %v227, %v124
    %v232 = vadd.f32 %v230, 1.0
    %v233 = vadd.f32 %v231, 1.0
    %v234 = vcvt.f32.s32.to.zero.pseudo %v232
    %v235 = vcvt.f32.s32.to.zero.pseudo %v233
    %236 = vset.pattern.permute.xlu0 0
    %237 = vperm.xlu0 %236, %v234
    %v238 = vpop.permute.xlu0 %237
    %239 = vset.pattern.permute.xlu0 0
    %240 = vperm.xlu0 %239, %v235
    %v241 = vpop.permute.xlu0 %240
    %vm242 = vcmp.eq.s32.totalorder %v90, %v238
    %vm243 = vcmp.eq.s32.totalorder %v90, %v241
    %v244 = vsel %vm242, 1, 0
    %v245 = vsel %vm243, 1, 0
    %v246 = vcvt.s32.f32 %v244
    %v247 = vcvt.s32.f32 %v245
    %v248 = vld [vmem:[%s4] sm:$0xff]
    %v249 = vld [vmem:[%s4 + $0x8] sm:$0xff]
    %v250 = vld [vmem:[%s4 + $0x10] sm:$0xff]
    %v251 = vld [vmem:[%s4 + $0x18] sm:$0xff]
    %v252 = vld [vmem:[%s4 + $0x20] sm:$0xff]
    %v253 = vld [vmem:[%s4 + $0x28] sm:$0xff]
    %v254 = vld [vmem:[%s4 + $0x30] sm:$0xff]
    %v255 = vld [vmem:[%s4 + $0x38] sm:$0xff]
    %vm256 = vcmask 523264
    %v258 = vsel %vm256, %v246, 0
    %v261 = vsel %vm256, %v247, 0
    %263 = vmatprep.subr.mxu0 0.0
    %264 = vmatpush1.msra.mxu0 %v248
    %265 = vmatprep.subr.mxu0 0.0
    %266 = vmatpush1.msra.mxu0 %v249
    %267 = vmatprep.subr.mxu0 0.0
    %268 = vmatpush1.msra.mxu0 %v250
    %269 = vmatprep.subr.mxu0 0.0
    %270 = vmatpush1.msra.mxu0 %v251
    %271 = vmatprep.subr.mxu0 0.0
    %272 = vmatpush1.msra.mxu0 %v252
    %273 = vmatprep.subr.mxu0 0.0
    %274 = vmatpush1.msra.mxu0 %v253
    %275 = vmatprep.subr.mxu0 0.0
    %276 = vmatpush1.msra.mxu0 %v254
    %277 = vmatprep.subr.mxu0 0.0
    %278 = vmatpush1.msra.mxu0 %v255
    %279 = vmatprep.subr.mxu0 0.0
    %280 = vmatpush1.msra.mxu0 0.0
    %281 = vmatprep.subr.mxu0 0.0
    %282 = vmatpush1.msra.mxu0 0.0
    %283 = vmatprep.subr.mxu0 0.0
    %284 = vmatpush1.msra.mxu0 0.0
    %285 = vmatprep.subr.mxu0 0.0
    %286 = vmatpush1.msra.mxu0 0.0
    %287 = vmatprep.subr.mxu0 0.0
    %288 = vmatpush1.msra.mxu0 0.0
    %289 = vmatprep.subr.mxu0 0.0
    %290 = vmatpush1.msra.mxu0 0.0
    %291 = vmatprep.subr.mxu0 0.0
    %292 = vmatpush1.msra.mxu0 0.0
    %293 = vmatprep.subr.mxu0 0.0
    %294 = vmatpush1.msra.mxu0 0.0
    %295 = vmatprep.subr.mxu0 0.0
    %296 = vmatpush1.msra.mxu0 0.0
    %297 = vmatprep.subr.mxu0 0.0
    %298 = vmatpush1.msra.mxu0 0.0
    %299 = vmatprep.subr.mxu0 0.0
    %300 = vmatpush1.msra.mxu0 0.0
    %301 = vmatprep.subr.mxu0 0.0
    %302 = vmatpush1.msra.mxu0 0.0
    %303 = vmatprep.subr.mxu0 0.0
    %304 = vmatpush1.msra.mxu0 0.0
    %305 = vmatprep.subr.mxu0 0.0
    %306 = vmatpush1.msra.mxu0 0.0
    %307 = vmatprep.subr.mxu0 0.0
    %308 = vmatpush1.msra.mxu0 0.0
    %309 = vmatprep.subr.mxu0 0.0
    %310 = vmatpush1.msra.mxu0 0.0
    %311 = vmatprep.subr.mxu0 0.0
    %312 = vmatpush1.msra.mxu0 0.0
    %313 = vmatprep.subr.mxu0 0.0
    %314 = vmatpush1.msra.mxu0 0.0
    %315 = vmatprep.subr.mxu0 0.0
    %316 = vmatpush1.msra.mxu0 0.0
    %317 = vmatprep.subr.mxu0 0.0
    %318 = vmatpush1.msra.mxu0 0.0
    %319 = vmatprep.subr.mxu0 0.0
    %320 = vmatpush1.msra.mxu0 0.0
    %321 = vmatprep.subr.mxu0 0.0
    %322 = vmatpush1.msra.mxu0 0.0
    %323 = vmatprep.subr.mxu0 0.0
    %324 = vmatpush1.msra.mxu0 0.0
    %325 = vmatprep.subr.mxu0 0.0
    %326 = vmatpush1.msra.mxu0 0.0
    %327 = vmatprep.mubr.f32.mxu0 0.0
    %328 = vmatmul.mubr.f32.gmra.mrb[0].mxu0 %v258
    %v329 = vpop.f32.mrb[0].mxu0
    %v330 = vadd.f32 0.0, %v329
    %v331 = vpop.f32.mrb[0].mxu0
    %332 = vmatprep.mubr.f32.mxu0 0.0
    %333 = vmatmul.mubr.f32.gmra.mrb[0].mxu0 %v261
    %v334 = vpop.f32.mrb[0].mxu0
    %v335 = vadd.f32 0.0, %v334
    %v336 = vpop.f32.mrb[0].mxu0
    %337 = vdwg.mxu0
    %338 = vmatprep.subr.mxu0 0.0
    %339 = vmatpush1.msra.mxu0 %v103
    %340 = vmatprep.subr.mxu0 0.0
    %341 = vmatpush1.msra.mxu0 %v104
    %342 = vmatprep.subr.mxu0 0.0
    %343 = vmatpush1.msra.mxu0 %v105
    %344 = vmatprep.subr.mxu0 0.0
    %345 = vmatpush1.msra.mxu0 %v106
    %346 = vmatprep.subr.mxu0 0.0
    %347 = vmatpush1.msra.mxu0 %v107
    %348 = vmatprep.subr.mxu0 0.0
    %349 = vmatpush1.msra.mxu0 %v108
    %350 = vmatprep.subr.mxu0 0.0
    %351 = vmatpush1.msra.mxu0 %v109
    %352 = vmatprep.subr.mxu0 0.0
    %353 = vmatpush1.msra.mxu0 %v110
    %354 = vmatprep.subr.mxu0 0.0
    %355 = vmatpush1.msra.mxu0 %v111
    %356 = vmatprep.subr.mxu0 0.0
    %357 = vmatpush1.msra.mxu0 %v112
    %358 = vmatprep.subr.mxu0 0.0
    %359 = vmatpush1.msra.mxu0 %v113
    %360 = vmatprep.subr.mxu0 0.0
    %361 = vmatpush1.msra.mxu0 %v114
    %362 = vmatprep.subr.mxu0 0.0
    %363 = vmatpush1.msra.mxu0 %v115
    %364 = vmatprep.subr.mxu0 0.0
    %365 = vmatpush1.msra.mxu0 %v116
    %366 = vmatprep.subr.mxu0 0.0
    %367 = vmatpush1.msra.mxu0 %v117
    %368 = vmatprep.subr.mxu0 0.0
    %369 = vmatpush1.msra.mxu0 %v118
    %370 = vmatprep.subr.mxu0 0.0
    %371 = vmatpush1.msra.mxu0 0.0
    %372 = vmatprep.subr.mxu0 0.0
    %373 = vmatpush1.msra.mxu0 0.0
    %374 = vmatprep.subr.mxu0 0.0
    %375 = vmatpush1.msra.mxu0 0.0
    %376 = vmatprep.subr.mxu0 0.0
    %377 = vmatpush1.msra.mxu0 0.0
    %378 = vmatprep.subr.mxu0 0.0
    %379 = vmatpush1.msra.mxu0 0.0
    %380 = vmatprep.subr.mxu0 0.0
    %381 = vmatpush1.msra.mxu0 0.0
    %382 = vmatprep.subr.mxu0 0.0
    %383 = vmatpush1.msra.mxu0 0.0
    %384 = vmatprep.subr.mxu0 0.0
    %385 = vmatpush1.msra.mxu0 0.0
    %386 = vmatprep.subr.mxu0 0.0
    %387 = vmatpush1.msra.mxu0 0.0
    %388 = vmatprep.subr.mxu0 0.0
    %389 = vmatpush1.msra.mxu0 0.0
    %390 = vmatprep.subr.mxu0 0.0
    %391 = vmatpush1.msra.mxu0 0.0
    %392 = vmatprep.subr.mxu0 0.0
    %393 = vmatpush1.msra.mxu0 0.0
    %394 = vmatprep.subr.mxu0 0.0
    %395 = vmatpush1.msra.mxu0 0.0
    %396 = vmatprep.subr.mxu0 0.0
    %397 = vmatpush1.msra.mxu0 0.0
    %398 = vmatprep.subr.mxu0 0.0
    %399 = vmatpush1.msra.mxu0 0.0
    %400 = vmatprep.subr.mxu0 0.0
    %401 = vmatpush1.msra.mxu0 0.0
    %402 = vmatprep.mubr.f32.mxu0 0.0
    %403 = vmatmul.mubr.f32.gmra.mrb[0].mxu0 %v101
    %v404 = vpop.f32.mrb[0].mxu0
    %v405 = vadd.f32 %v330, %v404
    %v406 = vpop.f32.mrb[0].mxu0
    %407 = vmatprep.mubr.f32.mxu0 0.0
    %408 = vmatmul.mubr.f32.gmra.mrb[0].mxu0 %v102
    %v409 = vpop.f32.mrb[0].mxu0
    %v410 = vadd.f32 %v335, %v409
    %v411 = vpop.f32.mrb[0].mxu0
    %412 = vdwg.mxu0
    %v413 = vld [vmem:[%s5] sm:$0x1]
    %v415 = vlaneseq
    %v416 = vshrl.u32 %v415, 7
    %v417 = vsub.s32 0, %v416
    %v418 = vrot.slane %v413, %v417
    %v420 = vadd.f32 %v405, %v418
    %v421 = vadd.f32 %v410, %v418
    %v422 = vld [vmem:[%s6] sm:$0x1]
    %v423 = vld [vmem:[%s7] sm:$0x1]
    %vm424 = vcmask 261120
    %v425 = vsel %vm424, %v420, 0.0
    %426 = vadd.xlane.f32.xlu0 %v425
    %v427 = vpop.xlane.xlu0 %426
    %v428 = vsel %vm424, %v421, 0.0
    %429 = vadd.xlane.f32.xlu0 %v428
    %v430 = vpop.xlane.xlu0 %429
    %v431 = vrcp.pop 32.0
    %v432 = vmul.f32 %v427, %v431
    %v433 = vmul.f32 %v430, %v431
    %v434 = vsub.f32 %v420, %v432
    %v435 = vsub.f32 %v421, %v433
    %v436 = vmul.f32 %v434, %v434
    %v437 = vmul.f32 %v435, %v435
    %v438 = vsel %vm424, %v436, 0.0
    %439 = vadd.xlane.f32.xlu0 %v438
    %v440 = vpop.xlane.xlu0 %439
    %v441 = vsel %vm424, %v437, 0.0
    %442 = vadd.xlane.f32.xlu0 %v441
    %v443 = vpop.xlane.xlu0 %442
    %v444 = vmul.f32 %v440, %v431
    %v445 = vmul.f32 %v443, %v431
    %v446 = vadd.f32 %v444, 1e-05
    %v447 = vadd.f32 %v445, 1e-05
    %v448 = vrsqrt.pop %v446
    %v449 = vrsqrt.pop %v447
    %v450 = vmul.f32 %v434, %v448
    %v451 = vmul.f32 %v435, %v449
    %v453 = vlaneseq
    %v454 = vshrl.u32 %v453, 7
    %v455 = vsub.s32 0, %v454
    %v456 = vrot.slane %v422, %v455
    %v458 = vmul.f32 %v450, %v456
    %v459 = vmul.f32 %v451, %v456
    %v461 = vlaneseq
    %v462 = vshrl.u32 %v461, 7
    %v463 = vsub.s32 0, %v462
    %v464 = vrot.slane %v423, %v463
    %v466 = vadd.f32 %v458, %v464
    %v467 = vadd.f32 %v459, %v464
    %v468 = vadd.s32 %v126, 16
    %v469 = vadd.s32 %v126, 24
    %v470 = vcvt.s32.f32 %v468
    %v471 = vcvt.s32.f32 %v469
    %v472 = vadd.f32 %v470, 0.5
    %v473 = vadd.f32 %v471, 0.5
    %v474 = vmul.f32 %v472, 0.125
    %v475 = vmul.f32 %v473, 0.125
    %v476 = vfloor.f32 %v474
    %v477 = vfloor.f32 %v475
    %vm478 = vcmp.eq.f32.partialorder %v476, %v139
    %vm479 = vcmp.eq.f32.partialorder %v477, %v139
    %v480 = vsel %vm140, 0.0, -1e+09
    %v481 = vsel %vm141, 0.0, -1e+09
    %v482 = vsel %vm478, 0.0, -1e+09
    %v483 = vsel %vm479, 0.0, -1e+09
    %v484 = vsub.f32 1.0, %v87
    %v485 = vsub.f32 1.0, %v88
    %v486 = vmul.f32 %v484, -1e+09
    %v487 = vmul.f32 %v485, -1e+09
    %v488 = vmul.f32 %v137, 0.0625
    %v489 = vfloor.f32 %v488
    %v490 = vmul.f32 %v139, 8.0
    %v491 = vsub.f32 %v130, %v490
    %v492 = vmul.f32 %v489, 8.0
    %v493 = vadd.f32 %v492, %v491
    %vm494 = vcmp.eq.f32.partialorder %v128, %v493
    %vm495 = vcmp.eq.f32.partialorder %v129, %v493
    %497 = vset.pattern.permute.xlu0 0
    %498 = vperm.xlu0 %497, %v486
    %v499 = vpop.permute.xlu0 %498
    %502 = vset.pattern.permute.xlu0 0
    %503 = vperm.xlu0 %502, %v487
    %v504 = vpop.permute.xlu0 %503
    %v506 = vsel %vm494, %v499, 0.0
    %v507 = vsel %vm495, %v504, 0.0
    %v508 = vsel %vm424, %v506, 0.0
    %v509 = vsel %vm424, %v507, 0.0
    %v510 = vadd.f32 %v508, %v509
    %v511 = vrot.slane %v510, 4
    %v512 = vadd.f32 %v510, %v511
    %v513 = vrot.slane %v512, 2
    %v514 = vadd.f32 %v512, %v513
    %v515 = vrot.slane %v514, 1
    %v516 = vadd.f32 %v514, %v515
    %v517 = vadd.f32 %v480, %v516
    %v518 = vadd.f32 %v481, %v516
    %v519 = vadd.f32 %v482, %v516
    %v520 = vadd.f32 %v483, %v516
    %v521 = vpack.c.bf16 %v467, %v466
    %v522 = vld [vmem:[%s8] sm:$0xf]
    %v523 = vld [vmem:[%s8 + $0x4] sm:$0xf]
    %v524 = vld [vmem:[%s8 + $0x8] sm:$0xf]
    %v525 = vld [vmem:[%s8 + $0xc] sm:$0xf]
    %v526 = vld [vmem:[%s9] sm:$0x1]
    %v528 = vlaneseq
    %v529 = vshrl.u32 %v528, 7
    %v530 = vsub.s32 0, %v529
    %v531 = vrot.slane %v526, %v530
    %v537 = vunpack.c.l.b16 %v522
    %v538 = vunpack.c.l.b16 %v523
    %v539 = vunpack.c.l.b16 %v524
    %v540 = vunpack.c.l.b16 %v525
    %v541 = vpack.c.b16 %v538, %v537
    %v542 = vpack.c.b16 %v540, %v539
    %v546 = vsel %vm424, %v521, 0
    %548 = vmatprep.subr.bf16.mxu0 0
    %549 = vmatpush1.bf16.msra.mxu0 %v541
    %550 = vmatprep.subr.bf16.mxu0 0
    %551 = vmatpush1.bf16.msra.mxu0 %v542
    %552 = vmatprep.subr.bf16.mxu0 0
    %553 = vmatpush1.bf16.msra.mxu0 0
    %554 = vmatprep.subr.bf16.mxu0 0
    %555 = vmatpush1.bf16.msra.mxu0 0
    %556 = vmatprep.subr.bf16.mxu0 0
    %557 = vmatpush1.bf16.msra.mxu0 0
    %558 = vmatprep.subr.bf16.mxu0 0
    %559 = vmatpush1.bf16.msra.mxu0 0
    %560 = vmatprep.subr.bf16.mxu0 0
    %561 = vmatpush1.bf16.msra.mxu0 0
    %562 = vmatprep.subr.bf16.mxu0 0
    %563 = vmatpush1.bf16.msra.mxu0 0
    %564 = vmatprep.subr.bf16.mxu0 0
    %565 = vmatpush1.bf16.msra.mxu0 0
    %566 = vmatprep.subr.bf16.mxu0 0
    %567 = vmatpush1.bf16.msra.mxu0 0
    %568 = vmatprep.subr.bf16.mxu0 0
    %569 = vmatpush1.bf16.msra.mxu0 0
    %570 = vmatprep.subr.bf16.mxu0 0
    %571 = vmatpush1.bf16.msra.mxu0 0
    %572 = vmatprep.subr.bf16.mxu0 0
    %573 = vmatpush1.bf16.msra.mxu0 0
    %574 = vmatprep.subr.bf16.mxu0 0
    %575 = vmatpush1.bf16.msra.mxu0 0
    %576 = vmatprep.subr.bf16.mxu0 0
    %577 = vmatpush1.bf16.msra.mxu0 0
    %578 = vmatprep.subr.bf16.mxu0 0
    %579 = vmatpush1.bf16.msra.mxu0 0
    %580 = vmatprep.mubr.bf16.mxu0 0
    %581 = vmatmul.mubr.bf16.gmra.mrb[0].mxu0 %v546
    %v582 = vpop.f32.mrb[0].mxu0
    %v583 = vadd.f32 %v531, %v582
    %v584 = vpop.f32.mrb[0].mxu0
    %v585 = vpop.f32.mrb[0].mxu0
    %v586 = vadd.f32 %v531, %v585
    %v587 = vpop.f32.mrb[0].mxu0
    %588 = vdwg.mxu0
    %590 = vrot.lane.b32.xlu0 %v583, 112
    %v591 = vpop.permute.xlu0 %590
    %594 = vrot.lane.b32.xlu0 %v586, 112
    %v595 = vpop.permute.xlu0 %594
    %v597 = vpack.c.bf16 %v591, %v583
    %v598 = vpack.c.bf16 %v595, %v586
    %601 = vrot.lane.b32.xlu0 %v597, 96
    %v602 = vpop.permute.xlu0 %601
    %603 = vrot.lane.b32.xlu0 %v598, 96
    %v604 = vpop.permute.xlu0 %603
    %v606 = vsel %vm148, %v597, 0
    %v609 = vsel %vm148, %v598, 0
    %v612 = vsel %vm148, %v602, 0
    %v615 = vsel %vm148, %v604, 0
    %617 = vmatprep.subr.bf16.mxu0 0
    %618 = vmatpush1.bf16.xpose.msra.mxu0 %v612
    %619 = vmatprep.subr.bf16.mxu0 0
    %620 = vmatpush1.bf16.xpose.msra.mxu0 %v615
    %621 = vmatprep.subr.bf16.mxu0 0
    %622 = vmatpush1.bf16.xpose.msra.mxu0 0
    %623 = vmatprep.subr.bf16.mxu0 0
    %624 = vmatpush1.bf16.xpose.msra.mxu0 0
    %625 = vmatprep.subr.bf16.mxu0 0
    %626 = vmatpush1.bf16.xpose.msra.mxu0 0
    %627 = vmatprep.subr.bf16.mxu0 0
    %628 = vmatpush1.bf16.xpose.msra.mxu0 0
    %629 = vmatprep.subr.bf16.mxu0 0
    %630 = vmatpush1.bf16.xpose.msra.mxu0 0
    %631 = vmatprep.subr.bf16.mxu0 0
    %632 = vmatpush1.bf16.xpose.msra.mxu0 0
    %633 = vmatprep.subr.bf16.mxu0 0
    %634 = vmatpush1.bf16.xpose.msra.mxu0 0
    %635 = vmatprep.subr.bf16.mxu0 0
    %636 = vmatpush1.bf16.xpose.msra.mxu0 0
    %637 = vmatprep.subr.bf16.mxu0 0
    %638 = vmatpush1.bf16.xpose.msra.mxu0 0
    %639 = vmatprep.subr.bf16.mxu0 0
    %640 = vmatpush1.bf16.xpose.msra.mxu0 0
    %641 = vmatprep.subr.bf16.mxu0 0
    %642 = vmatpush1.bf16.xpose.msra.mxu0 0
    %643 = vmatprep.subr.bf16.mxu0 0
    %644 = vmatpush1.bf16.xpose.msra.mxu0 0
    %645 = vmatprep.subr.bf16.mxu0 0
    %646 = vmatpush1.bf16.xpose.msra.mxu0 0
    %647 = vmatprep.subr.bf16.mxu0 0
    %648 = vmatpush1.bf16.xpose.msra.mxu0 0
    %649 = vmatprep.mubr.bf16.mxu0 0
    %650 = vmatmul.mubr.bf16.gmra.mrb[0].mxu0 %v606
    %v651 = vpop.f32.mrb[0].mxu0
    %v652 = vadd.f32 0.0, %v651
    %v653 = vpop.f32.mrb[0].mxu0
    %v654 = vpop.f32.mrb[0].mxu0
    %v655 = vadd.f32 0.0, %v654
    %v656 = vpop.f32.mrb[0].mxu0
    %657 = vmatprep.mubr.bf16.mxu0 0
    %658 = vmatmul.mubr.bf16.gmra.mrb[0].mxu0 %v609
    %v659 = vpop.f32.mrb[0].mxu0
    %v660 = vadd.f32 0.0, %v659
    %v661 = vpop.f32.mrb[0].mxu0
    %v662 = vpop.f32.mrb[0].mxu0
    %v663 = vadd.f32 0.0, %v662
    %v664 = vpop.f32.mrb[0].mxu0
    %665 = vdwg.mxu0
    %v666 = vmul.f32 %v652, 0.25
    %v667 = vmul.f32 %v655, 0.25
    %v668 = vmul.f32 %v660, 0.25
    %v669 = vmul.f32 %v663, 0.25
    %v670 = vadd.f32 %v666, %v517
    %v671 = vadd.f32 %v667, %v518
    %v672 = vadd.f32 %v668, %v519
    %v673 = vadd.f32 %v669, %v520
    %v674 = vsel %vm424, %v670, -inf
    %675 = vmax.xlane.f32.xlu0 %v674
    %v676 = vpop.xlane.xlu0 %675
    %v677 = vsel %vm424, %v671, -inf
    %678 = vmax.xlane.f32.xlu0 %v677
    %v679 = vpop.xlane.xlu0 %678
    %v680 = vsel %vm424, %v672, -inf
    %681 = vmax.xlane.f32.xlu0 %v680
    %v682 = vpop.xlane.xlu0 %681
    %v683 = vsel %vm424, %v673, -inf
    %684 = vmax.xlane.f32.xlu0 %v683
    %v685 = vpop.xlane.xlu0 %684
    %v686 = vsub.f32 %v670, %v676
    %v687 = vsub.f32 %v671, %v679
    %v688 = vsub.f32 %v672, %v682
    %v689 = vsub.f32 %v673, %v685
    %v690 = vmul.f32 %v686, 1.442695
    %v691 = vpow.pop %v690
    %v692 = vmul.f32 %v687, 1.442695
    %v693 = vpow.pop %v692
    %v694 = vmul.f32 %v688, 1.442695
    %v695 = vpow.pop %v694
    %v696 = vmul.f32 %v689, 1.442695
    %v697 = vpow.pop %v696
    %v698 = vsel %vm424, %v691, 0.0
    %699 = vadd.xlane.f32.xlu0 %v698
    %v700 = vpop.xlane.xlu0 %699
    %v701 = vsel %vm424, %v693, 0.0
    %702 = vadd.xlane.f32.xlu0 %v701
    %v703 = vpop.xlane.xlu0 %702
    %v704 = vsel %vm424, %v695, 0.0
    %705 = vadd.xlane.f32.xlu0 %v704
    %v706 = vpop.xlane.xlu0 %705
    %v707 = vsel %vm424, %v697, 0.0
    %708 = vadd.xlane.f32.xlu0 %v707
    %v709 = vpop.xlane.xlu0 %708
    %v710 = vrcp.pop %v700
    %v711 = vrcp.pop %v703
    %v712 = vrcp.pop %v706
    %v713 = vrcp.pop %v709
    %v714 = vmul.f32 %v691, %v710
    %v715 = vmul.f32 %v693, %v711
    %v716 = vmul.f32 %v695, %v712
    %v717 = vmul.f32 %v697, %v713
    %v718 = vpack.c.bf16 %v715, %v714
    %v719 = vpack.c.bf16 %v717, %v716
    %720 = vrot.lane.b32.xlu0 %v597, 64
    %v721 = vpop.permute.xlu0 %720
    %722 = vrot.lane.b32.xlu0 %v598, 64
    %v723 = vpop.permute.xlu0 %722
    %v727 = vsel %vm424, %v718, 0
    %v730 = vsel %vm424, %v719, 0
    %732 = vmatprep.subr.bf16.mxu0 0
    %733 = vmatpush1.bf16.msra.mxu0 %v721
    %734 = vmatprep.subr.bf16.mxu0 0
    %735 = vmatpush1.bf16.msra.mxu0 %v723
    %736 = vmatprep.subr.bf16.mxu0 0
    %737 = vmatpush1.bf16.msra.mxu0 0
    %738 = vmatprep.subr.bf16.mxu0 0
    %739 = vmatpush1.bf16.msra.mxu0 0
    %740 = vmatprep.subr.bf16.mxu0 0
    %741 = vmatpush1.bf16.msra.mxu0 0
    %742 = vmatprep.subr.bf16.mxu0 0
    %743 = vmatpush1.bf16.msra.mxu0 0
    %744 = vmatprep.subr.bf16.mxu0 0
    %745 = vmatpush1.bf16.msra.mxu0 0
    %746 = vmatprep.subr.bf16.mxu0 0
    %747 = vmatpush1.bf16.msra.mxu0 0
    %748 = vmatprep.subr.bf16.mxu0 0
    %749 = vmatpush1.bf16.msra.mxu0 0
    %750 = vmatprep.subr.bf16.mxu0 0
    %751 = vmatpush1.bf16.msra.mxu0 0
    %752 = vmatprep.subr.bf16.mxu0 0
    %753 = vmatpush1.bf16.msra.mxu0 0
    %754 = vmatprep.subr.bf16.mxu0 0
    %755 = vmatpush1.bf16.msra.mxu0 0
    %756 = vmatprep.subr.bf16.mxu0 0
    %757 = vmatpush1.bf16.msra.mxu0 0
    %758 = vmatprep.subr.bf16.mxu0 0
    %759 = vmatpush1.bf16.msra.mxu0 0
    %760 = vmatprep.subr.bf16.mxu0 0
    %761 = vmatpush1.bf16.msra.mxu0 0
    %762 = vmatprep.subr.bf16.mxu0 0
    %763 = vmatpush1.bf16.msra.mxu0 0
    %764 = vmatprep.mubr.bf16.mxu0 0
    %765 = vmatmul.mubr.bf16.gmra.mrb[0].mxu0 %v727
    %v766 = vpop.f32.mrb[0].mxu0
    %v767 = vadd.f32 0.0, %v766
    %v768 = vpop.f32.mrb[0].mxu0
    %v769 = vpop.f32.mrb[0].mxu0
    %v770 = vadd.f32 0.0, %v769
    %v771 = vpop.f32.mrb[0].mxu0
    %772 = vmatprep.mubr.bf16.mxu0 0
    %773 = vmatmul.mubr.bf16.gmra.mrb[0].mxu0 %v730
    %v774 = vpop.f32.mrb[0].mxu0
    %v775 = vadd.f32 0.0, %v774
    %v776 = vpop.f32.mrb[0].mxu0
    %v777 = vpop.f32.mrb[0].mxu0
    %v778 = vadd.f32 0.0, %v777
    %v779 = vpop.f32.mrb[0].mxu0
    %780 = vdwg.mxu0
    %v781 = vld [vmem:[%s10] sm:$0xf]
    %v782 = vld [vmem:[%s10 + $0x4] sm:$0xf]
    %v783 = vld [vmem:[%s10 + $0x8] sm:$0xf]
    %v784 = vld [vmem:[%s10 + $0xc] sm:$0xf]
    %v785 = vld [vmem:[%s11] sm:$0x1]
    %v786 = vpack.c.bf16 %v775, %v767
    %v789 = vunpack.c.l.b16 %v781
    %v790 = vunpack.c.l.b16 %v782
    %v791 = vpack.c.b16 %v790, %v789
    %v794 = vsel %vm148, %v786, 0
    %796 = vmatprep.subr.bf16.mxu0 0
    %797 = vmatpush1.bf16.msra.mxu0 %v791
    %798 = vmatprep.subr.bf16.mxu0 0
    %799 = vmatpush1.bf16.msra.mxu0 0
    %800 = vmatprep.subr.bf16.mxu0 0
    %801 = vmatpush1.bf16.msra.mxu0 0
    %802 = vmatprep.subr.bf16.mxu0 0
    %803 = vmatpush1.bf16.msra.mxu0 0
    %804 = vmatprep.subr.bf16.mxu0 0
    %805 = vmatpush1.bf16.msra.mxu0 0
    %806 = vmatprep.subr.bf16.mxu0 0
    %807 = vmatpush1.bf16.msra.mxu0 0
    %808 = vmatprep.subr.bf16.mxu0 0
    %809 = vmatpush1.bf16.msra.mxu0 0
    %810 = vmatprep.subr.bf16.mxu0 0
    %811 = vmatpush1.bf16.msra.mxu0 0
    %812 = vmatprep.subr.bf16.mxu0 0
    %813 = vmatpush1.bf16.msra.mxu0 0
    %814 = vmatprep.subr.bf16.mxu0 0
    %815 = vmatpush1.bf16.msra.mxu0 0
    %816 = vmatprep.subr.bf16.mxu0 0
    %817 = vmatpush1.bf16.msra.mxu0 0
    %818 = vmatprep.subr.bf16.mxu0 0
    %819 = vmatpush1.bf16.msra.mxu0 0
    %820 = vmatprep.subr.bf16.mxu0 0
    %821 = vmatpush1.bf16.msra.mxu0 0
    %822 = vmatprep.subr.bf16.mxu0 0
    %823 = vmatpush1.bf16.msra.mxu0 0
    %824 = vmatprep.subr.bf16.mxu0 0
    %825 = vmatpush1.bf16.msra.mxu0 0
    %826 = vmatprep.subr.bf16.mxu0 0
    %827 = vmatpush1.bf16.msra.mxu0 0
    %828 = vmatprep.mubr.bf16.mxu0 0
    %829 = vmatmul.mubr.bf16.gmra.mrb[0].mxu0 %v794
    %v830 = vpop.f32.mrb[0].mxu0
    %v831 = vadd.f32 0.0, %v830
    %v832 = vpop.f32.mrb[0].mxu0
    %v833 = vpop.f32.mrb[0].mxu0
    %v834 = vadd.f32 0.0, %v833
    %v835 = vpop.f32.mrb[0].mxu0
    %836 = vdwg.mxu0
    %v838 = vlaneseq
    %v839 = vshrl.u32 %v838, 7
    %v840 = vsub.s32 0, %v839
    %v841 = vrot.slane %v785, %v840
    %v843 = vadd.f32 %v841, %v831
    %v844 = vadd.f32 %v841, %v834
    %v845 = vpack.c.bf16 %v778, %v770
    %v848 = vunpack.c.l.b16 %v783
    %v849 = vunpack.c.l.b16 %v784
    %v850 = vpack.c.b16 %v849, %v848
    %v853 = vsel %vm148, %v845, 0
    %855 = vmatprep.subr.bf16.mxu0 0
    %856 = vmatpush1.bf16.msra.mxu0 %v850
    %857 = vmatprep.subr.bf16.mxu0 0
    %858 = vmatpush1.bf16.msra.mxu0 0
    %859 = vmatprep.subr.bf16.mxu0 0
    %860 = vmatpush1.bf16.msra.mxu0 0
    %861 = vmatprep.subr.bf16.mxu0 0
    %862 = vmatpush1.bf16.msra.mxu0 0
    %863 = vmatprep.subr.bf16.mxu0 0
    %864 = vmatpush1.bf16.msra.mxu0 0
    %865 = vmatprep.subr.bf16.mxu0 0
    %866 = vmatpush1.bf16.msra.mxu0 0
    %867 = vmatprep.subr.bf16.mxu0 0
    %868 = vmatpush1.bf16.msra.mxu0 0
    %869 = vmatprep.subr.bf16.mxu0 0
    %870 = vmatpush1.bf16.msra.mxu0 0
    %871 = vmatprep.subr.bf16.mxu0 0
    %872 = vmatpush1.bf16.msra.mxu0 0
    %873 = vmatprep.subr.bf16.mxu0 0
    %874 = vmatpush1.bf16.msra.mxu0 0
    %875 = vmatprep.subr.bf16.mxu0 0
    %876 = vmatpush1.bf16.msra.mxu0 0
    %877 = vmatprep.subr.bf16.mxu0 0
    %878 = vmatpush1.bf16.msra.mxu0 0
    %879 = vmatprep.subr.bf16.mxu0 0
    %880 = vmatpush1.bf16.msra.mxu0 0
    %881 = vmatprep.subr.bf16.mxu0 0
    %882 = vmatpush1.bf16.msra.mxu0 0
    %883 = vmatprep.subr.bf16.mxu0 0
    %884 = vmatpush1.bf16.msra.mxu0 0
    %885 = vmatprep.subr.bf16.mxu0 0
    %886 = vmatpush1.bf16.msra.mxu0 0
    %887 = vmatprep.mubr.bf16.mxu0 0
    %888 = vmatmul.mubr.bf16.gmra.mrb[0].mxu0 %v853
    %v889 = vpop.f32.mrb[0].mxu0
    %v890 = vadd.f32 0.0, %v889
    %v891 = vpop.f32.mrb[0].mxu0
    %v892 = vpop.f32.mrb[0].mxu0
    %v893 = vadd.f32 0.0, %v892
    %v894 = vpop.f32.mrb[0].mxu0
    %895 = vdwg.mxu0
    %v896 = vadd.f32 %v843, %v890
    %v897 = vadd.f32 %v844, %v893
    %v898 = vadd.f32 %v466, %v896
    %v899 = vadd.f32 %v467, %v897
    %v900 = vld [vmem:[%s12] sm:$0x1]
    %v901 = vld [vmem:[%s13] sm:$0x1]
    %v902 = vsel %vm424, %v898, 0.0
    %903 = vadd.xlane.f32.xlu0 %v902
    %v904 = vpop.xlane.xlu0 %903
    %v905 = vsel %vm424, %v899, 0.0
    %906 = vadd.xlane.f32.xlu0 %v905
    %v907 = vpop.xlane.xlu0 %906
    %v908 = vmul.f32 %v904, %v431
    %v909 = vmul.f32 %v907, %v431
    %v910 = vsub.f32 %v898, %v908
    %v911 = vsub.f32 %v899, %v909
    %v912 = vmul.f32 %v910, %v910
    %v913 = vmul.f32 %v911, %v911
    %v914 = vsel %vm424, %v912, 0.0
    %915 = vadd.xlane.f32.xlu0 %v914
    %v916 = vpop.xlane.xlu0 %915
    %v917 = vsel %vm424, %v913, 0.0
    %918 = vadd.xlane.f32.xlu0 %v917
    %v919 = vpop.xlane.xlu0 %918
    %v920 = vmul.f32 %v916, %v431
    %v921 = vmul.f32 %v919, %v431
    %v922 = vadd.f32 %v920, 1e-05
    %v923 = vadd.f32 %v921, 1e-05
    %v924 = vrsqrt.pop %v922
    %v925 = vrsqrt.pop %v923
    %v926 = vmul.f32 %v910, %v924
    %v927 = vmul.f32 %v911, %v925
    %v929 = vlaneseq
    %v930 = vshrl.u32 %v929, 7
    %v931 = vsub.s32 0, %v930
    %v932 = vrot.slane %v900, %v931
    %v934 = vmul.f32 %v926, %v932
    %v935 = vmul.f32 %v927, %v932
    %v937 = vlaneseq
    %v938 = vshrl.u32 %v937, 7
    %v939 = vsub.s32 0, %v938
    %v940 = vrot.slane %v901, %v939
    %v942 = vadd.f32 %v934, %v940
    %v943 = vadd.f32 %v935, %v940
    %v944 = vpack.c.bf16 %v943, %v942
    %v945 = vld [vmem:[%s14] sm:$0xf]
    %v946 = vld [vmem:[%s14 + $0x4] sm:$0xf]
    %v947 = vld [vmem:[%s14 + $0x8] sm:$0xf]
    %v948 = vld [vmem:[%s14 + $0xc] sm:$0xf]
    %v949 = vld [vmem:[%s15] sm:$0x1]
    %v951 = vlaneseq
    %v952 = vshrl.u32 %v951, 7
    %v953 = vsub.s32 0, %v952
    %v954 = vrot.slane %v949, %v953
    %v960 = vunpack.c.l.b16 %v945
    %v961 = vunpack.c.l.b16 %v946
    %v962 = vunpack.c.l.b16 %v947
    %v963 = vunpack.c.l.b16 %v948
    %v964 = vpack.c.b16 %v961, %v960
    %v965 = vpack.c.b16 %v963, %v962
    %v969 = vsel %vm424, %v944, 0
    %971 = vmatprep.subr.bf16.mxu0 0
    %972 = vmatpush1.bf16.msra.mxu0 %v964
    %973 = vmatprep.subr.bf16.mxu0 0
    %974 = vmatpush1.bf16.msra.mxu0 %v965
    %975 = vmatprep.subr.bf16.mxu0 0
    %976 = vmatpush1.bf16.msra.mxu0 0
    %977 = vmatprep.subr.bf16.mxu0 0
    %978 = vmatpush1.bf16.msra.mxu0 0
    %979 = vmatprep.subr.bf16.mxu0 0
    %980 = vmatpush1.bf16.msra.mxu0 0
    %981 = vmatprep.subr.bf16.mxu0 0
    %982 = vmatpush1.bf16.msra.mxu0 0
    %983 = vmatprep.subr.bf16.mxu0 0
    %984 = vmatpush1.bf16.msra.mxu0 0
    %985 = vmatprep.subr.bf16.mxu0 0
    %986 = vmatpush1.bf16.msra.mxu0 0
    %987 = vmatprep.subr.bf16.mxu0 0
    %988 = vmatpush1.bf16.msra.mxu0 0
    %989 = vmatprep.subr.bf16.mxu0 0
    %990 = vmatpush1.bf16.msra.mxu0 0
    %991 = vmatprep.subr.bf16.mxu0 0
    %992 = vmatpush1.bf16.msra.mxu0 0
    %993 = vmatprep.subr.bf16.mxu0 0
    %994 = vmatpush1.bf16.msra.mxu0 0
    %995 = vmatprep.subr.bf16.mxu0 0
    %996 = vmatpush1.bf16.msra.mxu0 0
    %997 = vmatprep.subr.bf16.mxu0 0
    %998 = vmatpush1.bf16.msra.mxu0 0
    %999 = vmatprep.subr.bf16.mxu0 0
    %1000 = vmatpush1.bf16.msra.mxu0 0
    %1001 = vmatprep.subr.bf16.mxu0 0
    %1002 = vmatpush1.bf16.msra.mxu0 0
    %1003 = vmatprep.mubr.bf16.mxu0 0
    %1004 = vmatmul.mubr.bf16.gmra.mrb[0].mxu0 %v969
    %v1005 = vpop.f32.mrb[0].mxu0
    %v1006 = vadd.f32 %v954, %v1005
    %v1007 = vpop.f32.mrb[0].mxu0
    %v1008 = vpop.f32.mrb[0].mxu0
    %v1009 = vadd.f32 %v954, %v1008
    %v1010 = vpop.f32.mrb[0].mxu0
    %1011 = vdwg.mxu0
    %v1012 = vmul.f32 %v1006, 0.5
    %v1013 = vmul.f32 %v1009, 0.5
    %v1014 = vmul.f32 %v1006, 0.70710677
    %v1015 = vmul.f32 %v1009, 0.70710677
    %v1016 = vand.u32 2147483647, %v1014
    %v1017 = vand.u32 2147483647, %v1015
    %v1018 = vmul.f32 %v1016, 0.3275911
    %v1019 = vmul.f32 %v1017, 0.3275911
    %v1020 = vadd.f32 %v1018, 1.0
    %v1021 = vadd.f32 %v1019, 1.0
    %v1022 = vrcp.pop %v1020
    %v1023 = vrcp.pop %v1021
    %v1024 = vmul.f32 %v1022, 1.0614054
    %v1025 = vmul.f32 %v1023, 1.0614054
    %v1026 = vadd.f32 %v1024, -1.4531521
    %v1027 = vadd.f32 %v1025, -1.4531521
    %v1028 = vmul.f32 %v1026, %v1022
    %v1029 = vmul.f32 %v1027, %v1023
    %v1030 = vadd.f32 %v1028, 1.4214138
    %v1031 = vadd.f32 %v1029, 1.4214138
    %v1032 = vmul.f32 %v1030, %v1022
    %v1033 = vmul.f32 %v1031, %v1023
    %v1034 = vadd.f32 %v1032, -0.28449672
    %v1035 = vadd.f32 %v1033, -0.28449672
    %v1036 = vmul.f32 %v1034, %v1022
    %v1037 = vmul.f32 %v1035, %v1023
    %v1038 = vadd.f32 %v1036, 0.2548296
    %v1039 = vadd.f32 %v1037, 0.2548296
    %v1040 = vmul.f32 %v1038, %v1022
    %v1041 = vmul.f32 %v1039, %v1023
    %v1042 = vsub.f32 0.0, %v1016
    %v1043 = vsub.f32 0.0, %v1017
    %v1044 = vmul.f32 %v1042, %v1016
    %v1045 = vmul.f32 %v1043, %v1017
    %v1046 = vmul.f32 %v1044, 1.442695
    %v1047 = vpow.pop %v1046
    %v1048 = vmul.f32 %v1045, 1.442695
    %v1049 = vpow.pop %v1048
    %v1050 = vmul.f32 %v1040, %v1047
    %v1051 = vmul.f32 %v1041, %v1049
    %v1052 = vsub.f32 1.0, %v1050
    %v1053 = vsub.f32 1.0, %v1051
    %vm1054 = vcmp.ge.f32.partialorder %v1014, 0.0
    %vm1055 = vcmp.ge.f32.partialorder %v1015, 0.0
    %v1056 = vsub.f32 0.0, %v1052
    %v1057 = vsub.f32 0.0, %v1053
    %v1058 = vsel %vm1054, %v1052, %v1056
    %v1059 = vsel %vm1055, %v1053, %v1057
    %v1060 = vadd.f32 %v1058, 1.0
    %v1061 = vadd.f32 %v1059, 1.0
    %v1062 = vmul.f32 %v1012, %v1060
    %v1063 = vmul.f32 %v1013, %v1061
    %v1064 = vpack.c.bf16 %v1063, %v1062
    %v1065 = vld [vmem:[%s16] sm:$0xf]
    %v1066 = vld [vmem:[%s16 + $0x4] sm:$0xf]
    %v1067 = vld [vmem:[%s16 + $0x8] sm:$0xf]
    %v1068 = vld [vmem:[%s16 + $0xc] sm:$0xf]
    %v1069 = vld [vmem:[%s16 + $0x10] sm:$0xf]
    %v1070 = vld [vmem:[%s16 + $0x14] sm:$0xf]
    %v1071 = vld [vmem:[%s16 + $0x18] sm:$0xf]
    %v1072 = vld [vmem:[%s16 + $0x1c] sm:$0xf]
    %v1073 = vld [vmem:[%s17] sm:$0x1]
    %v1075 = vlaneseq
    %v1076 = vshrl.u32 %v1075, 7
    %v1077 = vsub.s32 0, %v1076
    %v1078 = vrot.slane %v1073, %v1077
    %v1088 = vunpack.c.l.b16 %v1065
    %v1089 = vunpack.c.l.b16 %v1066
    %v1090 = vunpack.c.l.b16 %v1067
    %v1091 = vunpack.c.l.b16 %v1068
    %v1092 = vunpack.c.l.b16 %v1069
    %v1093 = vunpack.c.l.b16 %v1070
    %v1094 = vunpack.c.l.b16 %v1071
    %v1095 = vunpack.c.l.b16 %v1072
    %v1096 = vpack.c.b16 %v1089, %v1088
    %v1097 = vpack.c.b16 %v1091, %v1090
    %v1098 = vpack.c.b16 %v1093, %v1092
    %v1099 = vpack.c.b16 %v1095, %v1094
    %v1105 = vsel %vm256, %v1064, 0
    %1107 = vmatprep.subr.bf16.mxu0 0
    %1108 = vmatpush1.bf16.msra.mxu0 %v1096
    %1109 = vmatprep.subr.bf16.mxu0 0
    %1110 = vmatpush1.bf16.msra.mxu0 %v1097
    %1111 = vmatprep.subr.bf16.mxu0 0
    %1112 = vmatpush1.bf16.msra.mxu0 %v1098
    %1113 = vmatprep.subr.bf16.mxu0 0
    %1114 = vmatpush1.bf16.msra.mxu0 %v1099
    %1115 = vmatprep.subr.bf16.mxu0 0
    %1116 = vmatpush1.bf16.msra.mxu0 0
    %1117 = vmatprep.subr.bf16.mxu0 0
    %1118 = vmatpush1.bf16.msra.mxu0 0
    %1119 = vmatprep.subr.bf16.mxu0 0
    %1120 = vmatpush1.bf16.msra.mxu0 0
    %1121 = vmatprep.subr.bf16.mxu0 0
    %1122 = vmatpush1.bf16.msra.mxu0 0
    %1123 = vmatprep.subr.bf16.mxu0 0
    %1124 = vmatpush1.bf16.msra.mxu0 0
    %1125 = vmatprep.subr.bf16.mxu0 0
    %1126 = vmatpush1.bf16.msra.mxu0 0
    %1127 = vmatprep.subr.bf16.mxu0 0
    %1128 = vmatpush1.bf16.msra.mxu0 0
    %1129 = vmatprep.subr.bf16.mxu0 0
    %1130 = vmatpush1.bf16.msra.mxu0 0
    %1131 = vmatprep.subr.bf16.mxu0 0
    %1132 = vmatpush1.bf16.msra.mxu0 0
    %1133 = vmatprep.subr.bf16.mxu0 0
    %1134 = vmatpush1.bf16.msra.mxu0 0
    %1135 = vmatprep.subr.bf16.mxu0 0
    %1136 = vmatpush1.bf16.msra.mxu0 0
    %1137 = vmatprep.subr.bf16.mxu0 0
    %1138 = vmatpush1.bf16.msra.mxu0 0
    %1139 = vmatprep.mubr.bf16.mxu0 0
    %1140 = vmatmul.mubr.bf16.gmra.mrb[0].mxu0 %v1105
    %v1141 = vpop.f32.mrb[0].mxu0
    %v1142 = vadd.f32 %v1078, %v1141
    %v1143 = vpop.f32.mrb[0].mxu0
    %v1144 = vpop.f32.mrb[0].mxu0
    %v1145 = vadd.f32 %v1078, %v1144
    %v1146 = vpop.f32.mrb[0].mxu0
    %1147 = vdwg.mxu0
    %v1148 = vadd.f32 %v942, %v1142
    %v1149 = vadd.f32 %v943, %v1145
    %v1150 = vld [vmem:[%s18] sm:$0x1]
    %v1151 = vld [vmem:[%s19] sm:$0x1]
    %v1152 = vsel %vm424, %v1148, 0.0
    %1153 = vadd.xlane.f32.xlu0 %v1152
    %v1154 = vpop.xlane.xlu0 %1153
    %v1155 = vsel %vm424, %v1149, 0.0
    %1156 = vadd.xlane.f32.xlu0 %v1155
    %v1157 = vpop.xlane.xlu0 %1156
    %v1158 = vmul.f32 %v1154, %v431
    %v1159 = vmul.f32 %v1157, %v431
    %v1160 = vsub.f32 %v1148, %v1158
    %v1161 = vsub.f32 %v1149, %v1159
    %v1162 = vmul.f32 %v1160, %v1160
    %v1163 = vmul.f32 %v1161, %v1161
    %v1164 = vsel %vm424, %v1162, 0.0
    %1165 = vadd.xlane.f32.xlu0 %v1164
    %v1166 = vpop.xlane.xlu0 %1165
    %v1167 = vsel %vm424, %v1163, 0.0
    %1168 = vadd.xlane.f32.xlu0 %v1167
    %v1169 = vpop.xlane.xlu0 %1168
    %v1170 = vmul.f32 %v1166, %v431
    %v1171 = vmul.f32 %v1169, %v431
    %v1172 = vadd.f32 %v1170, 1e-05
    %v1173 = vadd.f32 %v1171, 1e-05
    %v1174 = vrsqrt.pop %v1172
    %v1175 = vrsqrt.pop %v1173
    %v1176 = vmul.f32 %v1160, %v1174
    %v1177 = vmul.f32 %v1161, %v1175
    %v1179 = vlaneseq
    %v1180 = vshrl.u32 %v1179, 7
    %v1181 = vsub.s32 0, %v1180
    %v1182 = vrot.slane %v1150, %v1181
    %v1184 = vmul.f32 %v1176, %v1182
    %v1185 = vmul.f32 %v1177, %v1182
    %v1187 = vlaneseq
    %v1188 = vshrl.u32 %v1187, 7
    %v1189 = vsub.s32 0, %v1188
    %v1190 = vrot.slane %v1151, %v1189
    %v1192 = vadd.f32 %v1184, %v1190
    %v1193 = vadd.f32 %v1185, %v1190
    %v1194 = vpack.c.bf16 %v1193, %v1192
    %s1195 = scalar_lea.vmem %s8, 16
    %v1196 = vld [vmem:[%s1195] sm:$0xf]
    %v1197 = vld [vmem:[%s1195 + $0x4] sm:$0xf]
    %v1198 = vld [vmem:[%s1195 + $0x8] sm:$0xf]
    %v1199 = vld [vmem:[%s1195 + $0xc] sm:$0xf]
    %s1200 = scalar_lea.vmem %s9, 1
    %v1201 = vld [vmem:[%s1200] sm:$0x1]
    %v1203 = vlaneseq
    %v1204 = vshrl.u32 %v1203, 7
    %v1205 = vsub.s32 0, %v1204
    %v1206 = vrot.slane %v1201, %v1205
    %v1212 = vunpack.c.l.b16 %v1196
    %v1213 = vunpack.c.l.b16 %v1197
    %v1214 = vunpack.c.l.b16 %v1198
    %v1215 = vunpack.c.l.b16 %v1199
    %v1216 = vpack.c.b16 %v1213, %v1212
    %v1217 = vpack.c.b16 %v1215, %v1214
    %v1221 = vsel %vm424, %v1194, 0
    %1223 = vmatprep.subr.bf16.mxu0 0
    %1224 = vmatpush1.bf16.msra.mxu0 %v1216
    %1225 = vmatprep.subr.bf16.mxu0 0
    %1226 = vmatpush1.bf16.msra.mxu0 %v1217
    %1227 = vmatprep.subr.bf16.mxu0 0
    %1228 = vmatpush1.bf16.msra.mxu0 0
    %1229 = vmatprep.subr.bf16.mxu0 0
    %1230 = vmatpush1.bf16.msra.mxu0 0
    %1231 = vmatprep.subr.bf16.mxu0 0
    %1232 = vmatpush1.bf16.msra.mxu0 0
    %1233 = vmatprep.subr.bf16.mxu0 0
    %1234 = vmatpush1.bf16.msra.mxu0 0
    %1235 = vmatprep.subr.bf16.mxu0 0
    %1236 = vmatpush1.bf16.msra.mxu0 0
    %1237 = vmatprep.subr.bf16.mxu0 0
    %1238 = vmatpush1.bf16.msra.mxu0 0
    %1239 = vmatprep.subr.bf16.mxu0 0
    %1240 = vmatpush1.bf16.msra.mxu0 0
    %1241 = vmatprep.subr.bf16.mxu0 0
    %1242 = vmatpush1.bf16.msra.mxu0 0
    %1243 = vmatprep.subr.bf16.mxu0 0
    %1244 = vmatpush1.bf16.msra.mxu0 0
    %1245 = vmatprep.subr.bf16.mxu0 0
    %1246 = vmatpush1.bf16.msra.mxu0 0
    %1247 = vmatprep.subr.bf16.mxu0 0
    %1248 = vmatpush1.bf16.msra.mxu0 0
    %1249 = vmatprep.subr.bf16.mxu0 0
    %1250 = vmatpush1.bf16.msra.mxu0 0
    %1251 = vmatprep.subr.bf16.mxu0 0
    %1252 = vmatpush1.bf16.msra.mxu0 0
    %1253 = vmatprep.subr.bf16.mxu0 0
    %1254 = vmatpush1.bf16.msra.mxu0 0
    %1255 = vmatprep.mubr.bf16.mxu0 0
    %1256 = vmatmul.mubr.bf16.gmra.mrb[0].mxu0 %v1221
    %v1257 = vpop.f32.mrb[0].mxu0
    %v1258 = vadd.f32 %v1206, %v1257
    %v1259 = vpop.f32.mrb[0].mxu0
    %v1260 = vpop.f32.mrb[0].mxu0
    %v1261 = vadd.f32 %v1206, %v1260
    %v1262 = vpop.f32.mrb[0].mxu0
    %1263 = vdwg.mxu0
    %1265 = vrot.lane.b32.xlu0 %v1258, 112
    %v1266 = vpop.permute.xlu0 %1265
    %1269 = vrot.lane.b32.xlu0 %v1261, 112
    %v1270 = vpop.permute.xlu0 %1269
    %v1272 = vpack.c.bf16 %v1266, %v1258
    %v1273 = vpack.c.bf16 %v1270, %v1261
    %1276 = vrot.lane.b32.xlu0 %v1272, 96
    %v1277 = vpop.permute.xlu0 %1276
    %1278 = vrot.lane.b32.xlu0 %v1273, 96
    %v1279 = vpop.permute.xlu0 %1278
    %v1281 = vsel %vm148, %v1272, 0
    %v1284 = vsel %vm148, %v1273, 0
    %v1287 = vsel %vm148, %v1277, 0
    %v1290 = vsel %vm148, %v1279, 0
    %1292 = vmatprep.subr.bf16.mxu0 0
    %1293 = vmatpush1.bf16.xpose.msra.mxu0 %v1287
    %1294 = vmatprep.subr.bf16.mxu0 0
    %1295 = vmatpush1.bf16.xpose.msra.mxu0 %v1290
    %1296 = vmatprep.subr.bf16.mxu0 0
    %1297 = vmatpush1.bf16.xpose.msra.mxu0 0
    %1298 = vmatprep.subr.bf16.mxu0 0
    %1299 = vmatpush1.bf16.xpose.msra.mxu0 0
    %1300 = vmatprep.subr.bf16.mxu0 0
    %1301 = vmatpush1.bf16.xpose.msra.mxu0 0
    %1302 = vmatprep.subr.bf16.mxu0 0
    %1303 = vmatpush1.bf16.xpose.msra.mxu0 0
    %1304 = vmatprep.subr.bf16.mxu0 0
    %1305 = vmatpush1.bf16.xpose.msra.mxu0 0
    %1306 = vmatprep.subr.bf16.mxu0 0
    %1307 = vmatpush1.bf16.xpose.msra.mxu0 0
    %1308 = vmatprep.subr.bf16.mxu0 0
    %1309 = vmatpush1.bf16.xpose.msra.mxu0 0
    %1310 = vmatprep.subr.bf16.mxu0 0
    %1311 = vmatpush1.bf16.xpose.msra.mxu0 0
    %1312 = vmatprep.subr.bf16.mxu0 0
    %1313 = vmatpush1.bf16.xpose.msra.mxu0 0
    %1314 = vmatprep.subr.bf16.mxu0 0
    %1315 = vmatpush1.bf16.xpose.msra.mxu0 0
    %1316 = vmatprep.subr.bf16.mxu0 0
    %1317 = vmatpush1.bf16.xpose.msra.mxu0 0
    %1318 = vmatprep.subr.bf16.mxu0 0
    %1319 = vmatpush1.bf16.xpose.msra.mxu0 0
    %1320 = vmatprep.subr.bf16.mxu0 0
    %1321 = vmatpush1.bf16.xpose.msra.mxu0 0
    %1322 = vmatprep.subr.bf16.mxu0 0
    %1323 = vmatpush1.bf16.xpose.msra.mxu0 0
    %1324 = vmatprep.mubr.bf16.mxu0 0
    %1325 = vmatmul.mubr.bf16.gmra.mrb[0].mxu0 %v1281
    %v1326 = vpop.f32.mrb[0].mxu0
    %v1327 = vadd.f32 0.0, %v1326
    %v1328 = vpop.f32.mrb[0].mxu0
    %v1329 = vpop.f32.mrb[0].mxu0
    %v1330 = vadd.f32 0.0, %v1329
    %v1331 = vpop.f32.mrb[0].mxu0
    %1332 = vmatprep.mubr.bf16.mxu0 0
    %1333 = vmatmul.mubr.bf16.gmra.mrb[0].mxu0 %v1284
    %v1334 = vpop.f32.mrb[0].mxu0
    %v1335 = vadd.f32 0.0, %v1334
    %v1336 = vpop.f32.mrb[0].mxu0
    %v1337 = vpop.f32.mrb[0].mxu0
    %v1338 = vadd.f32 0.0, %v1337
    %v1339 = vpop.f32.mrb[0].mxu0
    %1340 = vdwg.mxu0
    %v1341 = vmul.f32 %v1327, 0.25
    %v1342 = vmul.f32 %v1330, 0.25
    %v1343 = vmul.f32 %v1335, 0.25
    %v1344 = vmul.f32 %v1338, 0.25
    %v1345 = vadd.f32 %v1341, %v517
    %v1346 = vadd.f32 %v1342, %v518
    %v1347 = vadd.f32 %v1343, %v519
    %v1348 = vadd.f32 %v1344, %v520
    %v1349 = vsel %vm424, %v1345, -inf
    %1350 = vmax.xlane.f32.xlu0 %v1349
    %v1351 = vpop.xlane.xlu0 %1350
    %v1352 = vsel %vm424, %v1346, -inf
    %1353 = vmax.xlane.f32.xlu0 %v1352
    %v1354 = vpop.xlane.xlu0 %1353
    %v1355 = vsel %vm424, %v1347, -inf
    %1356 = vmax.xlane.f32.xlu0 %v1355
    %v1357 = vpop.xlane.xlu0 %1356
    %v1358 = vsel %vm424, %v1348, -inf
    %1359 = vmax.xlane.f32.xlu0 %v1358
    %v1360 = vpop.xlane.xlu0 %1359
    %v1361 = vsub.f32 %v1345, %v1351
    %v1362 = vsub.f32 %v1346, %v1354
    %v1363 = vsub.f32 %v1347, %v1357
    %v1364 = vsub.f32 %v1348, %v1360
    %v1365 = vmul.f32 %v1361, 1.442695
    %v1366 = vpow.pop %v1365
    %v1367 = vmul.f32 %v1362, 1.442695
    %v1368 = vpow.pop %v1367
    %v1369 = vmul.f32 %v1363, 1.442695
    %v1370 = vpow.pop %v1369
    %v1371 = vmul.f32 %v1364, 1.442695
    %v1372 = vpow.pop %v1371
    %v1373 = vsel %vm424, %v1366, 0.0
    %1374 = vadd.xlane.f32.xlu0 %v1373
    %v1375 = vpop.xlane.xlu0 %1374
    %v1376 = vsel %vm424, %v1368, 0.0
    %1377 = vadd.xlane.f32.xlu0 %v1376
    %v1378 = vpop.xlane.xlu0 %1377
    %v1379 = vsel %vm424, %v1370, 0.0
    %1380 = vadd.xlane.f32.xlu0 %v1379
    %v1381 = vpop.xlane.xlu0 %1380
    %v1382 = vsel %vm424, %v1372, 0.0
    %1383 = vadd.xlane.f32.xlu0 %v1382
    %v1384 = vpop.xlane.xlu0 %1383
    %v1385 = vrcp.pop %v1375
    %v1386 = vrcp.pop %v1378
    %v1387 = vrcp.pop %v1381
    %v1388 = vrcp.pop %v1384
    %v1389 = vmul.f32 %v1366, %v1385
    %v1390 = vmul.f32 %v1368, %v1386
    %v1391 = vmul.f32 %v1370, %v1387
    %v1392 = vmul.f32 %v1372, %v1388
    %v1393 = vpack.c.bf16 %v1390, %v1389
    %v1394 = vpack.c.bf16 %v1392, %v1391
    %1395 = vrot.lane.b32.xlu0 %v1272, 64
    %v1396 = vpop.permute.xlu0 %1395
    %1397 = vrot.lane.b32.xlu0 %v1273, 64
    %v1398 = vpop.permute.xlu0 %1397
    %v1402 = vsel %vm424, %v1393, 0
    %v1405 = vsel %vm424, %v1394, 0
    %1407 = vmatprep.subr.bf16.mxu0 0
    %1408 = vmatpush1.bf16.msra.mxu0 %v1396
    %1409 = vmatprep.subr.bf16.mxu0 0
    %1410 = vmatpush1.bf16.msra.mxu0 %v1398
    %1411 = vmatprep.subr.bf16.mxu0 0
    %1412 = vmatpush1.bf16.msra.mxu0 0
    %1413 = vmatprep.subr.bf16.mxu0 0
    %1414 = vmatpush1.bf16.msra.mxu0 0
    %1415 = vmatprep.subr.bf16.mxu0 0
    %1416 = vmatpush1.bf16.msra.mxu0 0
    %1417 = vmatprep.subr.bf16.mxu0 0
    %1418 = vmatpush1.bf16.msra.mxu0 0
    %1419 = vmatprep.subr.bf16.mxu0 0
    %1420 = vmatpush1.bf16.msra.mxu0 0
    %1421 = vmatprep.subr.bf16.mxu0 0
    %1422 = vmatpush1.bf16.msra.mxu0 0
    %1423 = vmatprep.subr.bf16.mxu0 0
    %1424 = vmatpush1.bf16.msra.mxu0 0
    %1425 = vmatprep.subr.bf16.mxu0 0
    %1426 = vmatpush1.bf16.msra.mxu0 0
    %1427 = vmatprep.subr.bf16.mxu0 0
    %1428 = vmatpush1.bf16.msra.mxu0 0
    %1429 = vmatprep.subr.bf16.mxu0 0
    %1430 = vmatpush1.bf16.msra.mxu0 0
    %1431 = vmatprep.subr.bf16.mxu0 0
    %1432 = vmatpush1.bf16.msra.mxu0 0
    %1433 = vmatprep.subr.bf16.mxu0 0
    %1434 = vmatpush1.bf16.msra.mxu0 0
    %1435 = vmatprep.subr.bf16.mxu0 0
    %1436 = vmatpush1.bf16.msra.mxu0 0
    %1437 = vmatprep.subr.bf16.mxu0 0
    %1438 = vmatpush1.bf16.msra.mxu0 0
    %1439 = vmatprep.mubr.bf16.mxu0 0
    %1440 = vmatmul.mubr.bf16.gmra.mrb[0].mxu0 %v1402
    %v1441 = vpop.f32.mrb[0].mxu0
    %v1442 = vadd.f32 0.0, %v1441
    %v1443 = vpop.f32.mrb[0].mxu0
    %v1444 = vpop.f32.mrb[0].mxu0
    %v1445 = vadd.f32 0.0, %v1444
    %v1446 = vpop.f32.mrb[0].mxu0
    %1447 = vmatprep.mubr.bf16.mxu0 0
    %1448 = vmatmul.mubr.bf16.gmra.mrb[0].mxu0 %v1405
    %v1449 = vpop.f32.mrb[0].mxu0
    %v1450 = vadd.f32 0.0, %v1449
    %v1451 = vpop.f32.mrb[0].mxu0
    %v1452 = vpop.f32.mrb[0].mxu0
    %v1453 = vadd.f32 0.0, %v1452
    %v1454 = vpop.f32.mrb[0].mxu0
    %1455 = vdwg.mxu0
    %s1456 = scalar_lea.vmem %s10, 16
    %v1457 = vld [vmem:[%s1456] sm:$0xf]
    %v1458 = vld [vmem:[%s1456 + $0x4] sm:$0xf]
    %v1459 = vld [vmem:[%s1456 + $0x8] sm:$0xf]
    %v1460 = vld [vmem:[%s1456 + $0xc] sm:$0xf]
    %s1461 = scalar_lea.vmem %s11, 1
    %v1462 = vld [vmem:[%s1461] sm:$0x1]
    %v1463 = vpack.c.bf16 %v1450, %v1442
    %v1466 = vunpack.c.l.b16 %v1457
    %v1467 = vunpack.c.l.b16 %v1458
    %v1468 = vpack.c.b16 %v1467, %v1466
    %v1471 = vsel %vm148, %v1463, 0
    %1473 = vmatprep.subr.bf16.mxu0 0
    %1474 = vmatpush1.bf16.msra.mxu0 %v1468
    %1475 = vmatprep.subr.bf16.mxu0 0
    %1476 = vmatpush1.bf16.msra.mxu0 0
    %1477 = vmatprep.subr.bf16.mxu0 0
    %1478 = vmatpush1.bf16.msra.mxu0 0
    %1479 = vmatprep.subr.bf16.mxu0 0
    %1480 = vmatpush1.bf16.msra.mxu0 0
    %1481 = vmatprep.subr.bf16.mxu0 0
    %1482 = vmatpush1.bf16.msra.mxu0 0
    %1483 = vmatprep.subr.bf16.mxu0 0
    %1484 = vmatpush1.bf16.msra.mxu0 0
    %1485 = vmatprep.subr.bf16.mxu0 0
    %1486 = vmatpush1.bf16.msra.mxu0 0
    %1487 = vmatprep.subr.bf16.mxu0 0
    %1488 = vmatpush1.bf16.msra.mxu0 0
    %1489 = vmatprep.subr.bf16.mxu0 0
    %1490 = vmatpush1.bf16.msra.mxu0 0
    %1491 = vmatprep.subr.bf16.mxu0 0
    %1492 = vmatpush1.bf16.msra.mxu0 0
    %1493 = vmatprep.subr.bf16.mxu0 0
    %1494 = vmatpush1.bf16.msra.mxu0 0
    %1495 = vmatprep.subr.bf16.mxu0 0
    %1496 = vmatpush1.bf16.msra.mxu0 0
    %1497 = vmatprep.subr.bf16.mxu0 0
    %1498 = vmatpush1.bf16.msra.mxu0 0
    %1499 = vmatprep.subr.bf16.mxu0 0
    %1500 = vmatpush1.bf16.msra.mxu0 0
    %1501 = vmatprep.subr.bf16.mxu0 0
    %1502 = vmatpush1.bf16.msra.mxu0 0
    %1503 = vmatprep.subr.bf16.mxu0 0
    %1504 = vmatpush1.bf16.msra.mxu0 0
    %1505 = vmatprep.mubr.bf16.mxu0 0
    %1506 = vmatmul.mubr.bf16.gmra.mrb[0].mxu0 %v1471
    %v1507 = vpop.f32.mrb[0].mxu0
    %v1508 = vadd.f32 0.0, %v1507
    %v1509 = vpop.f32.mrb[0].mxu0
    %v1510 = vpop.f32.mrb[0].mxu0
    %v1511 = vadd.f32 0.0, %v1510
    %v1512 = vpop.f32.mrb[0].mxu0
    %1513 = vdwg.mxu0
    %v1515 = vlaneseq
    %v1516 = vshrl.u32 %v1515, 7
    %v1517 = vsub.s32 0, %v1516
    %v1518 = vrot.slane %v1462, %v1517
    %v1520 = vadd.f32 %v1518, %v1508
    %v1521 = vadd.f32 %v1518, %v1511
    %v1522 = vpack.c.bf16 %v1453, %v1445
    %v1525 = vunpack.c.l.b16 %v1459
    %v1526 = vunpack.c.l.b16 %v1460
    %v1527 = vpack.c.b16 %v1526, %v1525
    %v1530 = vsel %vm148, %v1522, 0
    %1532 = vmatprep.subr.bf16.mxu0 0
    %1533 = vmatpush1.bf16.msra.mxu0 %v1527
    %1534 = vmatprep.subr.bf16.mxu0 0
    %1535 = vmatpush1.bf16.msra.mxu0 0
    %1536 = vmatprep.subr.bf16.mxu0 0
    %1537 = vmatpush1.bf16.msra.mxu0 0
    %1538 = vmatprep.subr.bf16.mxu0 0
    %1539 = vmatpush1.bf16.msra.mxu0 0
    %1540 = vmatprep.subr.bf16.mxu0 0
    %1541 = vmatpush1.bf16.msra.mxu0 0
    %1542 = vmatprep.subr.bf16.mxu0 0
    %1543 = vmatpush1.bf16.msra.mxu0 0
    %1544 = vmatprep.subr.bf16.mxu0 0
    %1545 = vmatpush1.bf16.msra.mxu0 0
    %1546 = vmatprep.subr.bf16.mxu0 0
    %1547 = vmatpush1.bf16.msra.mxu0 0
    %1548 = vmatprep.subr.bf16.mxu0 0
    %1549 = vmatpush1.bf16.msra.mxu0 0
    %1550 = vmatprep.subr.bf16.mxu0 0
    %1551 = vmatpush1.bf16.msra.mxu0 0
    %1552 = vmatprep.subr.bf16.mxu0 0
    %1553 = vmatpush1.bf16.msra.mxu0 0
    %1554 = vmatprep.subr.bf16.mxu0 0
    %1555 = vmatpush1.bf16.msra.mxu0 0
    %1556 = vmatprep.subr.bf16.mxu0 0
    %1557 = vmatpush1.bf16.msra.mxu0 0
    %1558 = vmatprep.subr.bf16.mxu0 0
    %1559 = vmatpush1.bf16.msra.mxu0 0
    %1560 = vmatprep.subr.bf16.mxu0 0
    %1561 = vmatpush1.bf16.msra.mxu0 0
    %1562 = vmatprep.subr.bf16.mxu0 0
    %1563 = vmatpush1.bf16.msra.mxu0 0
    %1564 = vmatprep.mubr.bf16.mxu0 0
    %1565 = vmatmul.mubr.bf16.gmra.mrb[0].mxu0 %v1530
    %v1566 = vpop.f32.mrb[0].mxu0
    %v1567 = vadd.f32 0.0, %v1566
    %v1568 = vpop.f32.mrb[0].mxu0
    %v1569 = vpop.f32.mrb[0].mxu0
    %v1570 = vadd.f32 0.0, %v1569
    %v1571 = vpop.f32.mrb[0].mxu0
    %1572 = vdwg.mxu0
    %v1573 = vadd.f32 %v1520, %v1567
    %v1574 = vadd.f32 %v1521, %v1570
    %v1575 = vadd.f32 %v1192, %v1573
    %v1576 = vadd.f32 %v1193, %v1574
    %s1577 = scalar_lea.vmem %s12, 1
    %v1578 = vld [vmem:[%s1577] sm:$0x1]
    %s1579 = scalar_lea.vmem %s13, 1
    %v1580 = vld [vmem:[%s1579] sm:$0x1]
    %v1581 = vsel %vm424, %v1575, 0.0
    %1582 = vadd.xlane.f32.xlu0 %v1581
    %v1583 = vpop.xlane.xlu0 %1582
    %v1584 = vsel %vm424, %v1576, 0.0
    %1585 = vadd.xlane.f32.xlu0 %v1584
    %v1586 = vpop.xlane.xlu0 %1585
    %v1587 = vmul.f32 %v1583, %v431
    %v1588 = vmul.f32 %v1586, %v431
    %v1589 = vsub.f32 %v1575, %v1587
    %v1590 = vsub.f32 %v1576, %v1588
    %v1591 = vmul.f32 %v1589, %v1589
    %v1592 = vmul.f32 %v1590, %v1590
    %v1593 = vsel %vm424, %v1591, 0.0
    %1594 = vadd.xlane.f32.xlu0 %v1593
    %v1595 = vpop.xlane.xlu0 %1594
    %v1596 = vsel %vm424, %v1592, 0.0
    %1597 = vadd.xlane.f32.xlu0 %v1596
    %v1598 = vpop.xlane.xlu0 %1597
    %v1599 = vmul.f32 %v1595, %v431
    %v1600 = vmul.f32 %v1598, %v431
    %v1601 = vadd.f32 %v1599, 1e-05
    %v1602 = vadd.f32 %v1600, 1e-05
    %v1603 = vrsqrt.pop %v1601
    %v1604 = vrsqrt.pop %v1602
    %v1605 = vmul.f32 %v1589, %v1603
    %v1606 = vmul.f32 %v1590, %v1604
    %v1608 = vlaneseq
    %v1609 = vshrl.u32 %v1608, 7
    %v1610 = vsub.s32 0, %v1609
    %v1611 = vrot.slane %v1578, %v1610
    %v1613 = vmul.f32 %v1605, %v1611
    %v1614 = vmul.f32 %v1606, %v1611
    %v1616 = vlaneseq
    %v1617 = vshrl.u32 %v1616, 7
    %v1618 = vsub.s32 0, %v1617
    %v1619 = vrot.slane %v1580, %v1618
    %v1621 = vadd.f32 %v1613, %v1619
    %v1622 = vadd.f32 %v1614, %v1619
    %v1623 = vpack.c.bf16 %v1622, %v1621
    %s1624 = scalar_lea.vmem %s14, 16
    %v1625 = vld [vmem:[%s1624] sm:$0xf]
    %v1626 = vld [vmem:[%s1624 + $0x4] sm:$0xf]
    %v1627 = vld [vmem:[%s1624 + $0x8] sm:$0xf]
    %v1628 = vld [vmem:[%s1624 + $0xc] sm:$0xf]
    %s1629 = scalar_lea.vmem %s15, 1
    %v1630 = vld [vmem:[%s1629] sm:$0x1]
    %v1632 = vlaneseq
    %v1633 = vshrl.u32 %v1632, 7
    %v1634 = vsub.s32 0, %v1633
    %v1635 = vrot.slane %v1630, %v1634
    %v1641 = vunpack.c.l.b16 %v1625
    %v1642 = vunpack.c.l.b16 %v1626
    %v1643 = vunpack.c.l.b16 %v1627
    %v1644 = vunpack.c.l.b16 %v1628
    %v1645 = vpack.c.b16 %v1642, %v1641
    %v1646 = vpack.c.b16 %v1644, %v1643
    %v1650 = vsel %vm424, %v1623, 0
    %1652 = vmatprep.subr.bf16.mxu0 0
    %1653 = vmatpush1.bf16.msra.mxu0 %v1645
    %1654 = vmatprep.subr.bf16.mxu0 0
    %1655 = vmatpush1.bf16.msra.mxu0 %v1646
    %1656 = vmatprep.subr.bf16.mxu0 0
    %1657 = vmatpush1.bf16.msra.mxu0 0
    %1658 = vmatprep.subr.bf16.mxu0 0
    %1659 = vmatpush1.bf16.msra.mxu0 0
    %1660 = vmatprep.subr.bf16.mxu0 0
    %1661 = vmatpush1.bf16.msra.mxu0 0
    %1662 = vmatprep.subr.bf16.mxu0 0
    %1663 = vmatpush1.bf16.msra.mxu0 0
    %1664 = vmatprep.subr.bf16.mxu0 0
    %1665 = vmatpush1.bf16.msra.mxu0 0
    %1666 = vmatprep.subr.bf16.mxu0 0
    %1667 = vmatpush1.bf16.msra.mxu0 0
    %1668 = vmatprep.subr.bf16.mxu0 0
    %1669 = vmatpush1.bf16.msra.mxu0 0
    %1670 = vmatprep.subr.bf16.mxu0 0
    %1671 = vmatpush1.bf16.msra.mxu0 0
    %1672 = vmatprep.subr.bf16.mxu0 0
    %1673 = vmatpush1.bf16.msra.mxu0 0
    %1674 = vmatprep.subr.bf16.mxu0 0
    %1675 = vmatpush1.bf16.msra.mxu0 0
    %1676 = vmatprep.subr.bf16.mxu0 0
    %1677 = vmatpush1.bf16.msra.mxu0 0
    %1678 = vmatprep.subr.bf16.mxu0 0
    %1679 = vmatpush1.bf16.msra.mxu0 0
    %1680 = vmatprep.subr.bf16.mxu0 0
    %1681 = vmatpush1.bf16.msra.mxu0 0
    %1682 = vmatprep.subr.bf16.mxu0 0
    %1683 = vmatpush1.bf16.msra.mxu0 0
    %1684 = vmatprep.mubr.bf16.mxu0 0
    %1685 = vmatmul.mubr.bf16.gmra.mrb[0].mxu0 %v1650
    %v1686 = vpop.f32.mrb[0].mxu0
    %v1687 = vadd.f32 %v1635, %v1686
    %v1688 = vpop.f32.mrb[0].mxu0
    %v1689 = vpop.f32.mrb[0].mxu0
    %v1690 = vadd.f32 %v1635, %v1689
    %v1691 = vpop.f32.mrb[0].mxu0
    %1692 = vdwg.mxu0
    %v1693 = vmul.f32 %v1687, 0.5
    %v1694 = vmul.f32 %v1690, 0.5
    %v1695 = vmul.f32 %v1687, 0.70710677
    %v1696 = vmul.f32 %v1690, 0.70710677
    %v1697 = vand.u32 2147483647, %v1695
    %v1698 = vand.u32 2147483647, %v1696
    %v1699 = vmul.f32 %v1697, 0.3275911
    %v1700 = vmul.f32 %v1698, 0.3275911
    %v1701 = vadd.f32 %v1699, 1.0
    %v1702 = vadd.f32 %v1700, 1.0
    %v1703 = vrcp.pop %v1701
    %v1704 = vrcp.pop %v1702
    %v1705 = vmul.f32 %v1703, 1.0614054
    %v1706 = vmul.f32 %v1704, 1.0614054
    %v1707 = vadd.f32 %v1705, -1.4531521
    %v1708 = vadd.f32 %v1706, -1.4531521
    %v1709 = vmul.f32 %v1707, %v1703
    %v1710 = vmul.f32 %v1708, %v1704
    %v1711 = vadd.f32 %v1709, 1.4214138
    %v1712 = vadd.f32 %v1710, 1.4214138
    %v1713 = vmul.f32 %v1711, %v1703
    %v1714 = vmul.f32 %v1712, %v1704
    %v1715 = vadd.f32 %v1713, -0.28449672
    %v1716 = vadd.f32 %v1714, -0.28449672
    %v1717 = vmul.f32 %v1715, %v1703
    %v1718 = vmul.f32 %v1716, %v1704
    %v1719 = vadd.f32 %v1717, 0.2548296
    %v1720 = vadd.f32 %v1718, 0.2548296
    %v1721 = vmul.f32 %v1719, %v1703
    %v1722 = vmul.f32 %v1720, %v1704
    %v1723 = vsub.f32 0.0, %v1697
    %v1724 = vsub.f32 0.0, %v1698
    %v1725 = vmul.f32 %v1723, %v1697
    %v1726 = vmul.f32 %v1724, %v1698
    %v1727 = vmul.f32 %v1725, 1.442695
    %v1728 = vpow.pop %v1727
    %v1729 = vmul.f32 %v1726, 1.442695
    %v1730 = vpow.pop %v1729
    %v1731 = vmul.f32 %v1721, %v1728
    %v1732 = vmul.f32 %v1722, %v1730
    %v1733 = vsub.f32 1.0, %v1731
    %v1734 = vsub.f32 1.0, %v1732
    %vm1735 = vcmp.ge.f32.partialorder %v1695, 0.0
    %vm1736 = vcmp.ge.f32.partialorder %v1696, 0.0
    %v1737 = vsub.f32 0.0, %v1733
    %v1738 = vsub.f32 0.0, %v1734
    %v1739 = vsel %vm1735, %v1733, %v1737
    %v1740 = vsel %vm1736, %v1734, %v1738
    %v1741 = vadd.f32 %v1739, 1.0
    %v1742 = vadd.f32 %v1740, 1.0
    %v1743 = vmul.f32 %v1693, %v1741
    %v1744 = vmul.f32 %v1694, %v1742
    %v1745 = vpack.c.bf16 %v1744, %v1743
    %s1746 = scalar_lea.vmem %s16, 32
    %v1747 = vld [vmem:[%s1746] sm:$0xf]
    %v1748 = vld [vmem:[%s1746 + $0x4] sm:$0xf]
    %v1749 = vld [vmem:[%s1746 + $0x8] sm:$0xf]
    %v1750 = vld [vmem:[%s1746 + $0xc] sm:$0xf]
    %v1751 = vld [vmem:[%s1746 + $0x10] sm:$0xf]
    %v1752 = vld [vmem:[%s1746 + $0x14] sm:$0xf]
    %v1753 = vld [vmem:[%s1746 + $0x18] sm:$0xf]
    %v1754 = vld [vmem:[%s1746 + $0x1c] sm:$0xf]
    %s1755 = scalar_lea.vmem %s17, 1
    %v1756 = vld [vmem:[%s1755] sm:$0x1]
    %v1758 = vlaneseq
    %v1759 = vshrl.u32 %v1758, 7
    %v1760 = vsub.s32 0, %v1759
    %v1761 = vrot.slane %v1756, %v1760
    %v1771 = vunpack.c.l.b16 %v1747
    %v1772 = vunpack.c.l.b16 %v1748
    %v1773 = vunpack.c.l.b16 %v1749
    %v1774 = vunpack.c.l.b16 %v1750
    %v1775 = vunpack.c.l.b16 %v1751
    %v1776 = vunpack.c.l.b16 %v1752
    %v1777 = vunpack.c.l.b16 %v1753
    %v1778 = vunpack.c.l.b16 %v1754
    %v1779 = vpack.c.b16 %v1772, %v1771
    %v1780 = vpack.c.b16 %v1774, %v1773
    %v1781 = vpack.c.b16 %v1776, %v1775
    %v1782 = vpack.c.b16 %v1778, %v1777
    %v1788 = vsel %vm256, %v1745, 0
    %1790 = vmatprep.subr.bf16.mxu0 0
    %1791 = vmatpush1.bf16.msra.mxu0 %v1779
    %1792 = vmatprep.subr.bf16.mxu0 0
    %1793 = vmatpush1.bf16.msra.mxu0 %v1780
    %1794 = vmatprep.subr.bf16.mxu0 0
    %1795 = vmatpush1.bf16.msra.mxu0 %v1781
    %1796 = vmatprep.subr.bf16.mxu0 0
    %1797 = vmatpush1.bf16.msra.mxu0 %v1782
    %1798 = vmatprep.subr.bf16.mxu0 0
    %1799 = vmatpush1.bf16.msra.mxu0 0
    %1800 = vmatprep.subr.bf16.mxu0 0
    %1801 = vmatpush1.bf16.msra.mxu0 0
    %1802 = vmatprep.subr.bf16.mxu0 0
    %1803 = vmatpush1.bf16.msra.mxu0 0
    %1804 = vmatprep.subr.bf16.mxu0 0
    %1805 = vmatpush1.bf16.msra.mxu0 0
    %1806 = vmatprep.subr.bf16.mxu0 0
    %1807 = vmatpush1.bf16.msra.mxu0 0
    %1808 = vmatprep.subr.bf16.mxu0 0
    %1809 = vmatpush1.bf16.msra.mxu0 0
    %1810 = vmatprep.subr.bf16.mxu0 0
    %1811 = vmatpush1.bf16.msra.mxu0 0
    %1812 = vmatprep.subr.bf16.mxu0 0
    %1813 = vmatpush1.bf16.msra.mxu0 0
    %1814 = vmatprep.subr.bf16.mxu0 0
    %1815 = vmatpush1.bf16.msra.mxu0 0
    %1816 = vmatprep.subr.bf16.mxu0 0
    %1817 = vmatpush1.bf16.msra.mxu0 0
    %1818 = vmatprep.subr.bf16.mxu0 0
    %1819 = vmatpush1.bf16.msra.mxu0 0
    %1820 = vmatprep.subr.bf16.mxu0 0
    %1821 = vmatpush1.bf16.msra.mxu0 0
    %1822 = vmatprep.mubr.bf16.mxu0 0
    %1823 = vmatmul.mubr.bf16.gmra.mrb[0].mxu0 %v1788
    %v1824 = vpop.f32.mrb[0].mxu0
    %v1825 = vadd.f32 %v1761, %v1824
    %v1826 = vpop.f32.mrb[0].mxu0
    %v1827 = vpop.f32.mrb[0].mxu0
    %v1828 = vadd.f32 %v1761, %v1827
    %v1829 = vpop.f32.mrb[0].mxu0
    %1830 = vdwg.mxu0
    %v1831 = vadd.f32 %v1621, %v1825
    %v1832 = vadd.f32 %v1622, %v1828
    %s1833 = scalar_lea.vmem %s18, 1
    %v1834 = vld [vmem:[%s1833] sm:$0x1]
    %s1835 = scalar_lea.vmem %s19, 1
    %v1836 = vld [vmem:[%s1835] sm:$0x1]
    %v1837 = vsel %vm424, %v1831, 0.0
    %1838 = vadd.xlane.f32.xlu0 %v1837
    %v1839 = vpop.xlane.xlu0 %1838
    %v1840 = vsel %vm424, %v1832, 0.0
    %1841 = vadd.xlane.f32.xlu0 %v1840
    %v1842 = vpop.xlane.xlu0 %1841
    %v1843 = vmul.f32 %v1839, %v431
    %v1844 = vmul.f32 %v1842, %v431
    %v1845 = vsub.f32 %v1831, %v1843
    %v1846 = vsub.f32 %v1832, %v1844
    %v1847 = vmul.f32 %v1845, %v1845
    %v1848 = vmul.f32 %v1846, %v1846
    %v1849 = vsel %vm424, %v1847, 0.0
    %1850 = vadd.xlane.f32.xlu0 %v1849
    %v1851 = vpop.xlane.xlu0 %1850
    %v1852 = vsel %vm424, %v1848, 0.0
    %1853 = vadd.xlane.f32.xlu0 %v1852
    %v1854 = vpop.xlane.xlu0 %1853
    %v1855 = vmul.f32 %v1851, %v431
    %v1856 = vmul.f32 %v1854, %v431
    %v1857 = vadd.f32 %v1855, 1e-05
    %v1858 = vadd.f32 %v1856, 1e-05
    %v1859 = vrsqrt.pop %v1857
    %v1860 = vrsqrt.pop %v1858
    %v1861 = vmul.f32 %v1845, %v1859
    %v1862 = vmul.f32 %v1846, %v1860
    %v1864 = vlaneseq
    %v1865 = vshrl.u32 %v1864, 7
    %v1866 = vsub.s32 0, %v1865
    %v1867 = vrot.slane %v1834, %v1866
    %v1869 = vmul.f32 %v1861, %v1867
    %v1870 = vmul.f32 %v1862, %v1867
    %v1872 = vlaneseq
    %v1873 = vshrl.u32 %v1872, 7
    %v1874 = vsub.s32 0, %v1873
    %v1875 = vrot.slane %v1836, %v1874
    %v1877 = vadd.f32 %v1869, %v1875
    %v1878 = vadd.f32 %v1870, %v1875
    %v1880 = vrot.slane %v1878, 7
    %vm1882 = vcmask 1040384
    %v1883 = vsel %vm1882, %v1877, %v1880
    %v1884 = vpack.c.bf16 %v1883, %v1883
    %v1885 = vld [vmem:[%s20] sm:$0xf]
    %v1886 = vld [vmem:[%s20 + $0x4] sm:$0xf]
    %v1887 = vld [vmem:[%s20 + $0x8] sm:$0xf]
    %v1888 = vld [vmem:[%s20 + $0xc] sm:$0xf]
    %v1889 = vld [vmem:[%s21] sm:$0x1]
    %v1891 = vlaneseq
    %v1892 = vshrl.u32 %v1891, 7
    %v1893 = vsub.s32 0, %v1892
    %v1894 = vrot.slane %v1889, %v1893
    %v1900 = vunpack.c.l.b16 %v1885
    %v1901 = vunpack.c.l.b16 %v1886
    %v1902 = vunpack.c.l.b16 %v1887
    %v1903 = vunpack.c.l.b16 %v1888
    %v1904 = vpack.c.b16 %v1901, %v1900
    %v1905 = vpack.c.b16 %v1903, %v1902
    %v1909 = vsel %vm424, %v1884, 0
    %1911 = vmatprep.subr.bf16.mxu0 0
    %1912 = vmatpush1.bf16.msra.mxu0 %v1904
    %1913 = vmatprep.subr.bf16.mxu0 0
    %1914 = vmatpush1.bf16.msra.mxu0 %v1905
    %1915 = vmatprep.subr.bf16.mxu0 0
    %1916 = vmatpush1.bf16.msra.mxu0 0
    %1917 = vmatprep.subr.bf16.mxu0 0
    %1918 = vmatpush1.bf16.msra.mxu0 0
    %1919 = vmatprep.subr.bf16.mxu0 0
    %1920 = vmatpush1.bf16.msra.mxu0 0
    %1921 = vmatprep.subr.bf16.mxu0 0
    %1922 = vmatpush1.bf16.msra.mxu0 0
    %1923 = vmatprep.subr.bf16.mxu0 0
    %1924 = vmatpush1.bf16.msra.mxu0 0
    %1925 = vmatprep.subr.bf16.mxu0 0
    %1926 = vmatpush1.bf16.msra.mxu0 0
    %1927 = vmatprep.subr.bf16.mxu0 0
    %1928 = vmatpush1.bf16.msra.mxu0 0
    %1929 = vmatprep.subr.bf16.mxu0 0
    %1930 = vmatpush1.bf16.msra.mxu0 0
    %1931 = vmatprep.subr.bf16.mxu0 0
    %1932 = vmatpush1.bf16.msra.mxu0 0
    %1933 = vmatprep.subr.bf16.mxu0 0
    %1934 = vmatpush1.bf16.msra.mxu0 0
    %1935 = vmatprep.subr.bf16.mxu0 0
    %1936 = vmatpush1.bf16.msra.mxu0 0
    %1937 = vmatprep.subr.bf16.mxu0 0
    %1938 = vmatpush1.bf16.msra.mxu0 0
    %1939 = vmatprep.subr.bf16.mxu0 0
    %1940 = vmatpush1.bf16.msra.mxu0 0
    %1941 = vmatprep.subr.bf16.mxu0 0
    %1942 = vmatpush1.bf16.msra.mxu0 0
    %1943 = vmatprep.mubr.bf16.mxu0 0
    %1944 = vmatmul.mubr.bf16.gmra.mrb[0].mxu0 %v1909
    %v1945 = vpop.f32.mrb[0].mxu0
    %v1946 = vadd.f32 %v1894, %v1945
    %v1947 = vpop.f32.mrb[0].mxu0
    %v1948 = vpop.f32.mrb[0].mxu0
    %v1949 = vpop.f32.mrb[0].mxu0
    %1950 = vdwg.mxu0
    %v1951 = vtanh.pop %v1946
    %v1952 = vpack.c.bf16 %v1951, %v1951
    %v1953 = vld [vmem:[%s22] sm:$0xf]
    %v1954 = vld [vmem:[%s22 + $0x4] sm:$0xf]
    %v1955 = vld [vmem:[%s22 + $0x8] sm:$0xf]
    %v1956 = vld [vmem:[%s22 + $0xc] sm:$0xf]
    %v1957 = vld [vmem:[%s23] sm:$0x1]
    %v1959 = vlaneseq
    %v1960 = vshrl.u32 %v1959, 7
    %v1961 = vsub.s32 0, %v1960
    %v1962 = vrot.slane %v1957, %v1961
    %v1968 = vunpack.c.l.b16 %v1953
    %v1969 = vunpack.c.l.b16 %v1954
    %v1970 = vunpack.c.l.b16 %v1955
    %v1971 = vunpack.c.l.b16 %v1956
    %v1972 = vpack.c.b16 %v1969, %v1968
    %v1973 = vpack.c.b16 %v1971, %v1970
    %v1977 = vsel %vm424, %v1952, 0
    %1979 = vmatprep.subr.bf16.mxu0 0
    %1980 = vmatpush1.bf16.msra.mxu0 %v1972
    %1981 = vmatprep.subr.bf16.mxu0 0
    %1982 = vmatpush1.bf16.msra.mxu0 %v1973
    %1983 = vmatprep.subr.bf16.mxu0 0
    %1984 = vmatpush1.bf16.msra.mxu0 0
    %1985 = vmatprep.subr.bf16.mxu0 0
    %1986 = vmatpush1.bf16.msra.mxu0 0
    %1987 = vmatprep.subr.bf16.mxu0 0
    %1988 = vmatpush1.bf16.msra.mxu0 0
    %1989 = vmatprep.subr.bf16.mxu0 0
    %1990 = vmatpush1.bf16.msra.mxu0 0
    %1991 = vmatprep.subr.bf16.mxu0 0
    %1992 = vmatpush1.bf16.msra.mxu0 0
    %1993 = vmatprep.subr.bf16.mxu0 0
    %1994 = vmatpush1.bf16.msra.mxu0 0
    %1995 = vmatprep.subr.bf16.mxu0 0
    %1996 = vmatpush1.bf16.msra.mxu0 0
    %1997 = vmatprep.subr.bf16.mxu0 0
    %1998 = vmatpush1.bf16.msra.mxu0 0
    %1999 = vmatprep.subr.bf16.mxu0 0
    %2000 = vmatpush1.bf16.msra.mxu0 0
    %2001 = vmatprep.subr.bf16.mxu0 0
    %2002 = vmatpush1.bf16.msra.mxu0 0
    %2003 = vmatprep.subr.bf16.mxu0 0
    %2004 = vmatpush1.bf16.msra.mxu0 0
    %2005 = vmatprep.subr.bf16.mxu0 0
    %2006 = vmatpush1.bf16.msra.mxu0 0
    %2007 = vmatprep.subr.bf16.mxu0 0
    %2008 = vmatpush1.bf16.msra.mxu0 0
    %2009 = vmatprep.subr.bf16.mxu0 0
    %2010 = vmatpush1.bf16.msra.mxu0 0
    %2011 = vmatprep.mubr.bf16.mxu0 0
    %2012 = vmatmul.mubr.bf16.gmra.mrb[0].mxu0 %v1977
    %v2013 = vpop.f32.mrb[0].mxu0
    %v2014 = vadd.f32 %v1962, %v2013
    %v2015 = vpop.f32.mrb[0].mxu0
    %v2016 = vpop.f32.mrb[0].mxu0
    %v2017 = vpop.f32.mrb[0].mxu0
    %2018 = vdwg.mxu0
    %vm2019 = vcmask 9216
    %2020 = vst.msk [vmem:[#allocation2] sm:$0x3] %vm2019, %v2014
    %v2021 = vsel %vm2019, %v2014, -inf
    %2022 = vmax.xlane.f32.xlu0 %v2021
    %v2023 = vpop.xlane.xlu0 %2022
    %v2024 = vsub.f32 %v2014, %v2023
    %v2025 = vmul.f32 %v2024, 1.442695
    %v2026 = vpow.pop %v2025
    %v2027 = vsel %vm2019, %v2026, 0.0
    %2028 = vadd.xlane.f32.xlu0 %v2027
    %v2029 = vpop.xlane.xlu0 %2028
    %v2030 = vrcp.pop %v2029
    %v2031 = vmul.f32 %v2026, %v2030
    %2032 = vst.msk [vmem:[#allocation4] sm:$0x3] %vm2019, %v2031
    %v2033 = vlog2.pop %v2029
    %v2034 = vmul.f32 %v2033, 0.6931472
    %v2035 = vsub.f32 %v2024, %v2034
    %v2036 = vld [vmem:[%s2] sm:$0x3]
    %2037 = vset.pattern.permute.xlu0 0
    %2038 = vperm.xlu0 %2037, %v2036
    %v2039 = vpop.permute.xlu0 %2038
    %vm2040 = vcmp.eq.s32.totalorder %v90, %v2039
    %v2041 = vsel %vm2040, 1, 0
    %v2042 = vcvt.s32.f32 %v2041
    %v2043 = vmul.f32 %v2042, %v2035
    %v2044 = vsel %vm2019, %v2043, 0.0
    %2045 = vadd.xlane.f32.xlu0 %v2044
    %v2046 = vpop.xlane.xlu0 %2045
    %v2047 = vsub.f32 0.0, %v2046
    %vm2048 = vcmask 1041408
    %v2049 = vsel %vm2048, %v2047, 0.0
    %v2050 = vrot.slane %v2049, 4
    %v2051 = vadd.f32 %v2049, %v2050
    %v2052 = vrot.slane %v2051, 2
    %v2053 = vadd.f32 %v2051, %v2052
    %v2054 = vrot.slane %v2053, 1
    %v2055 = vadd.f32 %v2053, %v2054
    %v2056 = vmul.f32 %v2055, 0.5
    %vm2057 = vcmask 0
    %2058 = vst.msk [vmem:[#allocation6] sm:$0x1] %vm2057, %v2056
    // Predicated region
    $region98: #{roberta_forward.1} parent=1 // pred_check
      _
    $region99: #{roberta_forward.1} parent=1 // pred_check_branch
      %2060 = sbr.rel (0) target = $region101
    $region100: #{roberta_forward.1} parent=1 // pred_region
      %s2062 = ssub.s32 32, 32
      %2063 = vsyncadd [#allocation3], %s2062
      %s2065 = sshll.u32 [#allocation2], 4
      %s2066 = int_to_ptr.vmem [resolvable:$true] %s2065
      %2068 = dma.vmem_to_hbm [thread:$0]  %s2066, 32, %s24, [#allocation3]
    $region101: #{roberta_forward.1} parent=1 // pred_fallthru
      _
    // Predicated region
    $region102: #{roberta_forward.1} parent=1 // pred_check
      _
    $region103: #{roberta_forward.1} parent=1 // pred_check_branch
      %2070 = sbr.rel (0) target = $region105
    $region104: #{roberta_forward.1} parent=1 // pred_region
      %s2072 = ssub.s32 32, 32
      %2073 = vsyncadd [#allocation5], %s2072
      %s2075 = sshll.u32 [#allocation4], 4
      %s2076 = int_to_ptr.vmem [resolvable:$true] %s2075
      %2078 = dma.vmem_to_hbm [thread:$0]  %s2076, 32, %s25, [#allocation5]
    $region105: #{roberta_forward.1} parent=1 // pred_fallthru
      _
    // Predicated region
    $region106: #{roberta_forward.1} parent=1 // pred_check
      _
    $region107: #{roberta_forward.1} parent=1 // pred_check_branch
      %2080 = sbr.rel (0) target = $region109
    $region108: #{roberta_forward.1} parent=1 // pred_region
      %s2082 = ssub.s32 16, 16
      %2083 = vsyncadd [#allocation5], %s2082
      %s2085 = sshll.u32 [#allocation6], 4
      %s2086 = int_to_ptr.vmem [resolvable:$true] %s2085
      %2088 = dma.vmem_to_hbm [thread:$0]  %s2086, 16, %s26, [#allocation5]
    $region109: #{roberta_forward.1} parent=1 // pred_fallthru
      _
    // Predicated region
    $region110: #{roberta_forward.1} parent=1 // pred_check
      _
    $region111: #{roberta_forward.1} parent=1 // pred_check_branch
      %2090 = sbr.rel (0) target = $region113
    $region112: #{roberta_forward.1} parent=1 // pred_region
      %2091 = dma.done [#allocation3], 32
    $region113: #{roberta_forward.1} parent=1 // pred_fallthru
      _
    // Predicated region
    $region114: #{roberta_forward.1} parent=1 // pred_check
      _
    $region115: #{roberta_forward.1} parent=1 // pred_check_branch
      %2093 = sbr.rel (0) target = $region117
    $region116: #{roberta_forward.1} parent=1 // pred_region
      %2094 = dma.done [#allocation5], 32
    $region117: #{roberta_forward.1} parent=1 // pred_fallthru
      _
    // Predicated region
    $region118: #{roberta_forward.1} parent=1 // pred_check
      _
    $region119: #{roberta_forward.1} parent=1 // pred_check_branch
      %2096 = sbr.rel (0) target = $region121
    $region120: #{roberta_forward.1} parent=1 // pred_region
      %2097 = dma.done [#allocation5], 16
    $region121: #{roberta_forward.1} parent=1 // pred_fallthru
      _
    %2098 = vsyncpa [#allocation3], 1
    %2099 = vsyncpa [#allocation5], 1

</llo_original>
